<compile_context>
chip_gen: v5e
topology: v5e:2x2
jax: 0.10.0
libtpu: 0.0.40
codegen_flags: <defaults>
</compile_context>

<pallas_src>
import math
import functools

import jax
import jax.numpy as jnp
from jax.experimental import pallas as pl
from jax.experimental.pallas import tpu as pltpu

BN_EPS = 1e-5
# TODO(synk): `num_class = len(classes)` but `classes` is undefined in the spec -> fixed to 10.
NUM_CLASS = 10
LANE = 128          # TPU lane width; every channel dim is padded to a multiple of this.

# Small MobileNetV3-style config (EasySequential strings). Ends with 256 channels because
# the classifier is nn.Linear(256, num_class).
CONFIG = [
    "cba 4 16 3 2 1 hsw 0 bn",      # Conv3x3 s2 p1 + BN + hswish
    "btn 16 16 16 3 1 0 r",         # Bottleneck (residual), relu, no SE
    "btn 16 24 64 3 2 1 hsw",       # Bottleneck stride 2, SE, hswish
    "cba 24 256 1 1 0 hsw 0 bn",    # 1x1 Conv + BN + hswish -> 256 channels
]


# ----------------------------- small helpers --------------------------------

def _apply_act(y, act):
    if act == "none":
        return y
    if act in ("r", "relu"):
        return jnp.maximum(y, 0.0)
    if act in ("r6", "relu6"):
        return jnp.clip(y, 0.0, 6.0)
    if act in ("hs", "hsigmoid"):
        return jnp.clip(y + 3.0, 0.0, 6.0) * (1.0 / 6.0)
    if act in ("hsw", "hswish"):
        return y * jnp.clip(y + 3.0, 0.0, 6.0) * (1.0 / 6.0)
    raise NotImplementedError(act)


def _round_up(v, m):
    return ((v + m - 1) // m) * m


def _pad_dim(x, axis, target):
    if x.shape[axis] == target:
        return x
    pads = [(0, 0)] * x.ndim
    pads[axis] = (0, target - x.shape[axis])
    return jnp.pad(x, pads)


# --------------- kernel 1: tiled fused matmul (+BN +residual +act) ----------
# out = act( lhs @ W * scale + bias [+ residual] )
# Used for: im2col'd first conv and all 1x1 convs. MXU operands in bf16, f32 accumulate,
# epilogue (folded BN, residual, activation) fused on the f32 tile.

def _fused_matmul_kernel(*refs, act, has_res):
    it = iter(refs)
    lhs_ref = next(it)
    w_ref = next(it)
    s_ref = next(it)
    b_ref = next(it)
    res_ref = next(it) if has_res else None
    o_ref = next(it)

    y = jnp.dot(lhs_ref[...].astype(jnp.bfloat16), w_ref[...],
                preferred_element_type=jnp.float32)      # MXU bf16 x bf16 -> f32
    y = y * s_ref[...] + b_ref[...]                      # folded BN epilogue (f32)
    if has_res:
        y = y + res_ref[...]                             # fused residual add
    o_ref[...] = _apply_act(y, act)


def fused_matmul(lhs, w_bf16, scale, bias, *, act, residual=None, tm_cap=128):
    M, K = lhs.shape
    Kw, N = w_bf16.shape
    assert K == Kw and N % LANE == 0

    tm = M if M <= tm_cap else tm_cap
    if M % tm != 0:
        tm = M
    assert M % tm == 0 and (tm % 8 == 0 or tm == M)
    grid = (M // tm,)

    scale2 = scale.reshape(1, N).astype(jnp.float32)
    bias2 = bias.reshape(1, N).astype(jnp.float32)

    in_specs = [
        pl.BlockSpec((tm, K), lambda i: (i, 0)),
        pl.BlockSpec((K, N), lambda i: (0, 0)),
        pl.BlockSpec((1, N), lambda i: (0, 0)),
        pl.BlockSpec((1, N), lambda i: (0, 0)),
    ]
    args = [lhs, w_bf16, scale2, bias2]
    if residual is not None:
        in_specs.append(pl.BlockSpec((tm, N), lambda i: (i, 0)))
        args.append(residual.astype(jnp.float32))

    kernel = functools.partial(_fused_matmul_kernel, act=act,
                               has_res=residual is not None)
    return pl.pallas_call(
        kernel,
        grid=grid,
        in_specs=in_specs,
        out_specs=pl.BlockSpec((tm, N), lambda i: (i, 0)),
        out_shape=jax.ShapeDtypeStruct((M, N), jnp.float32),
        compiler_params=pltpu.CompilerParams(
            dimension_semantics=("parallel",),
            vmem_limit_bytes=32 * 1024 * 1024),
    )(*args)


# ------ kernel 2: depthwise KxK conv + BN (+ fused SE gate) (+act) ----------
# Stride is folded in-kernel via a phase decomposition of the padded input:
# phase(ry,rx) = xpad[:, ry::s, rx::s, :], so each tap is a plain contiguous slice and
# only the strided outputs are ever computed / written. Grid over batch (parallel).
# When `has_se`, the full SE block (pool + FC + relu + FC + hsigmoid + gate) and the
# following activation are fused here, so the gate never touches HBM.

def _dwconv_se_kernel(*refs, K, stride, ho, wo, act, nphase, has_se):
    it = iter(refs)
    phase_refs = [next(it) for _ in range(nphase)]
    w_ref = next(it)
    s_ref = next(it)
    b_ref = next(it)
    se_w1_ref = next(it) if has_se else None
    se_w2_ref = next(it) if has_se else None
    o_ref = next(it)

    wv = w_ref[...]                                      # (K*K, C), loaded once (hoisted)
    C = wv.shape[-1]
    acc = jnp.zeros((1, ho, wo, C), jnp.float32)
    for dy in range(K):
        for dx in range(K):
            pidx = (dy % stride) * stride + (dx % stride)
            oy, ox = dy // stride, dx // stride
            tap = phase_refs[pidx][:, oy:oy + ho, ox:ox + wo, :]
            acc = acc + tap * wv[dy * K + dx]
    y = acc * s_ref[...] + b_ref[...]                    # folded BN, (1, C) broadcast

    if has_se:
        # SE is applied to the BN output, before the activation (matches PyTorch order).
        pooled = jnp.mean(y.reshape(ho * wo, C), axis=0, keepdims=True)    # (1, C)
        g = jnp.dot(pooled.astype(jnp.bfloat16), se_w1_ref[...],
                    preferred_element_type=jnp.float32)
        g = jnp.maximum(g, 0.0)
        g = jnp.dot(g.astype(jnp.bfloat16), se_w2_ref[...],
                    preferred_element_type=jnp.float32)
        g = jnp.clip(g + 3.0, 0.0, 6.0) * (1.0 / 6.0)                      # Hsigmoid
        y = y * g.reshape(1, 1, 1, C)

    o_ref[...] = _apply_act(y, act)


def dwconv_se_block(x, w_flat, scale, bias, K, stride, act, se_w1=None, se_w2=None):
    n, H, W, C = x.shape
    has_se = se_w1 is not None
    pad = (K - 1) // 2
    ho = (H + 2 * pad - K) // stride + 1
    wo = (W + 2 * pad - K) // stride + 1
    pe_h = ho + (K - 1) // stride
    pe_w = wo + (K - 1) // stride
    hp_need, wp_need = stride * pe_h, stride * pe_w
    assert hp_need >= H + pad and wp_need >= W + pad
    xp = jnp.pad(x, ((0, 0), (pad, hp_need - H - pad), (pad, wp_need - W - pad), (0, 0)))
    phases = [xp[:, ry::stride, rx::stride, :]
              for ry in range(stride) for rx in range(stride)]
    nphase = stride * stride

    scale2 = scale.reshape(1, C).astype(jnp.float32)
    bias2 = bias.reshape(1, C).astype(jnp.float32)

    in_specs = ([pl.BlockSpec((1, pe_h, pe_w, C), lambda b: (b, 0, 0, 0))] * nphase
                + [pl.BlockSpec((K * K, C), lambda b: (0, 0)),
                   pl.BlockSpec((1, C), lambda b: (0, 0)),
                   pl.BlockSpec((1, C), lambda b: (0, 0))])
    args = list(phases) + [w_flat.astype(jnp.float32), scale2, bias2]
    if has_se:
        R = se_w1.shape[1]
        in_specs += [pl.BlockSpec((C, R), lambda b: (0, 0)),
                     pl.BlockSpec((R, C), lambda b: (0, 0))]
        args += [se_w1, se_w2]

    kernel = functools.partial(_dwconv_se_kernel, K=K, stride=stride, ho=ho, wo=wo,
                               act=act, nphase=nphase, has_se=has_se)
    return pl.pallas_call(
        kernel,
        grid=(n,),
        in_specs=in_specs,
        out_specs=pl.BlockSpec((1, ho, wo, C), lambda b: (b, 0, 0, 0)),
        out_shape=jax.ShapeDtypeStruct((n, ho, wo, C), jnp.float32),
        compiler_params=pltpu.CompilerParams(dimension_semantics=("parallel",)),
    )(*args)


# --------------- kernel 3: global average pool + classifier -----------------

def _head_kernel(x_ref, w_ref, b_ref, o_ref):
    pooled = jnp.mean(x_ref[...], axis=1)                # == y.mean(3).mean(2)
    y = jnp.dot(pooled.astype(jnp.bfloat16), w_ref[...],
                preferred_element_type=jnp.float32)
    o_ref[...] = y + b_ref[...]


def head_forward(feat_nlc, w_bf16, bias):
    n, L, C = feat_nlc.shape
    N = w_bf16.shape[1]
    return pl.pallas_call(
        _head_kernel,
        grid=(1,),
        in_specs=[pl.BlockSpec((n, L, C), lambda i: (0, 0, 0)),
                  pl.BlockSpec((C, N), lambda i: (0, 0)),
                  pl.BlockSpec((1, N), lambda i: (0, 0))],
        out_specs=pl.BlockSpec((n, N), lambda i: (0, 0)),
        out_shape=jax.ShapeDtypeStruct((n, N), jnp.float32),
        compiler_params=pltpu.CompilerParams(dimension_semantics=("arbitrary",)),
    )(feat_nlc, w_bf16, bias.reshape(1, N).astype(jnp.float32))


# ------------------------------ parameters ----------------------------------

def _kaiming_conv(key, out_c, in_c_per_group, k):
    fan_out = out_c * k * k                              # kaiming_normal_(mode='fan_out')
    std = math.sqrt(2.0 / fan_out)
    return std * jax.random.normal(key, (out_c, in_c_per_group, k, k), jnp.float32)


def _bn_fold(c_pad):
    # eval-mode BN with init weight=1, bias=0, running_mean=0, running_var=1
    scale = jnp.full((c_pad,), 1.0 / math.sqrt(1.0 + BN_EPS), jnp.float32)
    bias = jnp.zeros((c_pad,), jnp.float32)
    return scale, bias


def init_params(key, config, num_class):
    layers = []
    for spec in config:
        parts = spec.split(" ")
        if parts[0] == "cba":
            _, in_c, out_c, k, stride, padd, act, _transpose, _norm = parts
            in_c, out_c, k = int(in_c), int(out_c), int(k)
            out_p = _round_up(out_c, LANE)
            key, k1 = jax.random.split(key)
            w = _kaiming_conv(k1, out_c, in_c, k)        # (out, in, k, k)
            bn_s, bn_b = _bn_fold(out_p)
            conv_b = jnp.zeros((out_c,), jnp.float32)    # CBA conv bias=True, zero init
            bias_fold = _pad_dim(conv_b, 0, out_p) * bn_s + bn_b
            if k == 1:
                rows_real = in_c
                w2 = w.reshape(out_c, in_c).T            # (in, out)
            else:
                rows_real = k * k * in_c                 # tap-major, matches _im2col
                w2 = jnp.transpose(w, (2, 3, 1, 0)).reshape(rows_real, out_c)
            rows_pad = _round_up(rows_real, LANE)
            w_mat = _pad_dim(_pad_dim(w2, 0, rows_pad), 1, out_p).astype(jnp.bfloat16)
            layers.append(dict(kind="cba", k=k, stride=int(stride), pad=int(padd),
                               act=act, in_c=in_c, out_c=out_c,
                               w_mat=w_mat, scale=bn_s, bias=bias_fold))
        elif parts[0] == "btn":
            _, in_c, out_c, hid_c, k, stride, se, act = parts
            in_c, out_c, hid_c, k = int(in_c), int(out_c), int(hid_c), int(k)
            se = bool(int(se))
            in_p, out_p, hid_p = (_round_up(c, LANE) for c in (in_c, out_c, hid_c))
            key, k1, k2, k3, k4, k5 = jax.random.split(key, 6)
            w1 = _kaiming_conv(k1, hid_c, in_c, 1).reshape(hid_c, in_c).T      # (in, hid)
            wdw = _kaiming_conv(k2, hid_c, 1, k).reshape(hid_c, k * k).T       # (k*k, hid)
            w3 = _kaiming_conv(k3, out_c, hid_c, 1).reshape(out_c, hid_c).T    # (hid, out)
            p = dict(kind="btn", k=k, stride=int(stride), se=se, act=act,
                     in_c=in_c, out_c=out_c, hid_c=hid_c,
                     w1=_pad_dim(_pad_dim(w1, 0, in_p), 1, hid_p).astype(jnp.bfloat16),
                     wdw=_pad_dim(wdw, 1, hid_p),                               # f32 (VPU)
                     w3=_pad_dim(_pad_dim(w3, 0, hid_p), 1, out_p).astype(jnp.bfloat16))
            p["bn1_s"], p["bn1_b"] = _bn_fold(hid_p)
            p["bn2_s"], p["bn2_b"] = _bn_fold(hid_p)
            p["bn3_s"], p["bn3_b"] = _bn_fold(out_p)
            if se:
                red = hid_c // 4
                red_p = _round_up(red, LANE)
                se_w1 = 0.01 * jax.random.normal(k4, (red, hid_c), jnp.float32)  # Linear(hid->red)
                se_w2 = 0.01 * jax.random.normal(k5, (hid_c, red), jnp.float32)  # Linear(red->hid)
                p["se_w1"] = _pad_dim(_pad_dim(se_w1.T, 0, hid_p), 1, red_p).astype(jnp.bfloat16)
                p["se_w2"] = _pad_dim(_pad_dim(se_w2.T, 0, red_p), 1, hid_p).astype(jnp.bfloat16)
            layers.append(p)
        else:
            raise NotImplementedError(spec)
    key, kc = jax.random.split(key)
    clf_w = 0.01 * jax.random.normal(kc, (num_class, 256), jnp.float32)
    clf_b = jnp.zeros((num_class,), jnp.float32)
    n_pad = _round_up(num_class, LANE)
    clf = dict(w=_pad_dim(clf_w.T, 1, n_pad).astype(jnp.bfloat16),
               b=_pad_dim(clf_b, 0, n_pad))
    return dict(layers=layers, clf=clf, num_class=num_class)


# ------------------------------ forward (glue) -------------------------------

def _im2col(x, k, stride, pad):
    n, h, w, c = x.shape
    xp = jnp.pad(x, ((0, 0), (pad, pad), (pad, pad), (0, 0)))
    ho = (h + 2 * pad - k) // stride + 1
    wo = (w + 2 * pad - k) // stride + 1
    cols = []
    for dy in range(k):
        for dx in range(k):
            cols.append(xp[:, dy:dy + stride * ho:stride, dx:dx + stride * wo:stride, :])
    patches = jnp.concatenate(cols, axis=-1)             # (n, ho, wo, k*k*c), tap-major
    return patches.reshape(n * ho * wo, k * k * c), (n, ho, wo)


def cba_forward(x, p):
    k, stride, pad_, act = p["k"], p["stride"], p["pad"], p["act"]
    n, H, W, Cin = x.shape
    if k == 1 and stride == 1 and pad_ == 0:
        lhs = x.reshape(n * H * W, Cin)
        ho, wo = H, W
    else:
        # TODO(synk): im2col for this first dense KxK conv stays in the XLA wrapper
        # (in_c=4 -> 36 taps, negligible traffic); depthwise taps are done in-kernel.
        assert Cin == p["in_c"]
        lhs, (n, ho, wo) = _im2col(x, k, stride, pad_)
    Kp = p["w_mat"].shape[0]
    if lhs.shape[1] != Kp:
        lhs = _pad_dim(lhs, 1, Kp)
    y = fused_matmul(lhs, p["w_mat"], p["scale"], p["bias"], act=act)
    return y.reshape(n, ho, wo, p["w_mat"].shape[1])


def btn_forward(x, p):
    n, H, W, Cp = x.shape
    k, stride, se, act = p["k"], p["stride"], p["se"], p["act"]
    hid_p = p["w1"].shape[1]
    out_p = p["w3"].shape[1]

    # 1x1 expand conv + BN + act (one fused matmul kernel)
    h = fused_matmul(x.reshape(n * H * W, Cp), p["w1"], p["bn1_s"], p["bn1_b"], act=act)
    h = h.reshape(n, H, W, hid_p)

    # depthwise KxK conv + BN (+ fused SE gate) + act, stride folded in-kernel
    d = dwconv_se_block(h, p["wdw"], p["bn2_s"], p["bn2_b"], k, stride, act,
                        se_w1=p.get("se_w1"), se_w2=p.get("se_w2"))
    _, ho, wo, _ = d.shape
    d2 = d.reshape(n * ho * wo, hid_p)

    residual = None
    if stride == 1 and p["in_c"] == p["out_c"]:
        residual = x.reshape(n * H * W, Cp)

    # 1x1 project conv + BN, with the residual add fused into the same tiled matmul kernel.
    y = fused_matmul(d2, p["w3"], p["bn3_s"], p["bn3_b"], act="none", residual=residual)
    return y.reshape(n, ho, wo, out_p)


def mobilenetv3_forward(params, x_nchw):
    x = jnp.transpose(x_nchw, (0, 2, 3, 1)).astype(jnp.float32)    # NCHW -> NHWC
    for p in params["layers"]:
        x = cba_forward(x, p) if p["kind"] == "cba" else btn_forward(x, p)
    n, h, w, c = x.shape
    # TODO(synk): nn.Dropout(0.8) in the classifier is identity in eval mode.
    logits_pad = head_forward(x.reshape(n, h * w, c), params["clf"]["w"], params["clf"]["b"])
    return logits_pad[:, :params["num_class"]]                      # single slice at the end


if __name__ == "__main__":
    key = jax.random.PRNGKey(0)
    kx, kp = jax.random.split(key)
    x = jax.random.normal(kx, (2, 4, 16, 16), jnp.float32)          # NCHW input
    params = init_params(kp, CONFIG, NUM_CLASS)
    fwd = jax.jit(functools.partial(mobilenetv3_forward, params))
    out = jax.block_until_ready(fwd(x))
    assert out.shape == (2, NUM_CLASS) and out.dtype == jnp.float32
    print("KERNEL_OK")
</pallas_src>

<mosaic_0001>
module attributes {stable_mosaic.version = 11 : i64} {
  func.func @_fused_matmul_kernel(%arg0: i32, %arg1: memref<128x128xf32, #tpu.memory_space<vmem>>, %arg2: memref<128x128xbf16, #tpu.memory_space<vmem>>, %arg3: memref<1x128xf32, #tpu.memory_space<vmem>>, %arg4: memref<1x128xf32, #tpu.memory_space<vmem>>, %arg5: memref<128x128xf32, #tpu.memory_space<vmem>>) attributes {dimension_semantics = [#tpu.dimension_semantics<parallel>], iteration_bounds = array<i64: 1>, scalar_prefetch = 0 : i64, scratch_operands = 0 : i64, tpu.core_type = #tpu.core_type<tc>, window_params = [{transform_indices = @transform_0, window_bounds = array<i64: 128, 128>}, {pipeline_mode = #tpu.pipeline_mode<synchronous>, transform_indices = @transform_1, window_bounds = array<i64: 128, 128>}, {pipeline_mode = #tpu.pipeline_mode<synchronous>, transform_indices = @transform_2, window_bounds = array<i64: 1, 128>}, {pipeline_mode = #tpu.pipeline_mode<synchronous>, transform_indices = @transform_3, window_bounds = array<i64: 1, 128>}, {transform_indices = @transform_4, window_bounds = array<i64: 128, 128>}]} {
    %c0 = arith.constant 0 : index
    %c0_0 = arith.constant 0 : index
    %0 = vector.load %arg1[%c0, %c0_0] : memref<128x128xf32, #tpu.memory_space<vmem>>, vector<128x128xf32>
    %1 = arith.truncf %0 : vector<128x128xf32> to vector<128x128xbf16>
    %c0_1 = arith.constant 0 : index
    %c0_2 = arith.constant 0 : index
    %2 = vector.load %arg2[%c0_1, %c0_2] : memref<128x128xbf16, #tpu.memory_space<vmem>>, vector<128x128xbf16>
    %cst = arith.constant dense<0.000000e+00> : vector<128x128xf32>
    %3 = tpu.matmul %1, %2, %cst {dimension_numbers = #tpu.dot_dimension_numbers<[1], [0], [0], [1], [0, 0, 1, 1], [], []>} : vector<128x128xbf16>, vector<128x128xbf16>, vector<128x128xf32> -> vector<128x128xf32>
    %c0_3 = arith.constant 0 : index
    %c0_4 = arith.constant 0 : index
    %4 = vector.load %arg3[%c0_3, %c0_4] : memref<1x128xf32, #tpu.memory_space<vmem>>, vector<1x128xf32>
    %5 = vector.broadcast %4 : vector<1x128xf32> to vector<128x128xf32>
    %6 = arith.mulf %3, %5 : vector<128x128xf32>
    %c0_5 = arith.constant 0 : index
    %c0_6 = arith.constant 0 : index
    %7 = vector.load %arg4[%c0_5, %c0_6] : memref<1x128xf32, #tpu.memory_space<vmem>>, vector<1x128xf32>
    %8 = vector.broadcast %7 : vector<1x128xf32> to vector<128x128xf32>
    %9 = arith.addf %6, %8 : vector<128x128xf32>
    %cst_7 = arith.constant 3.000000e+00 : f32
    %10 = vector.broadcast %cst_7 : f32 to vector<128x128xf32>
    %11 = arith.addf %9, %10 : vector<128x128xf32>
    %cst_8 = arith.constant 0.000000e+00 : f32
    %cst_9 = arith.constant 6.000000e+00 : f32
    %12 = vector.broadcast %cst_8 : f32 to vector<128x128xf32>
    %13 = arith.maximumf %12, %11 : vector<128x128xf32>
    %14 = vector.broadcast %cst_9 : f32 to vector<128x128xf32>
    %15 = arith.minimumf %14, %13 : vector<128x128xf32>
    %16 = arith.mulf %9, %15 : vector<128x128xf32>
    %cst_10 = arith.constant 0.166666672 : f32
    %17 = vector.broadcast %cst_10 : f32 to vector<128x128xf32>
    %18 = arith.mulf %16, %17 : vector<128x128xf32>
    %c0_11 = arith.constant 0 : index
    %c0_12 = arith.constant 0 : index
    %19 = vector.load %arg5[%c0_11, %c0_12] : memref<128x128xf32, #tpu.memory_space<vmem>>, vector<128x128xf32>
    tpu.vector_store %arg5[%c0_11, %c0_12], %18 {strides = array<i32>} : memref<128x128xf32, #tpu.memory_space<vmem>>, vector<128x128xf32>,
    return
  }
  func.func @transform_0(%arg0: i32) -> (i32, i32) {
    %c0_i32 = arith.constant 0 : i32
    %c0_i32_0 = arith.constant 0 : i32
    return %arg0, %c0_i32 : i32, i32
  }
  func.func @transform_1(%arg0: i32) -> (i32, i32) {
    %c0_i32 = arith.constant 0 : i32
    %c0_i32_0 = arith.constant 0 : i32
    %c0_i32_1 = arith.constant 0 : i32
    return %c0_i32, %c0_i32_0 : i32, i32
  }
  func.func @transform_2(%arg0: i32) -> (i32, i32) {
    %c0_i32 = arith.constant 0 : i32
    %c0_i32_0 = arith.constant 0 : i32
    %c0_i32_1 = arith.constant 0 : i32
    return %c0_i32, %c0_i32_0 : i32, i32
  }
  func.func @transform_3(%arg0: i32) -> (i32, i32) {
    %c0_i32 = arith.constant 0 : i32
    %c0_i32_0 = arith.constant 0 : i32
    %c0_i32_1 = arith.constant 0 : i32
    return %c0_i32, %c0_i32_0 : i32, i32
  }
  func.func @transform_4(%arg0: i32) -> (i32, i32) {
    %c0_i32 = arith.constant 0 : i32
    %c0_i32_0 = arith.constant 0 : i32
    return %arg0, %c0_i32 : i32, i32
  }
}

module attributes {stable_mosaic.version = 11 : i64} {
  func.func @_fused_matmul_kernel(%arg0: i32, %arg1: memref<128x128xf32, #tpu.memory_space<vmem>>, %arg2: memref<128x128xbf16, #tpu.memory_space<vmem>>, %arg3: memref<1x128xf32, #tpu.memory_space<vmem>>, %arg4: memref<1x128xf32, #tpu.memory_space<vmem>>, %arg5: memref<128x128xf32, #tpu.memory_space<vmem>>) attributes {dimension_semantics = [#tpu.dimension_semantics<parallel>], iteration_bounds = array<i64: 1>, scalar_prefetch = 0 : i64, scratch_operands = 0 : i64, tpu.core_type = #tpu.core_type<tc>, window_params = [{transform_indices = @transform_0, window_bounds = array<i64: 128, 128>}, {pipeline_mode = #tpu.pipeline_mode<synchronous>, transform_indices = @transform_1, window_bounds = array<i64: 128, 128>}, {pipeline_mode = #tpu.pipeline_mode<synchronous>, transform_indices = @transform_2, window_bounds = array<i64: 1, 128>}, {pipeline_mode = #tpu.pipeline_mode<synchronous>, transform_indices = @transform_3, window_bounds = array<i64: 1, 128>}, {transform_indices = @transform_4, window_bounds = array<i64: 128, 128>}]} {
    %c0 = arith.constant 0 : index
    %c0_0 = arith.constant 0 : index
    %0 = vector.load %arg1[%c0, %c0_0] : memref<128x128xf32, #tpu.memory_space<vmem>>, vector<128x128xf32>
    %1 = arith.truncf %0 : vector<128x128xf32> to vector<128x128xbf16>
    %c0_1 = arith.constant 0 : index
    %c0_2 = arith.constant 0 : index
    %2 = vector.load %arg2[%c0_1, %c0_2] : memref<128x128xbf16, #tpu.memory_space<vmem>>, vector<128x128xbf16>
    %cst = arith.constant dense<0.000000e+00> : vector<128x128xf32>
    %3 = tpu.matmul %1, %2, %cst {dimension_numbers = #tpu.dot_dimension_numbers<[1], [0], [0], [1], [0, 0, 1, 1], [], []>} : vector<128x128xbf16>, vector<128x128xbf16>, vector<128x128xf32> -> vector<128x128xf32>
    %c0_3 = arith.constant 0 : index
    %c0_4 = arith.constant 0 : index
    %4 = vector.load %arg3[%c0_3, %c0_4] : memref<1x128xf32, #tpu.memory_space<vmem>>, vector<1x128xf32>
    %5 = vector.broadcast %4 : vector<1x128xf32> to vector<128x128xf32>
    %6 = arith.mulf %3, %5 : vector<128x128xf32>
    %c0_5 = arith.constant 0 : index
    %c0_6 = arith.constant 0 : index
    %7 = vector.load %arg4[%c0_5, %c0_6] : memref<1x128xf32, #tpu.memory_space<vmem>>, vector<1x128xf32>
    %8 = vector.broadcast %7 : vector<1x128xf32> to vector<128x128xf32>
    %9 = arith.addf %6, %8 : vector<128x128xf32>
    %cst_7 = arith.constant 0.000000e+00 : f32
    %10 = vector.broadcast %cst_7 : f32 to vector<128x128xf32>
    %11 = arith.maximumf %9, %10 : vector<128x128xf32>
    %c0_8 = arith.constant 0 : index
    %c0_9 = arith.constant 0 : index
    %12 = vector.load %arg5[%c0_8, %c0_9] : memref<128x128xf32, #tpu.memory_space<vmem>>, vector<128x128xf32>
    tpu.vector_store %arg5[%c0_8, %c0_9], %11 {strides = array<i32>} : memref<128x128xf32, #tpu.memory_space<vmem>>, vector<128x128xf32>,
    return
  }
  func.func @transform_0(%arg0: i32) -> (i32, i32) {
    %c0_i32 = arith.constant 0 : i32
    %c0_i32_0 = arith.constant 0 : i32
    return %arg0, %c0_i32 : i32, i32
  }
  func.func @transform_1(%arg0: i32) -> (i32, i32) {
    %c0_i32 = arith.constant 0 : i32
    %c0_i32_0 = arith.constant 0 : i32
    %c0_i32_1 = arith.constant 0 : i32
    return %c0_i32, %c0_i32_0 : i32, i32
  }
  func.func @transform_2(%arg0: i32) -> (i32, i32) {
    %c0_i32 = arith.constant 0 : i32
    %c0_i32_0 = arith.constant 0 : i32
    %c0_i32_1 = arith.constant 0 : i32
    return %c0_i32, %c0_i32_0 : i32, i32
  }
  func.func @transform_3(%arg0: i32) -> (i32, i32) {
    %c0_i32 = arith.constant 0 : i32
    %c0_i32_0 = arith.constant 0 : i32
    %c0_i32_1 = arith.constant 0 : i32
    return %c0_i32, %c0_i32_0 : i32, i32
  }
  func.func @transform_4(%arg0: i32) -> (i32, i32) {
    %c0_i32 = arith.constant 0 : i32
    %c0_i32_0 = arith.constant 0 : i32
    return %arg0, %c0_i32 : i32, i32
  }
}

module attributes {stable_mosaic.version = 11 : i64} {
  func.func @_dwconv_se_kernel(%arg0: i32, %arg1: memref<1x10x10x128xf32, #tpu.memory_space<vmem>>, %arg2: memref<9x128xf32, #tpu.memory_space<vmem>>, %arg3: memref<1x128xf32, #tpu.memory_space<vmem>>, %arg4: memref<1x128xf32, #tpu.memory_space<vmem>>, %arg5: memref<1x8x8x128xf32, #tpu.memory_space<vmem>>) attributes {dimension_semantics = [#tpu.dimension_semantics<parallel>], iteration_bounds = array<i64: 2>, scalar_prefetch = 0 : i64, scratch_operands = 0 : i64, tpu.core_type = #tpu.core_type<tc>, window_params = [{transform_indices = @transform_0, window_bounds = array<i64: 1, 10, 10, 128>}, {pipeline_mode = #tpu.pipeline_mode<synchronous>, transform_indices = @transform_1, window_bounds = array<i64: 9, 128>}, {pipeline_mode = #tpu.pipeline_mode<synchronous>, transform_indices = @transform_2, window_bounds = array<i64: 1, 128>}, {pipeline_mode = #tpu.pipeline_mode<synchronous>, transform_indices = @transform_3, window_bounds = array<i64: 1, 128>}, {transform_indices = @transform_4, window_bounds = array<i64: 1, 8, 8, 128>}]} {
    %c0 = arith.constant 0 : index
    %c0_0 = arith.constant 0 : index
    %0 = vector.load %arg2[%c0, %c0_0] : memref<9x128xf32, #tpu.memory_space<vmem>>, vector<9x128xf32>
    %cst = arith.constant 0.000000e+00 : f32
    %1 = vector.broadcast %cst : f32 to vector<1x8x8x128xf32>
    %c0_1 = arith.constant 0 : index
    %c0_2 = arith.constant 0 : index
    %c0_3 = arith.constant 0 : index
    %c0_4 = arith.constant 0 : index
    %2 = vector.load %arg1[%c0_1, %c0_2, %c0_3, %c0_4] : memref<1x10x10x128xf32, #tpu.memory_space<vmem>>, vector<1x8x8x128xf32>
    %3 = vector.extract_strided_slice %0 {offsets = [0, 0], sizes = [1, 128], strides = [1, 1]} : vector<9x128xf32> to vector<1x128xf32>
    %4 = vector.shape_cast %3 : vector<1x128xf32> to vector<128xf32>
    %5 = vector.shape_cast %4 : vector<128xf32> to vector<1x1x1x128xf32>
    %6 = vector.broadcast %5 : vector<1x1x1x128xf32> to vector<1x8x8x128xf32>
    %7 = arith.mulf %2, %6 : vector<1x8x8x128xf32>
    %8 = arith.addf %1, %7 : vector<1x8x8x128xf32>
    %c0_5 = arith.constant 0 : index
    %c0_6 = arith.constant 0 : index
    %c1 = arith.constant 1 : index
    %c0_7 = arith.constant 0 : index
    %9 = vector.load %arg1[%c0_5, %c0_6, %c1, %c0_7] : memref<1x10x10x128xf32, #tpu.memory_space<vmem>>, vector<1x8x8x128xf32>
    %10 = vector.extract_strided_slice %0 {offsets = [1, 0], sizes = [1, 128], strides = [1, 1]} : vector<9x128xf32> to vector<1x128xf32>
    %11 = vector.shape_cast %10 : vector<1x128xf32> to vector<128xf32>
    %12 = vector.shape_cast %11 : vector<128xf32> to vector<1x1x1x128xf32>
    %13 = vector.broadcast %12 : vector<1x1x1x128xf32> to vector<1x8x8x128xf32>
    %14 = arith.mulf %9, %13 : vector<1x8x8x128xf32>
    %15 = arith.addf %8, %14 : vector<1x8x8x128xf32>
    %c0_8 = arith.constant 0 : index
    %c0_9 = arith.constant 0 : index
    %c2 = arith.constant 2 : index
    %c0_10 = arith.constant 0 : index
    %16 = vector.load %arg1[%c0_8, %c0_9, %c2, %c0_10] : memref<1x10x10x128xf32, #tpu.memory_space<vmem>>, vector<1x8x8x128xf32>
    %17 = vector.extract_strided_slice %0 {offsets = [2, 0], sizes = [1, 128], strides = [1, 1]} : vector<9x128xf32> to vector<1x128xf32>
    %18 = vector.shape_cast %17 : vector<1x128xf32> to vector<128xf32>
    %19 = vector.shape_cast %18 : vector<128xf32> to vector<1x1x1x128xf32>
    %20 = vector.broadcast %19 : vector<1x1x1x128xf32> to vector<1x8x8x128xf32>
    %21 = arith.mulf %16, %20 : vector<1x8x8x128xf32>
    %22 = arith.addf %15, %21 : vector<1x8x8x128xf32>
    %c0_11 = arith.constant 0 : index
    %c1_12 = arith.constant 1 : index
    %c0_13 = arith.constant 0 : index
    %c0_14 = arith.constant 0 : index
    %23 = vector.load %arg1[%c0_11, %c1_12, %c0_13, %c0_14] : memref<1x10x10x128xf32, #tpu.memory_space<vmem>>, vector<1x8x8x128xf32>
    %24 = vector.extract_strided_slice %0 {offsets = [3, 0], sizes = [1, 128], strides = [1, 1]} : vector<9x128xf32> to vector<1x128xf32>
    %25 = vector.shape_cast %24 : vector<1x128xf32> to vector<128xf32>
    %26 = vector.shape_cast %25 : vector<128xf32> to vector<1x1x1x128xf32>
    %27 = vector.broadcast %26 : vector<1x1x1x128xf32> to vector<1x8x8x128xf32>
    %28 = arith.mulf %23, %27 : vector<1x8x8x128xf32>
    %29 = arith.addf %22, %28 : vector<1x8x8x128xf32>
    %c0_15 = arith.constant 0 : index
    %c1_16 = arith.constant 1 : index
    %c1_17 = arith.constant 1 : index
    %c0_18 = arith.constant 0 : index
    %30 = vector.load %arg1[%c0_15, %c1_16, %c1_17, %c0_18] : memref<1x10x10x128xf32, #tpu.memory_space<vmem>>, vector<1x8x8x128xf32>
    %31 = vector.extract_strided_slice %0 {offsets = [4, 0], sizes = [1, 128], strides = [1, 1]} : vector<9x128xf32> to vector<1x128xf32>
    %32 = vector.shape_cast %31 : vector<1x128xf32> to vector<128xf32>
    %33 = vector.shape_cast %32 : vector<128xf32> to vector<1x1x1x128xf32>
    %34 = vector.broadcast %33 : vector<1x1x1x128xf32> to vector<1x8x8x128xf32>
    %35 = arith.mulf %30, %34 : vector<1x8x8x128xf32>
    %36 = arith.addf %29, %35 : vector<1x8x8x128xf32>
    %c0_19 = arith.constant 0 : index
    %c1_20 = arith.constant 1 : index
    %c2_21 = arith.constant 2 : index
    %c0_22 = arith.constant 0 : index
    %37 = vector.load %arg1[%c0_19, %c1_20, %c2_21, %c0_22] : memref<1x10x10x128xf32, #tpu.memory_space<vmem>>, vector<1x8x8x128xf32>
    %38 = vector.extract_strided_slice %0 {offsets = [5, 0], sizes = [1, 128], strides = [1, 1]} : vector<9x128xf32> to vector<1x128xf32>
    %39 = vector.shape_cast %38 : vector<1x128xf32> to vector<128xf32>
    %40 = vector.shape_cast %39 : vector<128xf32> to vector<1x1x1x128xf32>
    %41 = vector.broadcast %40 : vector<1x1x1x128xf32> to vector<1x8x8x128xf32>
    %42 = arith.mulf %37, %41 : vector<1x8x8x128xf32>
    %43 = arith.addf %36, %42 : vector<1x8x8x128xf32>
    %c0_23 = arith.constant 0 : index
    %c2_24 = arith.constant 2 : index
    %c0_25 = arith.constant 0 : index
    %c0_26 = arith.constant 0 : index
    %44 = vector.load %arg1[%c0_23, %c2_24, %c0_25, %c0_26] : memref<1x10x10x128xf32, #tpu.memory_space<vmem>>, vector<1x8x8x128xf32>
    %45 = vector.extract_strided_slice %0 {offsets = [6, 0], sizes = [1, 128], strides = [1, 1]} : vector<9x128xf32> to vector<1x128xf32>
    %46 = vector.shape_cast %45 : vector<1x128xf32> to vector<128xf32>
    %47 = vector.shape_cast %46 : vector<128xf32> to vector<1x1x1x128xf32>
    %48 = vector.broadcast %47 : vector<1x1x1x128xf32> to vector<1x8x8x128xf32>
    %49 = arith.mulf %44, %48 : vector<1x8x8x128xf32>
    %50 = arith.addf %43, %49 : vector<1x8x8x128xf32>
    %c0_27 = arith.constant 0 : index
    %c2_28 = arith.constant 2 : index
    %c1_29 = arith.constant 1 : index
    %c0_30 = arith.constant 0 : index
    %51 = vector.load %arg1[%c0_27, %c2_28, %c1_29, %c0_30] : memref<1x10x10x128xf32, #tpu.memory_space<vmem>>, vector<1x8x8x128xf32>
    %52 = vector.extract_strided_slice %0 {offsets = [7, 0], sizes = [1, 128], strides = [1, 1]} : vector<9x128xf32> to vector<1x128xf32>
    %53 = vector.shape_cast %52 : vector<1x128xf32> to vector<128xf32>
    %54 = vector.shape_cast %53 : vector<128xf32> to vector<1x1x1x128xf32>
    %55 = vector.broadcast %54 : vector<1x1x1x128xf32> to vector<1x8x8x128xf32>
    %56 = arith.mulf %51, %55 : vector<1x8x8x128xf32>
    %57 = arith.addf %50, %56 : vector<1x8x8x128xf32>
    %c0_31 = arith.constant 0 : index
    %c2_32 = arith.constant 2 : index
    %c2_33 = arith.constant 2 : index
    %c0_34 = arith.constant 0 : index
    %58 = vector.load %arg1[%c0_31, %c2_32, %c2_33, %c0_34] : memref<1x10x10x128xf32, #tpu.memory_space<vmem>>, vector<1x8x8x128xf32>
    %59 = vector.extract_strided_slice %0 {offsets = [8, 0], sizes = [1, 128], strides = [1, 1]} : vector<9x128xf32> to vector<1x128xf32>
    %60 = vector.shape_cast %59 : vector<1x128xf32> to vector<128xf32>
    %61 = vector.shape_cast %60 : vector<128xf32> to vector<1x1x1x128xf32>
    %62 = vector.broadcast %61 : vector<1x1x1x128xf32> to vector<1x8x8x128xf32>
    %63 = arith.mulf %58, %62 : vector<1x8x8x128xf32>
    %64 = arith.addf %57, %63 : vector<1x8x8x128xf32>
    %c0_35 = arith.constant 0 : index
    %c0_36 = arith.constant 0 : index
    %65 = vector.load %arg3[%c0_35, %c0_36] : memref<1x128xf32, #tpu.memory_space<vmem>>, vector<1x128xf32>
    %66 = vector.shape_cast %65 : vector<1x128xf32> to vector<1x1x1x128xf32>
    %67 = vector.broadcast %66 : vector<1x1x1x128xf32> to vector<1x8x8x128xf32>
    %68 = arith.mulf %64, %67 : vector<1x8x8x128xf32>
    %c0_37 = arith.constant 0 : index
    %c0_38 = arith.constant 0 : index
    %69 = vector.load %arg4[%c0_37, %c0_38] : memref<1x128xf32, #tpu.memory_space<vmem>>, vector<1x128xf32>
    %70 = vector.shape_cast %69 : vector<1x128xf32> to vector<1x1x1x128xf32>
    %71 = vector.broadcast %70 : vector<1x1x1x128xf32> to vector<1x8x8x128xf32>
    %72 = arith.addf %68, %71 : vector<1x8x8x128xf32>
    %cst_39 = arith.constant 0.000000e+00 : f32
    %73 = vector.broadcast %cst_39 : f32 to vector<1x8x8x128xf32>
    %74 = arith.maximumf %72, %73 : vector<1x8x8x128xf32>
    %c0_40 = arith.constant 0 : index
    %c0_41 = arith.constant 0 : index
    %c0_42 = arith.constant 0 : index
    %c0_43 = arith.constant 0 : index
    %75 = vector.load %arg5[%c0_40, %c0_41, %c0_42, %c0_43] : memref<1x8x8x128xf32, #tpu.memory_space<vmem>>, vector<1x8x8x128xf32>
    tpu.vector_store %arg5[%c0_40, %c0_41, %c0_42, %c0_43], %74 {strides = array<i32>} : memref<1x8x8x128xf32, #tpu.memory_space<vmem>>, vector<1x8x8x128xf32>,
    return
  }
  func.func @transform_0(%arg0: i32) -> (i32, i32, i32, i32) {
    %c0_i32 = arith.constant 0 : i32
    %c0_i32_0 = arith.constant 0 : i32
    %c0_i32_1 = arith.constant 0 : i32
    %c0_i32_2 = arith.constant 0 : i32
    return %arg0, %c0_i32, %c0_i32_0, %c0_i32_1 : i32, i32, i32, i32
  }
  func.func @transform_1(%arg0: i32) -> (i32, i32) {
    %c0_i32 = arith.constant 0 : i32
    %c0_i32_0 = arith.constant 0 : i32
    %c0_i32_1 = arith.constant 0 : i32
    return %c0_i32, %c0_i32_0 : i32, i32
  }
  func.func @transform_2(%arg0: i32) -> (i32, i32) {
    %c0_i32 = arith.constant 0 : i32
    %c0_i32_0 = arith.constant 0 : i32
    %c0_i32_1 = arith.constant 0 : i32
    return %c0_i32, %c0_i32_0 : i32, i32
  }
  func.func @transform_3(%arg0: i32) -> (i32, i32) {
    %c0_i32 = arith.constant 0 : i32
    %c0_i32_0 = arith.constant 0 : i32
    %c0_i32_1 = arith.constant 0 : i32
    return %c0_i32, %c0_i32_0 : i32, i32
  }
  func.func @transform_4(%arg0: i32) -> (i32, i32, i32, i32) {
    %c0_i32 = arith.constant 0 : i32
    %c0_i32_0 = arith.constant 0 : i32
    %c0_i32_1 = arith.constant 0 : i32
    %c0_i32_2 = arith.constant 0 : i32
    return %arg0, %c0_i32, %c0_i32_0, %c0_i32_1 : i32, i32, i32, i32
  }
}

module attributes {stable_mosaic.version = 11 : i64} {
  func.func @_fused_matmul_kernel(%arg0: i32, %arg1: memref<128x128xf32, #tpu.memory_space<vmem>>, %arg2: memref<128x128xbf16, #tpu.memory_space<vmem>>, %arg3: memref<1x128xf32, #tpu.memory_space<vmem>>, %arg4: memref<1x128xf32, #tpu.memory_space<vmem>>, %arg5: memref<128x128xf32, #tpu.memory_space<vmem>>, %arg6: memref<128x128xf32, #tpu.memory_space<vmem>>) attributes {dimension_semantics = [#tpu.dimension_semantics<parallel>], iteration_bounds = array<i64: 1>, scalar_prefetch = 0 : i64, scratch_operands = 0 : i64, tpu.core_type = #tpu.core_type<tc>, window_params = [{transform_indices = @transform_0, window_bounds = array<i64: 128, 128>}, {pipeline_mode = #tpu.pipeline_mode<synchronous>, transform_indices = @transform_1, window_bounds = array<i64: 128, 128>}, {pipeline_mode = #tpu.pipeline_mode<synchronous>, transform_indices = @transform_2, window_bounds = array<i64: 1, 128>}, {pipeline_mode = #tpu.pipeline_mode<synchronous>, transform_indices = @transform_3, window_bounds = array<i64: 1, 128>}, {transform_indices = @transform_4, window_bounds = array<i64: 128, 128>}, {transform_indices = @transform_5, window_bounds = array<i64: 128, 128>}]} {
    %c0 = arith.constant 0 : index
    %c0_0 = arith.constant 0 : index
    %0 = vector.load %arg1[%c0, %c0_0] : memref<128x128xf32, #tpu.memory_space<vmem>>, vector<128x128xf32>
    %1 = arith.truncf %0 : vector<128x128xf32> to vector<128x128xbf16>
    %c0_1 = arith.constant 0 : index
    %c0_2 = arith.constant 0 : index
    %2 = vector.load %arg2[%c0_1, %c0_2] : memref<128x128xbf16, #tpu.memory_space<vmem>>, vector<128x128xbf16>
    %cst = arith.constant dense<0.000000e+00> : vector<128x128xf32>
    %3 = tpu.matmul %1, %2, %cst {dimension_numbers = #tpu.dot_dimension_numbers<[1], [0], [0], [1], [0, 0, 1, 1], [], []>} : vector<128x128xbf16>, vector<128x128xbf16>, vector<128x128xf32> -> vector<128x128xf32>
    %c0_3 = arith.constant 0 : index
    %c0_4 = arith.constant 0 : index
    %4 = vector.load %arg3[%c0_3, %c0_4] : memref<1x128xf32, #tpu.memory_space<vmem>>, vector<1x128xf32>
    %5 = vector.broadcast %4 : vector<1x128xf32> to vector<128x128xf32>
    %6 = arith.mulf %3, %5 : vector<128x128xf32>
    %c0_5 = arith.constant 0 : index
    %c0_6 = arith.constant 0 : index
    %7 = vector.load %arg4[%c0_5, %c0_6] : memref<1x128xf32, #tpu.memory_space<vmem>>, vector<1x128xf32>
    %8 = vector.broadcast %7 : vector<1x128xf32> to vector<128x128xf32>
    %9 = arith.addf %6, %8 : vector<128x128xf32>
    %c0_7 = arith.constant 0 : index
    %c0_8 = arith.constant 0 : index
    %10 = vector.load %arg5[%c0_7, %c0_8] : memref<128x128xf32, #tpu.memory_space<vmem>>, vector<128x128xf32>
    %11 = arith.addf %9, %10 : vector<128x128xf32>
    %c0_9 = arith.constant 0 : index
    %c0_10 = arith.constant 0 : index
    %12 = vector.load %arg6[%c0_9, %c0_10] : memref<128x128xf32, #tpu.memory_space<vmem>>, vector<128x128xf32>
    tpu.vector_store %arg6[%c0_9, %c0_10], %11 {strides = array<i32>} : memref<128x128xf32, #tpu.memory_space<vmem>>, vector<128x128xf32>,
    return
  }
  func.func @transform_0(%arg0: i32) -> (i32, i32) {
    %c0_i32 = arith.constant 0 : i32
    %c0_i32_0 = arith.constant 0 : i32
    return %arg0, %c0_i32 : i32, i32
  }
  func.func @transform_1(%arg0: i32) -> (i32, i32) {
    %c0_i32 = arith.constant 0 : i32
    %c0_i32_0 = arith.constant 0 : i32
    %c0_i32_1 = arith.constant 0 : i32
    return %c0_i32, %c0_i32_0 : i32, i32
  }
  func.func @transform_2(%arg0: i32) -> (i32, i32) {
    %c0_i32 = arith.constant 0 : i32
    %c0_i32_0 = arith.constant 0 : i32
    %c0_i32_1 = arith.constant 0 : i32
    return %c0_i32, %c0_i32_0 : i32, i32
  }
  func.func @transform_3(%arg0: i32) -> (i32, i32) {
    %c0_i32 = arith.constant 0 : i32
    %c0_i32_0 = arith.constant 0 : i32
    %c0_i32_1 = arith.constant 0 : i32
    return %c0_i32, %c0_i32_0 : i32, i32
  }
  func.func @transform_4(%arg0: i32) -> (i32, i32) {
    %c0_i32 = arith.constant 0 : i32
    %c0_i32_0 = arith.constant 0 : i32
    return %arg0, %c0_i32 : i32, i32
  }
  func.func @transform_5(%arg0: i32) -> (i32, i32) {
    %c0_i32 = arith.constant 0 : i32
    %c0_i32_0 = arith.constant 0 : i32
    return %arg0, %c0_i32 : i32, i32
  }
}

module attributes {stable_mosaic.version = 11 : i64} {
  func.func @_dwconv_se_kernel(%arg0: i32, %arg1: memref<1x5x5x128xf32, #tpu.memory_space<vmem>>, %arg2: memref<1x5x5x128xf32, #tpu.memory_space<vmem>>, %arg3: memref<1x5x5x128xf32, #tpu.memory_space<vmem>>, %arg4: memref<1x5x5x128xf32, #tpu.memory_space<vmem>>, %arg5: memref<9x128xf32, #tpu.memory_space<vmem>>, %arg6: memref<1x128xf32, #tpu.memory_space<vmem>>, %arg7: memref<1x128xf32, #tpu.memory_space<vmem>>, %arg8: memref<128x128xbf16, #tpu.memory_space<vmem>>, %arg9: memref<128x128xbf16, #tpu.memory_space<vmem>>, %arg10: memref<1x4x4x128xf32, #tpu.memory_space<vmem>>) attributes {dimension_semantics = [#tpu.dimension_semantics<parallel>], iteration_bounds = array<i64: 2>, scalar_prefetch = 0 : i64, scratch_operands = 0 : i64, tpu.core_type = #tpu.core_type<tc>, window_params = [{transform_indices = @transform_0, window_bounds = array<i64: 1, 5, 5, 128>}, {transform_indices = @transform_1, window_bounds = array<i64: 1, 5, 5, 128>}, {transform_indices = @transform_2, window_bounds = array<i64: 1, 5, 5, 128>}, {transform_indices = @transform_3, window_bounds = array<i64: 1, 5, 5, 128>}, {pipeline_mode = #tpu.pipeline_mode<synchronous>, transform_indices = @transform_4, window_bounds = array<i64: 9, 128>}, {pipeline_mode = #tpu.pipeline_mode<synchronous>, transform_indices = @transform_5, window_bounds = array<i64: 1, 128>}, {pipeline_mode = #tpu.pipeline_mode<synchronous>, transform_indices = @transform_6, window_bounds = array<i64: 1, 128>}, {pipeline_mode = #tpu.pipeline_mode<synchronous>, transform_indices = @transform_7, window_bounds = array<i64: 128, 128>}, {pipeline_mode = #tpu.pipeline_mode<synchronous>, transform_indices = @transform_8, window_bounds = array<i64: 128, 128>}, {transform_indices = @transform_9, window_bounds = array<i64: 1, 4, 4, 128>}]} {
    %c0 = arith.constant 0 : index
    %c0_0 = arith.constant 0 : index
    %0 = vector.load %arg5[%c0, %c0_0] : memref<9x128xf32, #tpu.memory_space<vmem>>, vector<9x128xf32>
    %cst = arith.constant 0.000000e+00 : f32
    %1 = vector.broadcast %cst : f32 to vector<1x4x4x128xf32>
    %c0_1 = arith.constant 0 : index
    %c0_2 = arith.constant 0 : index
    %c0_3 = arith.constant 0 : index
    %c0_4 = arith.constant 0 : index
    %2 = vector.load %arg1[%c0_1, %c0_2, %c0_3, %c0_4] : memref<1x5x5x128xf32, #tpu.memory_space<vmem>>, vector<1x4x4x128xf32>
    %3 = vector.extract_strided_slice %0 {offsets = [0, 0], sizes = [1, 128], strides = [1, 1]} : vector<9x128xf32> to vector<1x128xf32>
    %4 = vector.shape_cast %3 : vector<1x128xf32> to vector<128xf32>
    %5 = vector.shape_cast %4 : vector<128xf32> to vector<1x1x1x128xf32>
    %6 = vector.broadcast %5 : vector<1x1x1x128xf32> to vector<1x4x4x128xf32>
    %7 = arith.mulf %2, %6 : vector<1x4x4x128xf32>
    %8 = arith.addf %1, %7 : vector<1x4x4x128xf32>
    %c0_5 = arith.constant 0 : index
    %c0_6 = arith.constant 0 : index
    %c0_7 = arith.constant 0 : index
    %c0_8 = arith.constant 0 : index
    %9 = vector.load %arg2[%c0_5, %c0_6, %c0_7, %c0_8] : memref<1x5x5x128xf32, #tpu.memory_space<vmem>>, vector<1x4x4x128xf32>
    %10 = vector.extract_strided_slice %0 {offsets = [1, 0], sizes = [1, 128], strides = [1, 1]} : vector<9x128xf32> to vector<1x128xf32>
    %11 = vector.shape_cast %10 : vector<1x128xf32> to vector<128xf32>
    %12 = vector.shape_cast %11 : vector<128xf32> to vector<1x1x1x128xf32>
    %13 = vector.broadcast %12 : vector<1x1x1x128xf32> to vector<1x4x4x128xf32>
    %14 = arith.mulf %9, %13 : vector<1x4x4x128xf32>
    %15 = arith.addf %8, %14 : vector<1x4x4x128xf32>
    %c0_9 = arith.constant 0 : index
    %c0_10 = arith.constant 0 : index
    %c1 = arith.constant 1 : index
    %c0_11 = arith.constant 0 : index
    %16 = vector.load %arg1[%c0_9, %c0_10, %c1, %c0_11] : memref<1x5x5x128xf32, #tpu.memory_space<vmem>>, vector<1x4x4x128xf32>
    %17 = vector.extract_strided_slice %0 {offsets = [2, 0], sizes = [1, 128], strides = [1, 1]} : vector<9x128xf32> to vector<1x128xf32>
    %18 = vector.shape_cast %17 : vector<1x128xf32> to vector<128xf32>
    %19 = vector.shape_cast %18 : vector<128xf32> to vector<1x1x1x128xf32>
    %20 = vector.broadcast %19 : vector<1x1x1x128xf32> to vector<1x4x4x128xf32>
    %21 = arith.mulf %16, %20 : vector<1x4x4x128xf32>
    %22 = arith.addf %15, %21 : vector<1x4x4x128xf32>
    %c0_12 = arith.constant 0 : index
    %c0_13 = arith.constant 0 : index
    %c0_14 = arith.constant 0 : index
    %c0_15 = arith.constant 0 : index
    %23 = vector.load %arg3[%c0_12, %c0_13, %c0_14, %c0_15] : memref<1x5x5x128xf32, #tpu.memory_space<vmem>>, vector<1x4x4x128xf32>
    %24 = vector.extract_strided_slice %0 {offsets = [3, 0], sizes = [1, 128], strides = [1, 1]} : vector<9x128xf32> to vector<1x128xf32>
    %25 = vector.shape_cast %24 : vector<1x128xf32> to vector<128xf32>
    %26 = vector.shape_cast %25 : vector<128xf32> to vector<1x1x1x128xf32>
    %27 = vector.broadcast %26 : vector<1x1x1x128xf32> to vector<1x4x4x128xf32>
    %28 = arith.mulf %23, %27 : vector<1x4x4x128xf32>
    %29 = arith.addf %22, %28 : vector<1x4x4x128xf32>
    %c0_16 = arith.constant 0 : index
    %c0_17 = arith.constant 0 : index
    %c0_18 = arith.constant 0 : index
    %c0_19 = arith.constant 0 : index
    %30 = vector.load %arg4[%c0_16, %c0_17, %c0_18, %c0_19] : memref<1x5x5x128xf32, #tpu.memory_space<vmem>>, vector<1x4x4x128xf32>
    %31 = vector.extract_strided_slice %0 {offsets = [4, 0], sizes = [1, 128], strides = [1, 1]} : vector<9x128xf32> to vector<1x128xf32>
    %32 = vector.shape_cast %31 : vector<1x128xf32> to vector<128xf32>
    %33 = vector.shape_cast %32 : vector<128xf32> to vector<1x1x1x128xf32>
    %34 = vector.broadcast %33 : vector<1x1x1x128xf32> to vector<1x4x4x128xf32>
    %35 = arith.mulf %30, %34 : vector<1x4x4x128xf32>
    %36 = arith.addf %29, %35 : vector<1x4x4x128xf32>
    %c0_20 = arith.constant 0 : index
    %c0_21 = arith.constant 0 : index
    %c1_22 = arith.constant 1 : index
    %c0_23 = arith.constant 0 : index
    %37 = vector.load %arg3[%c0_20, %c0_21, %c1_22, %c0_23] : memref<1x5x5x128xf32, #tpu.memory_space<vmem>>, vector<1x4x4x128xf32>
    %38 = vector.extract_strided_slice %0 {offsets = [5, 0], sizes = [1, 128], strides = [1, 1]} : vector<9x128xf32> to vector<1x128xf32>
    %39 = vector.shape_cast %38 : vector<1x128xf32> to vector<128xf32>
    %40 = vector.shape_cast %39 : vector<128xf32> to vector<1x1x1x128xf32>
    %41 = vector.broadcast %40 : vector<1x1x1x128xf32> to vector<1x4x4x128xf32>
    %42 = arith.mulf %37, %41 : vector<1x4x4x128xf32>
    %43 = arith.addf %36, %42 : vector<1x4x4x128xf32>
    %c0_24 = arith.constant 0 : index
    %c1_25 = arith.constant 1 : index
    %c0_26 = arith.constant 0 : index
    %c0_27 = arith.constant 0 : index
    %44 = vector.load %arg1[%c0_24, %c1_25, %c0_26, %c0_27] : memref<1x5x5x128xf32, #tpu.memory_space<vmem>>, vector<1x4x4x128xf32>
    %45 = vector.extract_strided_slice %0 {offsets = [6, 0], sizes = [1, 128], strides = [1, 1]} : vector<9x128xf32> to vector<1x128xf32>
    %46 = vector.shape_cast %45 : vector<1x128xf32> to vector<128xf32>
    %47 = vector.shape_cast %46 : vector<128xf32> to vector<1x1x1x128xf32>
    %48 = vector.broadcast %47 : vector<1x1x1x128xf32> to vector<1x4x4x128xf32>
    %49 = arith.mulf %44, %48 : vector<1x4x4x128xf32>
    %50 = arith.addf %43, %49 : vector<1x4x4x128xf32>
    %c0_28 = arith.constant 0 : index
    %c1_29 = arith.constant 1 : index
    %c0_30 = arith.constant 0 : index
    %c0_31 = arith.constant 0 : index
    %51 = vector.load %arg2[%c0_28, %c1_29, %c0_30, %c0_31] : memref<1x5x5x128xf32, #tpu.memory_space<vmem>>, vector<1x4x4x128xf32>
    %52 = vector.extract_strided_slice %0 {offsets = [7, 0], sizes = [1, 128], strides = [1, 1]} : vector<9x128xf32> to vector<1x128xf32>
    %53 = vector.shape_cast %52 : vector<1x128xf32> to vector<128xf32>
    %54 = vector.shape_cast %53 : vector<128xf32> to vector<1x1x1x128xf32>
    %55 = vector.broadcast %54 : vector<1x1x1x128xf32> to vector<1x4x4x128xf32>
    %56 = arith.mulf %51, %55 : vector<1x4x4x128xf32>
    %57 = arith.addf %50, %56 : vector<1x4x4x128xf32>
    %c0_32 = arith.constant 0 : index
    %c1_33 = arith.constant 1 : index
    %c1_34 = arith.constant 1 : index
    %c0_35 = arith.constant 0 : index
    %58 = vector.load %arg1[%c0_32, %c1_33, %c1_34, %c0_35] : memref<1x5x5x128xf32, #tpu.memory_space<vmem>>, vector<1x4x4x128xf32>
    %59 = vector.extract_strided_slice %0 {offsets = [8, 0], sizes = [1, 128], strides = [1, 1]} : vector<9x128xf32> to vector<1x128xf32>
    %60 = vector.shape_cast %59 : vector<1x128xf32> to vector<128xf32>
    %61 = vector.shape_cast %60 : vector<128xf32> to vector<1x1x1x128xf32>
    %62 = vector.broadcast %61 : vector<1x1x1x128xf32> to vector<1x4x4x128xf32>
    %63 = arith.mulf %58, %62 : vector<1x4x4x128xf32>
    %64 = arith.addf %57, %63 : vector<1x4x4x128xf32>
    %c0_36 = arith.constant 0 : index
    %c0_37 = arith.constant 0 : index
    %65 = vector.load %arg6[%c0_36, %c0_37] : memref<1x128xf32, #tpu.memory_space<vmem>>, vector<1x128xf32>
    %66 = vector.shape_cast %65 : vector<1x128xf32> to vector<1x1x1x128xf32>
    %67 = vector.broadcast %66 : vector<1x1x1x128xf32> to vector<1x4x4x128xf32>
    %68 = arith.mulf %64, %67 : vector<1x4x4x128xf32>
    %c0_38 = arith.constant 0 : index
    %c0_39 = arith.constant 0 : index
    %69 = vector.load %arg7[%c0_38, %c0_39] : memref<1x128xf32, #tpu.memory_space<vmem>>, vector<1x128xf32>
    %70 = vector.shape_cast %69 : vector<1x128xf32> to vector<1x1x1x128xf32>
    %71 = vector.broadcast %70 : vector<1x1x1x128xf32> to vector<1x4x4x128xf32>
    %72 = arith.addf %68, %71 : vector<1x4x4x128xf32>
    %73 = vector.shape_cast %72 : vector<1x4x4x128xf32> to vector<16x128xf32>
    %cst_40 = arith.constant dense<0.000000e+00> : vector<128xf32>
    %74 = vector.multi_reduction <add>, %73, %cst_40 [0] : vector<16x128xf32> to vector<128xf32>
    %75 = vector.shape_cast %74 : vector<128xf32> to vector<1x128xf32>
    %cst_41 = arith.constant 1.600000e+01 : f32
    %76 = vector.broadcast %cst_41 : f32 to vector<1x128xf32>
    %77 = arith.divf %75, %76 : vector<1x128xf32>
    %78 = arith.truncf %77 : vector<1x128xf32> to vector<1x128xbf16>
    %c0_42 = arith.constant 0 : index
    %c0_43 = arith.constant 0 : index
    %79 = vector.load %arg8[%c0_42, %c0_43] : memref<128x128xbf16, #tpu.memory_space<vmem>>, vector<128x128xbf16>
    %cst_44 = arith.constant dense<0.000000e+00> : vector<1x128xf32>
    %80 = tpu.matmul %78, %79, %cst_44 {dimension_numbers = #tpu.dot_dimension_numbers<[1], [0], [0], [1], [0, 0, 1, 1], [], []>} : vector<1x128xbf16>, vector<128x128xbf16>, vector<1x128xf32> -> vector<1x128xf32>
    %cst_45 = arith.constant 0.000000e+00 : f32
    %81 = vector.broadcast %cst_45 : f32 to vector<1x128xf32>
    %82 = arith.maximumf %80, %81 : vector<1x128xf32>
    %83 = arith.truncf %82 : vector<1x128xf32> to vector<1x128xbf16>
    %c0_46 = arith.constant 0 : index
    %c0_47 = arith.constant 0 : index
    %84 = vector.load %arg9[%c0_46, %c0_47] : memref<128x128xbf16, #tpu.memory_space<vmem>>, vector<128x128xbf16>
    %cst_48 = arith.constant dense<0.000000e+00> : vector<1x128xf32>
    %85 = tpu.matmul %83, %84, %cst_48 {dimension_numbers = #tpu.dot_dimension_numbers<[1], [0], [0], [1], [0, 0, 1, 1], [], []>} : vector<1x128xbf16>, vector<128x128xbf16>, vector<1x128xf32> -> vector<1x128xf32>
    %cst_49 = arith.constant 3.000000e+00 : f32
    %86 = vector.broadcast %cst_49 : f32 to vector<1x128xf32>
    %87 = arith.addf %85, %86 : vector<1x128xf32>
    %cst_50 = arith.constant 0.000000e+00 : f32
    %cst_51 = arith.constant 6.000000e+00 : f32
    %88 = vector.broadcast %cst_50 : f32 to vector<1x128xf32>
    %89 = arith.maximumf %88, %87 : vector<1x128xf32>
    %90 = vector.broadcast %cst_51 : f32 to vector<1x128xf32>
    %91 = arith.minimumf %90, %89 : vector<1x128xf32>
    %cst_52 = arith.constant 0.166666672 : f32
    %92 = vector.broadcast %cst_52 : f32 to vector<1x128xf32>
    %93 = arith.mulf %91, %92 : vector<1x128xf32>
    %94 = vector.shape_cast %93 : vector<1x128xf32> to vector<1x1x1x128xf32>
    %95 = vector.broadcast %94 : vector<1x1x1x128xf32> to vector<1x4x4x128xf32>
    %96 = arith.mulf %72, %95 : vector<1x4x4x128xf32>
    %cst_53 = arith.constant 3.000000e+00 : f32
    %97 = vector.broadcast %cst_53 : f32 to vector<1x4x4x128xf32>
    %98 = arith.addf %96, %97 : vector<1x4x4x128xf32>
    %cst_54 = arith.constant 0.000000e+00 : f32
    %cst_55 = arith.constant 6.000000e+00 : f32
    %99 = vector.broadcast %cst_54 : f32 to vector<1x4x4x128xf32>
    %100 = arith.maximumf %99, %98 : vector<1x4x4x128xf32>
    %101 = vector.broadcast %cst_55 : f32 to vector<1x4x4x128xf32>
    %102 = arith.minimumf %101, %100 : vector<1x4x4x128xf32>
    %103 = arith.mulf %96, %102 : vector<1x4x4x128xf32>
    %cst_56 = arith.constant 0.166666672 : f32
    %104 = vector.broadcast %cst_56 : f32 to vector<1x4x4x128xf32>
    %105 = arith.mulf %103, %104 : vector<1x4x4x128xf32>
    %c0_57 = arith.constant 0 : index
    %c0_58 = arith.constant 0 : index
    %c0_59 = arith.constant 0 : index
    %c0_60 = arith.constant 0 : index
    %106 = vector.load %arg10[%c0_57, %c0_58, %c0_59, %c0_60] : memref<1x4x4x128xf32, #tpu.memory_space<vmem>>, vector<1x4x4x128xf32>
    tpu.vector_store %arg10[%c0_57, %c0_58, %c0_59, %c0_60], %105 {strides = array<i32>} : memref<1x4x4x128xf32, #tpu.memory_space<vmem>>, vector<1x4x4x128xf32>,
    return
  }
  func.func @transform_0(%arg0: i32) -> (i32, i32, i32, i32) {
    %c0_i32 = arith.constant 0 : i32
    %c0_i32_0 = arith.constant 0 : i32
    %c0_i32_1 = arith.constant 0 : i32
    %c0_i32_2 = arith.constant 0 : i32
    return %arg0, %c0_i32, %c0_i32_0, %c0_i32_1 : i32, i32, i32, i32
  }
  func.func @transform_1(%arg0: i32) -> (i32, i32, i32, i32) {
    %c0_i32 = arith.constant 0 : i32
    %c0_i32_0 = arith.constant 0 : i32
    %c0_i32_1 = arith.constant 0 : i32
    %c0_i32_2 = arith.constant 0 : i32
    return %arg0, %c0_i32, %c0_i32_0, %c0_i32_1 : i32, i32, i32, i32
  }
  func.func @transform_2(%arg0: i32) -> (i32, i32, i32, i32) {
    %c0_i32 = arith.constant 0 : i32
    %c0_i32_0 = arith.constant 0 : i32
    %c0_i32_1 = arith.constant 0 : i32
    %c0_i32_2 = arith.constant 0 : i32
    return %arg0, %c0_i32, %c0_i32_0, %c0_i32_1 : i32, i32, i32, i32
  }
  func.func @transform_3(%arg0: i32) -> (i32, i32, i32, i32) {
    %c0_i32 = arith.constant 0 : i32
    %c0_i32_0 = arith.constant 0 : i32
    %c0_i32_1 = arith.constant 0 : i32
    %c0_i32_2 = arith.constant 0 : i32
    return %arg0, %c0_i32, %c0_i32_0, %c0_i32_1 : i32, i32, i32, i32
  }
  func.func @transform_4(%arg0: i32) -> (i32, i32) {
    %c0_i32 = arith.constant 0 : i32
    %c0_i32_0 = arith.constant 0 : i32
    %c0_i32_1 = arith.constant 0 : i32
    return %c0_i32, %c0_i32_0 : i32, i32
  }
  func.func @transform_5(%arg0: i32) -> (i32, i32) {
    %c0_i32 = arith.constant 0 : i32
    %c0_i32_0 = arith.constant 0 : i32
    %c0_i32_1 = arith.constant 0 : i32
    return %c0_i32, %c0_i32_0 : i32, i32
  }
  func.func @transform_6(%arg0: i32) -> (i32, i32) {
    %c0_i32 = arith.constant 0 : i32
    %c0_i32_0 = arith.constant 0 : i32
    %c0_i32_1 = arith.constant 0 : i32
    return %c0_i32, %c0_i32_0 : i32, i32
  }
  func.func @transform_7(%arg0: i32) -> (i32, i32) {
    %c0_i32 = arith.constant 0 : i32
    %c0_i32_0 = arith.constant 0 : i32
    %c0_i32_1 = arith.constant 0 : i32
    return %c0_i32, %c0_i32_0 : i32, i32
  }
  func.func @transform_8(%arg0: i32) -> (i32, i32) {
    %c0_i32 = arith.constant 0 : i32
    %c0_i32_0 = arith.constant 0 : i32
    %c0_i32_1 = arith.constant 0 : i32
    return %c0_i32, %c0_i32_0 : i32, i32
  }
  func.func @transform_9(%arg0: i32) -> (i32, i32, i32, i32) {
    %c0_i32 = arith.constant 0 : i32
    %c0_i32_0 = arith.constant 0 : i32
    %c0_i32_1 = arith.constant 0 : i32
    %c0_i32_2 = arith.constant 0 : i32
    return %arg0, %c0_i32, %c0_i32_0, %c0_i32_1 : i32, i32, i32, i32
  }
}

module attributes {stable_mosaic.version = 11 : i64} {
  func.func @_fused_matmul_kernel(%arg0: i32, %arg1: memref<32x128xf32, #tpu.memory_space<vmem>>, %arg2: memref<128x256xbf16, #tpu.memory_space<vmem>>, %arg3: memref<1x256xf32, #tpu.memory_space<vmem>>, %arg4: memref<1x256xf32, #tpu.memory_space<vmem>>, %arg5: memref<32x256xf32, #tpu.memory_space<vmem>>) attributes {dimension_semantics = [#tpu.dimension_semantics<parallel>], iteration_bounds = array<i64: 1>, scalar_prefetch = 0 : i64, scratch_operands = 0 : i64, tpu.core_type = #tpu.core_type<tc>, window_params = [{transform_indices = @transform_0, window_bounds = array<i64: 32, 128>}, {pipeline_mode = #tpu.pipeline_mode<synchronous>, transform_indices = @transform_1, window_bounds = array<i64: 128, 256>}, {pipeline_mode = #tpu.pipeline_mode<synchronous>, transform_indices = @transform_2, window_bounds = array<i64: 1, 256>}, {pipeline_mode = #tpu.pipeline_mode<synchronous>, transform_indices = @transform_3, window_bounds = array<i64: 1, 256>}, {transform_indices = @transform_4, window_bounds = array<i64: 32, 256>}]} {
    %c0 = arith.constant 0 : index
    %c0_0 = arith.constant 0 : index
    %0 = vector.load %arg1[%c0, %c0_0] : memref<32x128xf32, #tpu.memory_space<vmem>>, vector<32x128xf32>
    %1 = arith.truncf %0 : vector<32x128xf32> to vector<32x128xbf16>
    %c0_1 = arith.constant 0 : index
    %c0_2 = arith.constant 0 : index
    %2 = vector.load %arg2[%c0_1, %c0_2] : memref<128x256xbf16, #tpu.memory_space<vmem>>, vector<128x256xbf16>
    %cst = arith.constant dense<0.000000e+00> : vector<32x256xf32>
    %3 = tpu.matmul %1, %2, %cst {dimension_numbers = #tpu.dot_dimension_numbers<[1], [0], [0], [1], [0, 0, 1, 1], [], []>} : vector<32x128xbf16>, vector<128x256xbf16>, vector<32x256xf32> -> vector<32x256xf32>
    %c0_3 = arith.constant 0 : index
    %c0_4 = arith.constant 0 : index
    %4 = vector.load %arg3[%c0_3, %c0_4] : memref<1x256xf32, #tpu.memory_space<vmem>>, vector<1x256xf32>
    %5 = vector.broadcast %4 : vector<1x256xf32> to vector<32x256xf32>
    %6 = arith.mulf %3, %5 : vector<32x256xf32>
    %c0_5 = arith.constant 0 : index
    %c0_6 = arith.constant 0 : index
    %7 = vector.load %arg4[%c0_5, %c0_6] : memref<1x256xf32, #tpu.memory_space<vmem>>, vector<1x256xf32>
    %8 = vector.broadcast %7 : vector<1x256xf32> to vector<32x256xf32>
    %9 = arith.addf %6, %8 : vector<32x256xf32>
    %cst_7 = arith.constant 3.000000e+00 : f32
    %10 = vector.broadcast %cst_7 : f32 to vector<32x256xf32>
    %11 = arith.addf %9, %10 : vector<32x256xf32>
    %cst_8 = arith.constant 0.000000e+00 : f32
    %cst_9 = arith.constant 6.000000e+00 : f32
    %12 = vector.broadcast %cst_8 : f32 to vector<32x256xf32>
    %13 = arith.maximumf %12, %11 : vector<32x256xf32>
    %14 = vector.broadcast %cst_9 : f32 to vector<32x256xf32>
    %15 = arith.minimumf %14, %13 : vector<32x256xf32>
    %16 = arith.mulf %9, %15 : vector<32x256xf32>
    %cst_10 = arith.constant 0.166666672 : f32
    %17 = vector.broadcast %cst_10 : f32 to vector<32x256xf32>
    %18 = arith.mulf %16, %17 : vector<32x256xf32>
    %c0_11 = arith.constant 0 : index
    %c0_12 = arith.constant 0 : index
    %19 = vector.load %arg5[%c0_11, %c0_12] : memref<32x256xf32, #tpu.memory_space<vmem>>, vector<32x256xf32>
    tpu.vector_store %arg5[%c0_11, %c0_12], %18 {strides = array<i32>} : memref<32x256xf32, #tpu.memory_space<vmem>>, vector<32x256xf32>,
    return
  }
  func.func @transform_0(%arg0: i32) -> (i32, i32) {
    %c0_i32 = arith.constant 0 : i32
    %c0_i32_0 = arith.constant 0 : i32
    return %arg0, %c0_i32 : i32, i32
  }
  func.func @transform_1(%arg0: i32) -> (i32, i32) {
    %c0_i32 = arith.constant 0 : i32
    %c0_i32_0 = arith.constant 0 : i32
    %c0_i32_1 = arith.constant 0 : i32
    return %c0_i32, %c0_i32_0 : i32, i32
  }
  func.func @transform_2(%arg0: i32) -> (i32, i32) {
    %c0_i32 = arith.constant 0 : i32
    %c0_i32_0 = arith.constant 0 : i32
    %c0_i32_1 = arith.constant 0 : i32
    return %c0_i32, %c0_i32_0 : i32, i32
  }
  func.func @transform_3(%arg0: i32) -> (i32, i32) {
    %c0_i32 = arith.constant 0 : i32
    %c0_i32_0 = arith.constant 0 : i32
    %c0_i32_1 = arith.constant 0 : i32
    return %c0_i32, %c0_i32_0 : i32, i32
  }
  func.func @transform_4(%arg0: i32) -> (i32, i32) {
    %c0_i32 = arith.constant 0 : i32
    %c0_i32_0 = arith.constant 0 : i32
    return %arg0, %c0_i32 : i32, i32
  }
}

module attributes {stable_mosaic.version = 11 : i64} {
  func.func @_head_kernel(%arg0: i32, %arg1: memref<2x16x256xf32, #tpu.memory_space<vmem>>, %arg2: memref<256x128xbf16, #tpu.memory_space<vmem>>, %arg3: memref<1x128xf32, #tpu.memory_space<vmem>>, %arg4: memref<2x128xf32, #tpu.memory_space<vmem>>) attributes {dimension_semantics = [#tpu.dimension_semantics<arbitrary>], iteration_bounds = array<i64: 1>, scalar_prefetch = 0 : i64, scratch_operands = 0 : i64, tpu.core_type = #tpu.core_type<tc>, window_params = [{pipeline_mode = #tpu.pipeline_mode<synchronous>, transform_indices = @transform_0, window_bounds = array<i64: 2, 16, 256>}, {pipeline_mode = #tpu.pipeline_mode<synchronous>, transform_indices = @transform_1, window_bounds = array<i64: 256, 128>}, {pipeline_mode = #tpu.pipeline_mode<synchronous>, transform_indices = @transform_2, window_bounds = array<i64: 1, 128>}, {pipeline_mode = #tpu.pipeline_mode<synchronous>, transform_indices = @transform_3, window_bounds = array<i64: 2, 128>}]} {
    %c0 = arith.constant 0 : index
    %c0_0 = arith.constant 0 : index
    %c0_1 = arith.constant 0 : index
    %0 = vector.load %arg1[%c0, %c0_0, %c0_1] : memref<2x16x256xf32, #tpu.memory_space<vmem>>, vector<2x16x256xf32>
    %cst = arith.constant dense<0.000000e+00> : vector<2x256xf32>
    %1 = vector.multi_reduction <add>, %0, %cst [1] : vector<2x16x256xf32> to vector<2x256xf32>
    %cst_2 = arith.constant 1.600000e+01 : f32
    %2 = vector.broadcast %cst_2 : f32 to vector<2x256xf32>
    %3 = arith.divf %1, %2 : vector<2x256xf32>
    %4 = arith.truncf %3 : vector<2x256xf32> to vector<2x256xbf16>
    %c0_3 = arith.constant 0 : index
    %c0_4 = arith.constant 0 : index
    %5 = vector.load %arg2[%c0_3, %c0_4] : memref<256x128xbf16, #tpu.memory_space<vmem>>, vector<256x128xbf16>
    %cst_5 = arith.constant dense<0.000000e+00> : vector<2x128xf32>
    %6 = tpu.matmul %4, %5, %cst_5 {dimension_numbers = #tpu.dot_dimension_numbers<[1], [0], [0], [1], [0, 0, 1, 1], [], []>} : vector<2x256xbf16>, vector<256x128xbf16>, vector<2x128xf32> -> vector<2x128xf32>
    %c0_6 = arith.constant 0 : index
    %c0_7 = arith.constant 0 : index
    %7 = vector.load %arg3[%c0_6, %c0_7] : memref<1x128xf32, #tpu.memory_space<vmem>>, vector<1x128xf32>
    %8 = vector.broadcast %7 : vector<1x128xf32> to vector<2x128xf32>
    %9 = arith.addf %6, %8 : vector<2x128xf32>
    %c0_8 = arith.constant 0 : index
    %c0_9 = arith.constant 0 : index
    %10 = vector.load %arg4[%c0_8, %c0_9] : memref<2x128xf32, #tpu.memory_space<vmem>>, vector<2x128xf32>
    tpu.vector_store %arg4[%c0_8, %c0_9], %9 {strides = array<i32>} : memref<2x128xf32, #tpu.memory_space<vmem>>, vector<2x128xf32>,
    return
  }
  func.func @transform_0(%arg0: i32) -> (i32, i32, i32) {
    %c0_i32 = arith.constant 0 : i32
    %c0_i32_0 = arith.constant 0 : i32
    %c0_i32_1 = arith.constant 0 : i32
    %c0_i32_2 = arith.constant 0 : i32
    return %c0_i32, %c0_i32_0, %c0_i32_1 : i32, i32, i32
  }
  func.func @transform_1(%arg0: i32) -> (i32, i32) {
    %c0_i32 = arith.constant 0 : i32
    %c0_i32_0 = arith.constant 0 : i32
    %c0_i32_1 = arith.constant 0 : i32
    return %c0_i32, %c0_i32_0 : i32, i32
  }
  func.func @transform_2(%arg0: i32) -> (i32, i32) {
    %c0_i32 = arith.constant 0 : i32
    %c0_i32_0 = arith.constant 0 : i32
    %c0_i32_1 = arith.constant 0 : i32
    return %c0_i32, %c0_i32_0 : i32, i32
  }
  func.func @transform_3(%arg0: i32) -> (i32, i32) {
    %c0_i32 = arith.constant 0 : i32
    %c0_i32_0 = arith.constant 0 : i32
    %c0_i32_1 = arith.constant 0 : i32
    return %c0_i32, %c0_i32_0 : i32, i32
  }
}

module attributes {stable_mosaic.version = 11 : i64} {
  func.func @_fused_matmul_kernel(%arg0: i32, %arg1: memref<32x128xf32, #tpu.memory_space<vmem>>, %arg2: memref<128x128xbf16, #tpu.memory_space<vmem>>, %arg3: memref<1x128xf32, #tpu.memory_space<vmem>>, %arg4: memref<1x128xf32, #tpu.memory_space<vmem>>, %arg5: memref<32x128xf32, #tpu.memory_space<vmem>>) attributes {dimension_semantics = [#tpu.dimension_semantics<parallel>], iteration_bounds = array<i64: 1>, scalar_prefetch = 0 : i64, scratch_operands = 0 : i64, tpu.core_type = #tpu.core_type<tc>, window_params = [{transform_indices = @transform_0, window_bounds = array<i64: 32, 128>}, {pipeline_mode = #tpu.pipeline_mode<synchronous>, transform_indices = @transform_1, window_bounds = array<i64: 128, 128>}, {pipeline_mode = #tpu.pipeline_mode<synchronous>, transform_indices = @transform_2, window_bounds = array<i64: 1, 128>}, {pipeline_mode = #tpu.pipeline_mode<synchronous>, transform_indices = @transform_3, window_bounds = array<i64: 1, 128>}, {transform_indices = @transform_4, window_bounds = array<i64: 32, 128>}]} {
    %c0 = arith.constant 0 : index
    %c0_0 = arith.constant 0 : index
    %0 = vector.load %arg1[%c0, %c0_0] : memref<32x128xf32, #tpu.memory_space<vmem>>, vector<32x128xf32>
    %1 = arith.truncf %0 : vector<32x128xf32> to vector<32x128xbf16>
    %c0_1 = arith.constant 0 : index
    %c0_2 = arith.constant 0 : index
    %2 = vector.load %arg2[%c0_1, %c0_2] : memref<128x128xbf16, #tpu.memory_space<vmem>>, vector<128x128xbf16>
    %cst = arith.constant dense<0.000000e+00> : vector<32x128xf32>
    %3 = tpu.matmul %1, %2, %cst {dimension_numbers = #tpu.dot_dimension_numbers<[1], [0], [0], [1], [0, 0, 1, 1], [], []>} : vector<32x128xbf16>, vector<128x128xbf16>, vector<32x128xf32> -> vector<32x128xf32>
    %c0_3 = arith.constant 0 : index
    %c0_4 = arith.constant 0 : index
    %4 = vector.load %arg3[%c0_3, %c0_4] : memref<1x128xf32, #tpu.memory_space<vmem>>, vector<1x128xf32>
    %5 = vector.broadcast %4 : vector<1x128xf32> to vector<32x128xf32>
    %6 = arith.mulf %3, %5 : vector<32x128xf32>
    %c0_5 = arith.constant 0 : index
    %c0_6 = arith.constant 0 : index
    %7 = vector.load %arg4[%c0_5, %c0_6] : memref<1x128xf32, #tpu.memory_space<vmem>>, vector<1x128xf32>
    %8 = vector.broadcast %7 : vector<1x128xf32> to vector<32x128xf32>
    %9 = arith.addf %6, %8 : vector<32x128xf32>
    %c0_7 = arith.constant 0 : index
    %c0_8 = arith.constant 0 : index
    %10 = vector.load %arg5[%c0_7, %c0_8] : memref<32x128xf32, #tpu.memory_space<vmem>>, vector<32x128xf32>
    tpu.vector_store %arg5[%c0_7, %c0_8], %9 {strides = array<i32>} : memref<32x128xf32, #tpu.memory_space<vmem>>, vector<32x128xf32>,
    return
  }
  func.func @transform_0(%arg0: i32) -> (i32, i32) {
    %c0_i32 = arith.constant 0 : i32
    %c0_i32_0 = arith.constant 0 : i32
    return %arg0, %c0_i32 : i32, i32
  }
  func.func @transform_1(%arg0: i32) -> (i32, i32) {
    %c0_i32 = arith.constant 0 : i32
    %c0_i32_0 = arith.constant 0 : i32
    %c0_i32_1 = arith.constant 0 : i32
    return %c0_i32, %c0_i32_0 : i32, i32
  }
  func.func @transform_2(%arg0: i32) -> (i32, i32) {
    %c0_i32 = arith.constant 0 : i32
    %c0_i32_0 = arith.constant 0 : i32
    %c0_i32_1 = arith.constant 0 : i32
    return %c0_i32, %c0_i32_0 : i32, i32
  }
  func.func @transform_3(%arg0: i32) -> (i32, i32) {
    %c0_i32 = arith.constant 0 : i32
    %c0_i32_0 = arith.constant 0 : i32
    %c0_i32_1 = arith.constant 0 : i32
    return %c0_i32, %c0_i32_0 : i32, i32
  }
  func.func @transform_4(%arg0: i32) -> (i32, i32) {
    %c0_i32 = arith.constant 0 : i32
    %c0_i32_0 = arith.constant 0 : i32
    return %arg0, %c0_i32 : i32, i32
  }
}

</mosaic_0001>

<llo_original>
// kernel: mobilenetv3_forward.10
$region0: #{mobilenetv3_forward.10}
  #allocation0 [shape = 'u32[]', space=smem, size = 0x4, offset = 0x4, fixed_abs, tag = 'smem constant byte address 0x4 - core index']
  #allocation1 [shape = 'u32[72,128]{1,0:T(1,128)}', space=vmem, size = 0x9000, scoped, tag = 'internal scratch']
  %s0 = inlined_call_operand.vmem [shape: f32[128,128], index: 0, kind: input, shape index: {}]
  %s1 = inlined_call_operand.vmem [shape: bf16[128,128], index: 1, kind: input, shape index: {}]
  %s2 = inlined_call_operand.vmem [shape: f32[1,128], index: 2, kind: input, shape index: {}]
  %s3 = inlined_call_operand.vmem [shape: f32[1,128], index: 3, kind: input, shape index: {}]
  %s4 = inlined_call_operand.vmem [shape: f32[128,128], index: 4, kind: output, shape index: {}]
  %s5 = sld [smem:[#allocation0]]
  $region26: #{mobilenetv3_forward.10} parent=0
    _
  %s7 = ssub.s32 1, %s5
  %s8 = scalar_select 0, %s7, %s5
  // Predicated region
  $region2: #{mobilenetv3_forward.10} parent=0 // pred_check
    _
  $region3: #{mobilenetv3_forward.10} parent=0 // pred_check_branch
    %10 = sbr.rel (0) target = $region5
  $region4: #{mobilenetv3_forward.10} parent=0 // pred_region
    _
  $region5: #{mobilenetv3_forward.10} parent=0 // pred_fallthru
    _
  // Predicated region
  $region6: #{mobilenetv3_forward.10} parent=0 // pred_check
    _
  $region7: #{mobilenetv3_forward.10} parent=0 // pred_check_branch
    %12 = sbr.rel (0) target = $region9
  $region8: #{mobilenetv3_forward.10} parent=0 // pred_region
    _
  $region9: #{mobilenetv3_forward.10} parent=0 // pred_fallthru
    _
  // Predicated region
  $region10: #{mobilenetv3_forward.10} parent=0 // pred_check
    _
  $region11: #{mobilenetv3_forward.10} parent=0 // pred_check_branch
    %14 = sbr.rel (0) target = $region13
  $region12: #{mobilenetv3_forward.10} parent=0 // pred_region
    _
  $region13: #{mobilenetv3_forward.10} parent=0 // pred_fallthru
    _
  // Predicated region
  $region14: #{mobilenetv3_forward.10} parent=0 // pred_check
    _
  $region15: #{mobilenetv3_forward.10} parent=0 // pred_check_branch
    %16 = sbr.rel (0) target = $region17
  $region16: #{mobilenetv3_forward.10} parent=0 // pred_region
    _
  $region17: #{mobilenetv3_forward.10} parent=0 // pred_fallthru
    _
  %v17 = vld [vmem:[%s0] sm:$0xff]
  %v18 = vld [vmem:[%s0 + $0x8] sm:$0xff]
  %v19 = vld [vmem:[%s0 + $0x10] sm:$0xff]
  %v20 = vld [vmem:[%s0 + $0x18] sm:$0xff]
  %v21 = vld [vmem:[%s0 + $0x20] sm:$0xff]
  %v22 = vld [vmem:[%s0 + $0x28] sm:$0xff]
  %v23 = vld [vmem:[%s0 + $0x30] sm:$0xff]
  %v24 = vld [vmem:[%s0 + $0x38] sm:$0xff]
  %v25 = vld [vmem:[%s0 + $0x40] sm:$0xff]
  %v26 = vld [vmem:[%s0 + $0x48] sm:$0xff]
  %v27 = vld [vmem:[%s0 + $0x50] sm:$0xff]
  %v28 = vld [vmem:[%s0 + $0x58] sm:$0xff]
  %v29 = vld [vmem:[%s0 + $0x60] sm:$0xff]
  %v30 = vld [vmem:[%s0 + $0x68] sm:$0xff]
  %v31 = vld [vmem:[%s0 + $0x70] sm:$0xff]
  %v32 = vld [vmem:[%s0 + $0x78] sm:$0xff]
  %v33 = vpack.c.bf16 %v18, %v17
  %v34 = vpack.c.bf16 %v20, %v19
  %v35 = vpack.c.bf16 %v22, %v21
  %v36 = vpack.c.bf16 %v24, %v23
  %v37 = vpack.c.bf16 %v26, %v25
  %v38 = vpack.c.bf16 %v28, %v27
  %v39 = vpack.c.bf16 %v30, %v29
  %v40 = vpack.c.bf16 %v32, %v31
  %v41 = vld [vmem:[%s1] sm:$0xf]
  %v42 = vld [vmem:[%s1 + $0x4] sm:$0xf]
  %v43 = vld [vmem:[%s1 + $0x8] sm:$0xf]
  %v44 = vld [vmem:[%s1 + $0xc] sm:$0xf]
  %v45 = vld [vmem:[%s1 + $0x10] sm:$0xf]
  %v46 = vld [vmem:[%s1 + $0x14] sm:$0xf]
  %v47 = vld [vmem:[%s1 + $0x18] sm:$0xf]
  %v48 = vld [vmem:[%s1 + $0x1c] sm:$0xf]
  %v49 = vld [vmem:[%s1 + $0x20] sm:$0xf]
  %v50 = vld [vmem:[%s1 + $0x24] sm:$0xf]
  %v51 = vld [vmem:[%s1 + $0x28] sm:$0xf]
  %v52 = vld [vmem:[%s1 + $0x2c] sm:$0xf]
  %v53 = vld [vmem:[%s1 + $0x30] sm:$0xf]
  %v54 = vld [vmem:[%s1 + $0x34] sm:$0xf]
  %v55 = vld [vmem:[%s1 + $0x38] sm:$0xf]
  %v56 = vld [vmem:[%s1 + $0x3c] sm:$0xf]
  %v73 = vunpack.c.l.b16 %v41
  %v74 = vunpack.c.l.b16 %v42
  %v75 = vunpack.c.l.b16 %v43
  %v76 = vunpack.c.l.b16 %v44
  %v77 = vunpack.c.l.b16 %v45
  %v78 = vunpack.c.l.b16 %v46
  %v79 = vunpack.c.l.b16 %v47
  %v80 = vunpack.c.l.b16 %v48
  %v81 = vunpack.c.l.b16 %v49
  %v82 = vunpack.c.l.b16 %v50
  %v83 = vunpack.c.l.b16 %v51
  %v84 = vunpack.c.l.b16 %v52
  %v85 = vunpack.c.l.b16 %v53
  %v86 = vunpack.c.l.b16 %v54
  %v87 = vunpack.c.l.b16 %v55
  %v88 = vunpack.c.l.b16 %v56
  %v89 = vpack.c.b16 %v74, %v73
  %v90 = vpack.c.b16 %v76, %v75
  %v91 = vpack.c.b16 %v78, %v77
  %v92 = vpack.c.b16 %v80, %v79
  %v93 = vpack.c.b16 %v82, %v81
  %v94 = vpack.c.b16 %v84, %v83
  %v95 = vpack.c.b16 %v86, %v85
  %v96 = vpack.c.b16 %v88, %v87
  %105 = vmatpush.bf16.msra.mxu0 %v96
  %106 = vmatpush.bf16.msra.mxu0 %v95
  %107 = vmatpush.bf16.msra.mxu0 %v94
  %108 = vmatpush.bf16.msra.mxu0 %v93
  %109 = vmatpush.bf16.msra.mxu0 %v92
  %110 = vmatpush.bf16.msra.mxu0 %v91
  %111 = vmatpush.bf16.msra.mxu0 %v90
  %112 = vmatpush.bf16.msra.mxu0 %v89
  %113 = vmatmul.bf16.gmra.mxu0 %v33
  %v114 = vpop.f32.mrf.mxu0
  %v115 = vadd.f32 0.0, %v114
  %v116 = vpop.f32.mrf.mxu0
  %v117 = vadd.f32 0.0, %v116
  %118 = vmatmul.bf16.gmra.mxu0 %v34
  %v119 = vpop.f32.mrf.mxu0
  %v120 = vadd.f32 0.0, %v119
  %v121 = vpop.f32.mrf.mxu0
  %v122 = vadd.f32 0.0, %v121
  %123 = vmatmul.bf16.gmra.mxu0 %v35
  %v124 = vpop.f32.mrf.mxu0
  %v125 = vadd.f32 0.0, %v124
  %v126 = vpop.f32.mrf.mxu0
  %v127 = vadd.f32 0.0, %v126
  %128 = vmatmul.bf16.gmra.mxu0 %v36
  %v129 = vpop.f32.mrf.mxu0
  %v130 = vadd.f32 0.0, %v129
  %v131 = vpop.f32.mrf.mxu0
  %v132 = vadd.f32 0.0, %v131
  %133 = vmatmul.bf16.gmra.mxu0 %v37
  %v134 = vpop.f32.mrf.mxu0
  %v135 = vadd.f32 0.0, %v134
  %v136 = vpop.f32.mrf.mxu0
  %v137 = vadd.f32 0.0, %v136
  %138 = vmatmul.bf16.gmra.mxu0 %v38
  %v139 = vpop.f32.mrf.mxu0
  %v140 = vadd.f32 0.0, %v139
  %v141 = vpop.f32.mrf.mxu0
  %v142 = vadd.f32 0.0, %v141
  %143 = vmatmul.bf16.gmra.mxu0 %v39
  %v144 = vpop.f32.mrf.mxu0
  %v145 = vadd.f32 0.0, %v144
  %v146 = vpop.f32.mrf.mxu0
  %v147 = vadd.f32 0.0, %v146
  %148 = vmatmul.bf16.gmra.mxu0 %v40
  %v149 = vpop.f32.mrf.mxu0
  %v150 = vadd.f32 0.0, %v149
  %v151 = vpop.f32.mrf.mxu0
  %v152 = vadd.f32 0.0, %v151
  %153 = vdwg.mxu0
  %v154 = vld [vmem:[%s2] sm:$0x1]
  %v156 = vperm.slane %v154, 0
  %v158 = vmul.f32 %v115, %v156
  %v159 = vmul.f32 %v117, %v156
  %v160 = vmul.f32 %v120, %v156
  %v161 = vmul.f32 %v122, %v156
  %v162 = vmul.f32 %v125, %v156
  %v163 = vmul.f32 %v127, %v156
  %v164 = vmul.f32 %v130, %v156
  %v165 = vmul.f32 %v132, %v156
  %v166 = vmul.f32 %v135, %v156
  %v167 = vmul.f32 %v137, %v156
  %v168 = vmul.f32 %v140, %v156
  %v169 = vmul.f32 %v142, %v156
  %v170 = vmul.f32 %v145, %v156
  %v171 = vmul.f32 %v147, %v156
  %v172 = vmul.f32 %v150, %v156
  %v173 = vmul.f32 %v152, %v156
  %v174 = vld [vmem:[%s3] sm:$0x1]
  %v176 = vperm.slane %v174, 0
  %v178 = vadd.f32 %v158, %v176
  %v179 = vadd.f32 %v159, %v176
  %v180 = vadd.f32 %v160, %v176
  %v181 = vadd.f32 %v161, %v176
  %v182 = vadd.f32 %v162, %v176
  %v183 = vadd.f32 %v163, %v176
  %v184 = vadd.f32 %v164, %v176
  %v185 = vadd.f32 %v165, %v176
  %v186 = vadd.f32 %v166, %v176
  %v187 = vadd.f32 %v167, %v176
  %v188 = vadd.f32 %v168, %v176
  %v189 = vadd.f32 %v169, %v176
  %v190 = vadd.f32 %v170, %v176
  %v191 = vadd.f32 %v171, %v176
  %v192 = vadd.f32 %v172, %v176
  %v193 = vadd.f32 %v173, %v176
  %v194 = vmax.f32 %v178, 0.0
  %v195 = vmax.f32 %v179, 0.0
  %v196 = vmax.f32 %v180, 0.0
  %v197 = vmax.f32 %v181, 0.0
  %v198 = vmax.f32 %v182, 0.0
  %v199 = vmax.f32 %v183, 0.0
  %v200 = vmax.f32 %v184, 0.0
  %v201 = vmax.f32 %v185, 0.0
  %v202 = vmax.f32 %v186, 0.0
  %v203 = vmax.f32 %v187, 0.0
  %v204 = vmax.f32 %v188, 0.0
  %v205 = vmax.f32 %v189, 0.0
  %v206 = vmax.f32 %v190, 0.0
  %v207 = vmax.f32 %v191, 0.0
  %v208 = vmax.f32 %v192, 0.0
  %v209 = vmax.f32 %v193, 0.0
  %210 = vst [vmem:[%s4] sm:$0xff] %v194
  %211 = vst [vmem:[%s4 + $0x8] sm:$0xff] %v195
  %212 = vst [vmem:[%s4 + $0x10] sm:$0xff] %v196
  %213 = vst [vmem:[%s4 + $0x18] sm:$0xff] %v197
  %214 = vst [vmem:[%s4 + $0x20] sm:$0xff] %v198
  %215 = vst [vmem:[%s4 + $0x28] sm:$0xff] %v199
  %216 = vst [vmem:[%s4 + $0x30] sm:$0xff] %v200
  %217 = vst [vmem:[%s4 + $0x38] sm:$0xff] %v201
  %218 = vst [vmem:[%s4 + $0x40] sm:$0xff] %v202
  %219 = vst [vmem:[%s4 + $0x48] sm:$0xff] %v203
  %220 = vst [vmem:[%s4 + $0x50] sm:$0xff] %v204
  %221 = vst [vmem:[%s4 + $0x58] sm:$0xff] %v205
  %222 = vst [vmem:[%s4 + $0x60] sm:$0xff] %v206
  %223 = vst [vmem:[%s4 + $0x68] sm:$0xff] %v207
  %224 = vst [vmem:[%s4 + $0x70] sm:$0xff] %v208
  %225 = vst [vmem:[%s4 + $0x78] sm:$0xff] %v209
  // Predicated region
  $region18: #{mobilenetv3_forward.10} parent=0 // pred_check
    _
  $region19: #{mobilenetv3_forward.10} parent=0 // pred_check_branch
    %227 = sbr.rel (0) target = $region21
  $region20: #{mobilenetv3_forward.10} parent=0 // pred_region
    _
  $region21: #{mobilenetv3_forward.10} parent=0 // pred_fallthru
    _
  // Predicated region
  $region22: #{mobilenetv3_forward.10} parent=0 // pred_check
    _
  $region23: #{mobilenetv3_forward.10} parent=0 // pred_check_branch
    %229 = sbr.rel (0) target = $region25
  $region24: #{mobilenetv3_forward.10} parent=0 // pred_region
    _
  $region25: #{mobilenetv3_forward.10} parent=0 // pred_fallthru
    _

// kernel: mobilenetv3_forward.9
$region0: #{mobilenetv3_forward.9}
  #allocation0 [shape = 'u32[]', space=smem, size = 0x4, offset = 0x4, fixed_abs, tag = 'smem constant byte address 0x4 - core index']
  #allocation1 [shape = 'u32[72,128]{1,0:T(1,128)}', space=vmem, size = 0x9000, scoped, tag = 'internal scratch']
  %s0 = inlined_call_operand.vmem [shape: f32[128,128], index: 0, kind: input, shape index: {}]
  %s1 = inlined_call_operand.vmem [shape: bf16[128,128], index: 1, kind: input, shape index: {}]
  %s2 = inlined_call_operand.vmem [shape: f32[1,128], index: 2, kind: input, shape index: {}]
  %s3 = inlined_call_operand.vmem [shape: f32[1,128], index: 3, kind: input, shape index: {}]
  %s4 = inlined_call_operand.vmem [shape: f32[128,128], index: 4, kind: output, shape index: {}]
  %s5 = sld [smem:[#allocation0]]
  $region26: #{mobilenetv3_forward.9} parent=0
    _
  %s7 = ssub.s32 1, %s5
  %s8 = scalar_select 0, %s7, %s5
  // Predicated region
  $region2: #{mobilenetv3_forward.9} parent=0 // pred_check
    _
  $region3: #{mobilenetv3_forward.9} parent=0 // pred_check_branch
    %10 = sbr.rel (0) target = $region5
  $region4: #{mobilenetv3_forward.9} parent=0 // pred_region
    _
  $region5: #{mobilenetv3_forward.9} parent=0 // pred_fallthru
    _
  // Predicated region
  $region6: #{mobilenetv3_forward.9} parent=0 // pred_check
    _
  $region7: #{mobilenetv3_forward.9} parent=0 // pred_check_branch
    %12 = sbr.rel (0) target = $region9
  $region8: #{mobilenetv3_forward.9} parent=0 // pred_region
    _
  $region9: #{mobilenetv3_forward.9} parent=0 // pred_fallthru
    _
  // Predicated region
  $region10: #{mobilenetv3_forward.9} parent=0 // pred_check
    _
  $region11: #{mobilenetv3_forward.9} parent=0 // pred_check_branch
    %14 = sbr.rel (0) target = $region13
  $region12: #{mobilenetv3_forward.9} parent=0 // pred_region
    _
  $region13: #{mobilenetv3_forward.9} parent=0 // pred_fallthru
    _
  // Predicated region
  $region14: #{mobilenetv3_forward.9} parent=0 // pred_check
    _
  $region15: #{mobilenetv3_forward.9} parent=0 // pred_check_branch
    %16 = sbr.rel (0) target = $region17
  $region16: #{mobilenetv3_forward.9} parent=0 // pred_region
    _
  $region17: #{mobilenetv3_forward.9} parent=0 // pred_fallthru
    _
  %v17 = vld [vmem:[%s0] sm:$0xff]
  %v18 = vld [vmem:[%s0 + $0x8] sm:$0xff]
  %v19 = vld [vmem:[%s0 + $0x10] sm:$0xff]
  %v20 = vld [vmem:[%s0 + $0x18] sm:$0xff]
  %v21 = vld [vmem:[%s0 + $0x20] sm:$0xff]
  %v22 = vld [vmem:[%s0 + $0x28] sm:$0xff]
  %v23 = vld [vmem:[%s0 + $0x30] sm:$0xff]
  %v24 = vld [vmem:[%s0 + $0x38] sm:$0xff]
  %v25 = vld [vmem:[%s0 + $0x40] sm:$0xff]
  %v26 = vld [vmem:[%s0 + $0x48] sm:$0xff]
  %v27 = vld [vmem:[%s0 + $0x50] sm:$0xff]
  %v28 = vld [vmem:[%s0 + $0x58] sm:$0xff]
  %v29 = vld [vmem:[%s0 + $0x60] sm:$0xff]
  %v30 = vld [vmem:[%s0 + $0x68] sm:$0xff]
  %v31 = vld [vmem:[%s0 + $0x70] sm:$0xff]
  %v32 = vld [vmem:[%s0 + $0x78] sm:$0xff]
  %v33 = vpack.c.bf16 %v18, %v17
  %v34 = vpack.c.bf16 %v20, %v19
  %v35 = vpack.c.bf16 %v22, %v21
  %v36 = vpack.c.bf16 %v24, %v23
  %v37 = vpack.c.bf16 %v26, %v25
  %v38 = vpack.c.bf16 %v28, %v27
  %v39 = vpack.c.bf16 %v30, %v29
  %v40 = vpack.c.bf16 %v32, %v31
  %v41 = vld [vmem:[%s1] sm:$0xf]
  %v42 = vld [vmem:[%s1 + $0x4] sm:$0xf]
  %v43 = vld [vmem:[%s1 + $0x8] sm:$0xf]
  %v44 = vld [vmem:[%s1 + $0xc] sm:$0xf]
  %v45 = vld [vmem:[%s1 + $0x10] sm:$0xf]
  %v46 = vld [vmem:[%s1 + $0x14] sm:$0xf]
  %v47 = vld [vmem:[%s1 + $0x18] sm:$0xf]
  %v48 = vld [vmem:[%s1 + $0x1c] sm:$0xf]
  %v49 = vld [vmem:[%s1 + $0x20] sm:$0xf]
  %v50 = vld [vmem:[%s1 + $0x24] sm:$0xf]
  %v51 = vld [vmem:[%s1 + $0x28] sm:$0xf]
  %v52 = vld [vmem:[%s1 + $0x2c] sm:$0xf]
  %v53 = vld [vmem:[%s1 + $0x30] sm:$0xf]
  %v54 = vld [vmem:[%s1 + $0x34] sm:$0xf]
  %v55 = vld [vmem:[%s1 + $0x38] sm:$0xf]
  %v56 = vld [vmem:[%s1 + $0x3c] sm:$0xf]
  %v73 = vunpack.c.l.b16 %v41
  %v74 = vunpack.c.l.b16 %v42
  %v75 = vunpack.c.l.b16 %v43
  %v76 = vunpack.c.l.b16 %v44
  %v77 = vunpack.c.l.b16 %v45
  %v78 = vunpack.c.l.b16 %v46
  %v79 = vunpack.c.l.b16 %v47
  %v80 = vunpack.c.l.b16 %v48
  %v81 = vunpack.c.l.b16 %v49
  %v82 = vunpack.c.l.b16 %v50
  %v83 = vunpack.c.l.b16 %v51
  %v84 = vunpack.c.l.b16 %v52
  %v85 = vunpack.c.l.b16 %v53
  %v86 = vunpack.c.l.b16 %v54
  %v87 = vunpack.c.l.b16 %v55
  %v88 = vunpack.c.l.b16 %v56
  %v89 = vpack.c.b16 %v74, %v73
  %v90 = vpack.c.b16 %v76, %v75
  %v91 = vpack.c.b16 %v78, %v77
  %v92 = vpack.c.b16 %v80, %v79
  %v93 = vpack.c.b16 %v82, %v81
  %v94 = vpack.c.b16 %v84, %v83
  %v95 = vpack.c.b16 %v86, %v85
  %v96 = vpack.c.b16 %v88, %v87
  %105 = vmatpush.bf16.msra.mxu0 %v96
  %106 = vmatpush.bf16.msra.mxu0 %v95
  %107 = vmatpush.bf16.msra.mxu0 %v94
  %108 = vmatpush.bf16.msra.mxu0 %v93
  %109 = vmatpush.bf16.msra.mxu0 %v92
  %110 = vmatpush.bf16.msra.mxu0 %v91
  %111 = vmatpush.bf16.msra.mxu0 %v90
  %112 = vmatpush.bf16.msra.mxu0 %v89
  %113 = vmatmul.bf16.gmra.mxu0 %v33
  %v114 = vpop.f32.mrf.mxu0
  %v115 = vadd.f32 0.0, %v114
  %v116 = vpop.f32.mrf.mxu0
  %v117 = vadd.f32 0.0, %v116
  %118 = vmatmul.bf16.gmra.mxu0 %v34
  %v119 = vpop.f32.mrf.mxu0
  %v120 = vadd.f32 0.0, %v119
  %v121 = vpop.f32.mrf.mxu0
  %v122 = vadd.f32 0.0, %v121
  %123 = vmatmul.bf16.gmra.mxu0 %v35
  %v124 = vpop.f32.mrf.mxu0
  %v125 = vadd.f32 0.0, %v124
  %v126 = vpop.f32.mrf.mxu0
  %v127 = vadd.f32 0.0, %v126
  %128 = vmatmul.bf16.gmra.mxu0 %v36
  %v129 = vpop.f32.mrf.mxu0
  %v130 = vadd.f32 0.0, %v129
  %v131 = vpop.f32.mrf.mxu0
  %v132 = vadd.f32 0.0, %v131
  %133 = vmatmul.bf16.gmra.mxu0 %v37
  %v134 = vpop.f32.mrf.mxu0
  %v135 = vadd.f32 0.0, %v134
  %v136 = vpop.f32.mrf.mxu0
  %v137 = vadd.f32 0.0, %v136
  %138 = vmatmul.bf16.gmra.mxu0 %v38
  %v139 = vpop.f32.mrf.mxu0
  %v140 = vadd.f32 0.0, %v139
  %v141 = vpop.f32.mrf.mxu0
  %v142 = vadd.f32 0.0, %v141
  %143 = vmatmul.bf16.gmra.mxu0 %v39
  %v144 = vpop.f32.mrf.mxu0
  %v145 = vadd.f32 0.0, %v144
  %v146 = vpop.f32.mrf.mxu0
  %v147 = vadd.f32 0.0, %v146
  %148 = vmatmul.bf16.gmra.mxu0 %v40
  %v149 = vpop.f32.mrf.mxu0
  %v150 = vadd.f32 0.0, %v149
  %v151 = vpop.f32.mrf.mxu0
  %v152 = vadd.f32 0.0, %v151
  %153 = vdwg.mxu0
  %v154 = vld [vmem:[%s2] sm:$0x1]
  %v156 = vperm.slane %v154, 0
  %v158 = vmul.f32 %v115, %v156
  %v159 = vmul.f32 %v117, %v156
  %v160 = vmul.f32 %v120, %v156
  %v161 = vmul.f32 %v122, %v156
  %v162 = vmul.f32 %v125, %v156
  %v163 = vmul.f32 %v127, %v156
  %v164 = vmul.f32 %v130, %v156
  %v165 = vmul.f32 %v132, %v156
  %v166 = vmul.f32 %v135, %v156
  %v167 = vmul.f32 %v137, %v156
  %v168 = vmul.f32 %v140, %v156
  %v169 = vmul.f32 %v142, %v156
  %v170 = vmul.f32 %v145, %v156
  %v171 = vmul.f32 %v147, %v156
  %v172 = vmul.f32 %v150, %v156
  %v173 = vmul.f32 %v152, %v156
  %v174 = vld [vmem:[%s3] sm:$0x1]
  %v176 = vperm.slane %v174, 0
  %v178 = vadd.f32 %v158, %v176
  %v179 = vadd.f32 %v159, %v176
  %v180 = vadd.f32 %v160, %v176
  %v181 = vadd.f32 %v161, %v176
  %v182 = vadd.f32 %v162, %v176
  %v183 = vadd.f32 %v163, %v176
  %v184 = vadd.f32 %v164, %v176
  %v185 = vadd.f32 %v165, %v176
  %v186 = vadd.f32 %v166, %v176
  %v187 = vadd.f32 %v167, %v176
  %v188 = vadd.f32 %v168, %v176
  %v189 = vadd.f32 %v169, %v176
  %v190 = vadd.f32 %v170, %v176
  %v191 = vadd.f32 %v171, %v176
  %v192 = vadd.f32 %v172, %v176
  %v193 = vadd.f32 %v173, %v176
  %v194 = vadd.f32 %v178, 3.0
  %v195 = vadd.f32 %v179, 3.0
  %v196 = vadd.f32 %v180, 3.0
  %v197 = vadd.f32 %v181, 3.0
  %v198 = vadd.f32 %v182, 3.0
  %v199 = vadd.f32 %v183, 3.0
  %v200 = vadd.f32 %v184, 3.0
  %v201 = vadd.f32 %v185, 3.0
  %v202 = vadd.f32 %v186, 3.0
  %v203 = vadd.f32 %v187, 3.0
  %v204 = vadd.f32 %v188, 3.0
  %v205 = vadd.f32 %v189, 3.0
  %v206 = vadd.f32 %v190, 3.0
  %v207 = vadd.f32 %v191, 3.0
  %v208 = vadd.f32 %v192, 3.0
  %v209 = vadd.f32 %v193, 3.0
  %v210 = vmax.f32 %v194, 0.0
  %v211 = vmax.f32 %v195, 0.0
  %v212 = vmax.f32 %v196, 0.0
  %v213 = vmax.f32 %v197, 0.0
  %v214 = vmax.f32 %v198, 0.0
  %v215 = vmax.f32 %v199, 0.0
  %v216 = vmax.f32 %v200, 0.0
  %v217 = vmax.f32 %v201, 0.0
  %v218 = vmax.f32 %v202, 0.0
  %v219 = vmax.f32 %v203, 0.0
  %v220 = vmax.f32 %v204, 0.0
  %v221 = vmax.f32 %v205, 0.0
  %v222 = vmax.f32 %v206, 0.0
  %v223 = vmax.f32 %v207, 0.0
  %v224 = vmax.f32 %v208, 0.0
  %v225 = vmax.f32 %v209, 0.0
  %v226 = vmin.f32 %v210, 6.0
  %v227 = vmin.f32 %v211, 6.0
  %v228 = vmin.f32 %v212, 6.0
  %v229 = vmin.f32 %v213, 6.0
  %v230 = vmin.f32 %v214, 6.0
  %v231 = vmin.f32 %v215, 6.0
  %v232 = vmin.f32 %v216, 6.0
  %v233 = vmin.f32 %v217, 6.0
  %v234 = vmin.f32 %v218, 6.0
  %v235 = vmin.f32 %v219, 6.0
  %v236 = vmin.f32 %v220, 6.0
  %v237 = vmin.f32 %v221, 6.0
  %v238 = vmin.f32 %v222, 6.0
  %v239 = vmin.f32 %v223, 6.0
  %v240 = vmin.f32 %v224, 6.0
  %v241 = vmin.f32 %v225, 6.0
  %v242 = vmul.f32 %v178, %v226
  %v243 = vmul.f32 %v179, %v227
  %v244 = vmul.f32 %v180, %v228
  %v245 = vmul.f32 %v181, %v229
  %v246 = vmul.f32 %v182, %v230
  %v247 = vmul.f32 %v183, %v231
  %v248 = vmul.f32 %v184, %v232
  %v249 = vmul.f32 %v185, %v233
  %v250 = vmul.f32 %v186, %v234
  %v251 = vmul.f32 %v187, %v235
  %v252 = vmul.f32 %v188, %v236
  %v253 = vmul.f32 %v189, %v237
  %v254 = vmul.f32 %v190, %v238
  %v255 = vmul.f32 %v191, %v239
  %v256 = vmul.f32 %v192, %v240
  %v257 = vmul.f32 %v193, %v241
  %v258 = vmul.f32 %v242, 0.16666667
  %v259 = vmul.f32 %v243, 0.16666667
  %v260 = vmul.f32 %v244, 0.16666667
  %v261 = vmul.f32 %v245, 0.16666667
  %v262 = vmul.f32 %v246, 0.16666667
  %v263 = vmul.f32 %v247, 0.16666667
  %v264 = vmul.f32 %v248, 0.16666667
  %v265 = vmul.f32 %v249, 0.16666667
  %v266 = vmul.f32 %v250, 0.16666667
  %v267 = vmul.f32 %v251, 0.16666667
  %v268 = vmul.f32 %v252, 0.16666667
  %v269 = vmul.f32 %v253, 0.16666667
  %v270 = vmul.f32 %v254, 0.16666667
  %v271 = vmul.f32 %v255, 0.16666667
  %v272 = vmul.f32 %v256, 0.16666667
  %v273 = vmul.f32 %v257, 0.16666667
  %274 = vst [vmem:[%s4] sm:$0xff] %v258
  %275 = vst [vmem:[%s4 + $0x8] sm:$0xff] %v259
  %276 = vst [vmem:[%s4 + $0x10] sm:$0xff] %v260
  %277 = vst [vmem:[%s4 + $0x18] sm:$0xff] %v261
  %278 = vst [vmem:[%s4 + $0x20] sm:$0xff] %v262
  %279 = vst [vmem:[%s4 + $0x28] sm:$0xff] %v263
  %280 = vst [vmem:[%s4 + $0x30] sm:$0xff] %v264
  %281 = vst [vmem:[%s4 + $0x38] sm:$0xff] %v265
  %282 = vst [vmem:[%s4 + $0x40] sm:$0xff] %v266
  %283 = vst [vmem:[%s4 + $0x48] sm:$0xff] %v267
  %284 = vst [vmem:[%s4 + $0x50] sm:$0xff] %v268
  %285 = vst [vmem:[%s4 + $0x58] sm:$0xff] %v269
  %286 = vst [vmem:[%s4 + $0x60] sm:$0xff] %v270
  %287 = vst [vmem:[%s4 + $0x68] sm:$0xff] %v271
  %288 = vst [vmem:[%s4 + $0x70] sm:$0xff] %v272
  %289 = vst [vmem:[%s4 + $0x78] sm:$0xff] %v273
  // Predicated region
  $region18: #{mobilenetv3_forward.9} parent=0 // pred_check
    _
  $region19: #{mobilenetv3_forward.9} parent=0 // pred_check_branch
    %291 = sbr.rel (0) target = $region21
  $region20: #{mobilenetv3_forward.9} parent=0 // pred_region
    _
  $region21: #{mobilenetv3_forward.9} parent=0 // pred_fallthru
    _
  // Predicated region
  $region22: #{mobilenetv3_forward.9} parent=0 // pred_check
    _
  $region23: #{mobilenetv3_forward.9} parent=0 // pred_check_branch
    %293 = sbr.rel (0) target = $region25
  $region24: #{mobilenetv3_forward.9} parent=0 // pred_region
    _
  $region25: #{mobilenetv3_forward.9} parent=0 // pred_fallthru
    _

// kernel: mobilenetv3_forward.11
$region0: #{mobilenetv3_forward.11}
  #allocation0 [shape = 'u32[]', space=smem, size = 0x4, offset = 0x4, fixed_abs, tag = 'smem constant byte address 0x4 - core index']
  #allocation1 [shape = 'u32[72,128]{1,0:T(1,128)}', space=vmem, size = 0x9000, scoped, tag = 'internal scratch']
  %s0 = inlined_call_operand.vmem [shape: f32[2,10,10,128], index: 0, kind: input, shape index: {}]
  %s1 = inlined_call_operand.vmem [shape: f32[9,128], index: 1, kind: input, shape index: {}]
  %s2 = inlined_call_operand.vmem [shape: f32[1,128], index: 2, kind: input, shape index: {}]
  %s3 = inlined_call_operand.vmem [shape: f32[1,128], index: 3, kind: input, shape index: {}]
  %s4 = inlined_call_operand.vmem [shape: f32[2,8,8,128], index: 4, kind: output, shape index: {}]
  %s5 = sld [smem:[#allocation0]]
  $region49: #{mobilenetv3_forward.11} parent=0
    _
  %s7 = ssub.s32 1, %s5
  %s8 = scalar_select 0, %s7, %s5
  loop: start=0, step=1, limit=4
  $region2: #{mobilenetv3_forward.11} parent=0 // loop_pre_header
    _
  $region3: #{mobilenetv3_forward.11} parent=0 // loop_header
    %s10 = sphi 0, %s14
    %p11 = scmp.ge.s32.totalorder %s10, 4
    %s20 = sphi 0, %s22
    %s23 = sphi 0, %s20
    %s24 = sphi 0, %s23
    %s40 = sphi 0, %s24
    %s44 = sphi 0, %s44
    %s46 = sphi 0, %s44
    %s47 = sphi 0, %s46
    %s61 = sphi 0, %s47
    %s65 = sphi 0, %s65
    %s67 = sphi 0, %s65
    %s68 = sphi 0, %s67
    %s82 = sphi 0, %s68
    %s86 = sphi 0, %s86
    %s88 = sphi 0, %s86
    %s89 = sphi 0, %s88
    %s103 = sphi 0, %s89
    %s109 = sphi 0, %s111
    %s112 = sphi 0, %s109
    %s113 = sphi 0, %s112
    %s129 = sphi 0, %s113
  $region4: #{mobilenetv3_forward.11} parent=0 // loop_header_branch
    %13 = sbr.rel (%p11) target = $region8
  $region5: #{mobilenetv3_forward.11} parent=0 // loop_body
    %s15 = ssub.s32 %s10, 1
    %s16 = ssub.s32 %s10, 2
    %s17 = sadd.s32 %s10, 1
    %s18 = ssub.s32 %s10, %s17
    %p19 = scmp.eq.s32.totalorder %s18, 0
    %s21 = sadd.s32 %s20, 1
    %s22 = scalar_select %p19, %s20, %s21
    %p25 = pneg %p19
    %p26 = scmp.eq.s32.totalorder %s10, 1
    %p27 = por %p25, %p26
    %p28 = scmp.ne.s32.totalorder %s20, %s23
    %p29 = scmp.eq.s32.totalorder %s10, 0
    %p30 = por %p28, %p29
    %p31 = scmp.ne.s32.totalorder %s20, %s23
    %p32 = scmp.eq.s32.totalorder %s15, 1
    %p33 = por %p31, %p32
    %p34 = scmp.ne.s32.totalorder %s23, %s24
    %p35 = scmp.eq.s32.totalorder %s15, 0
    %p36 = por %p34, %p35
    %p37 = scmp.ne.s32.totalorder %s23, %s24
    %p38 = scmp.eq.s32.totalorder %s16, 1
    %p39 = por %p37, %p38
    %p41 = scmp.ne.s32.totalorder %s24, %s40
    %p42 = scmp.eq.s32.totalorder %s16, 0
    %p43 = por %p41, %p42
    %s45 = sadd.s32 %s44, 1
    %p48 = scmp.eq.s32.totalorder %s10, 1
    %p49 = scmp.ne.s32.totalorder %s44, %s46
    %p50 = scmp.eq.s32.totalorder %s10, 0
    %p51 = por %p49, %p50
    %p52 = scmp.ne.s32.totalorder %s44, %s46
    %p53 = scmp.eq.s32.totalorder %s15, 1
    %p54 = por %p52, %p53
    %p55 = scmp.ne.s32.totalorder %s46, %s47
    %p56 = scmp.eq.s32.totalorder %s15, 0
    %p57 = por %p55, %p56
    %p58 = scmp.ne.s32.totalorder %s46, %s47
    %p59 = scmp.eq.s32.totalorder %s16, 1
    %p60 = por %p58, %p59
    %p62 = scmp.ne.s32.totalorder %s47, %s61
    %p63 = scmp.eq.s32.totalorder %s16, 0
    %p64 = por %p62, %p63
    %s66 = sadd.s32 %s65, 1
    %p69 = scmp.eq.s32.totalorder %s10, 1
    %p70 = scmp.ne.s32.totalorder %s65, %s67
    %p71 = scmp.eq.s32.totalorder %s10, 0
    %p72 = por %p70, %p71
    %p73 = scmp.ne.s32.totalorder %s65, %s67
    %p74 = scmp.eq.s32.totalorder %s15, 1
    %p75 = por %p73, %p74
    %p76 = scmp.ne.s32.totalorder %s67, %s68
    %p77 = scmp.eq.s32.totalorder %s15, 0
    %p78 = por %p76, %p77
    %p79 = scmp.ne.s32.totalorder %s67, %s68
    %p80 = scmp.eq.s32.totalorder %s16, 1
    %p81 = por %p79, %p80
    %p83 = scmp.ne.s32.totalorder %s68, %s82
    %p84 = scmp.eq.s32.totalorder %s16, 0
    %p85 = por %p83, %p84
    %s87 = sadd.s32 %s86, 1
    %p90 = scmp.eq.s32.totalorder %s10, 1
    %p91 = scmp.ne.s32.totalorder %s86, %s88
    %p92 = scmp.eq.s32.totalorder %s10, 0
    %p93 = por %p91, %p92
    %p94 = scmp.ne.s32.totalorder %s86, %s88
    %p95 = scmp.eq.s32.totalorder %s15, 1
    %p96 = por %p94, %p95
    %p97 = scmp.ne.s32.totalorder %s88, %s89
    %p98 = scmp.eq.s32.totalorder %s15, 0
    %p99 = por %p97, %p98
    %p100 = scmp.ne.s32.totalorder %s88, %s89
    %p101 = scmp.eq.s32.totalorder %s16, 1
    %p102 = por %p100, %p101
    %p104 = scmp.ne.s32.totalorder %s89, %s103
    %p105 = scmp.eq.s32.totalorder %s16, 0
    %p106 = por %p104, %p105
    %s107 = ssub.s32 %s10, %s17
    %p108 = scmp.eq.s32.totalorder %s107, 0
    %s110 = sadd.s32 %s109, 1
    %s111 = scalar_select %p108, %s109, %s110
    %p114 = pneg %p108
    %p115 = scmp.eq.s32.totalorder %s10, 1
    %p116 = por %p114, %p115
    %p117 = scmp.ne.s32.totalorder %s109, %s112
    %p118 = scmp.eq.s32.totalorder %s10, 0
    %p119 = por %p117, %p118
    %p120 = scmp.ne.s32.totalorder %s109, %s112
    %p121 = scmp.eq.s32.totalorder %s15, 1
    %p122 = por %p120, %p121
    %p123 = scmp.ne.s32.totalorder %s112, %s113
    %p124 = scmp.eq.s32.totalorder %s15, 0
    %p125 = por %p123, %p124
    %p126 = scmp.ne.s32.totalorder %s112, %s113
    %p127 = scmp.eq.s32.totalorder %s16, 1
    %p128 = por %p126, %p127
    %p130 = scmp.ne.s32.totalorder %s113, %s129
    %p131 = scmp.eq.s32.totalorder %s16, 0
    %p132 = por %p130, %p131
    %p133 = scmp.le.s32.totalorder 1, %s10
    %p134 = scmp.lt.s32.totalorder %s10, 3
    %p135 = pnand %p133, %p134
    %p136 = pneg %p135
    // Predicated region
    $region9: #{mobilenetv3_forward.11} parent=5 // pred_check
      _
    $region10: #{mobilenetv3_forward.11} parent=5 // pred_check_branch
      %138 = sbr.rel (%p135) target = $region12
    $region11: #{mobilenetv3_forward.11} parent=5 // pred_region
      %s139 = ssub.s32 %s10, 1
      // Predicated region
      $region13: #{mobilenetv3_forward.11} parent=11 // pred_check
        %p140 = pneg %p57
      $region14: #{mobilenetv3_forward.11} parent=11 // pred_check_branch
        %142 = sbr.rel (%p140) target = $region16
      $region15: #{mobilenetv3_forward.11} parent=11 // pred_region
        _
      $region16: #{mobilenetv3_forward.11} parent=11 // pred_fallthru
        _
      // Predicated region
      $region17: #{mobilenetv3_forward.11} parent=11 // pred_check
        %p143 = pneg %p78
      $region18: #{mobilenetv3_forward.11} parent=11 // pred_check_branch
        %145 = sbr.rel (%p143) target = $region20
      $region19: #{mobilenetv3_forward.11} parent=11 // pred_region
        _
      $region20: #{mobilenetv3_forward.11} parent=11 // pred_fallthru
        _
      // Predicated region
      $region21: #{mobilenetv3_forward.11} parent=11 // pred_check
        %p146 = pneg %p99
      $region22: #{mobilenetv3_forward.11} parent=11 // pred_check_branch
        %148 = sbr.rel (%p146) target = $region24
      $region23: #{mobilenetv3_forward.11} parent=11 // pred_region
        _
      $region24: #{mobilenetv3_forward.11} parent=11 // pred_fallthru
        _
    $region12: #{mobilenetv3_forward.11} parent=5 // pred_fallthru
      _
    %p149 = scmp.lt.s32.totalorder %s10, 2
    // Predicated region
    $region25: #{mobilenetv3_forward.11} parent=5 // pred_check
      %p150 = pneg %p149
    $region26: #{mobilenetv3_forward.11} parent=5 // pred_check_branch
      %152 = sbr.rel (%p150) target = $region28
    $region27: #{mobilenetv3_forward.11} parent=5 // pred_region
      // Predicated region
      $region29: #{mobilenetv3_forward.11} parent=27 // pred_check
        %p153 = pneg %p30
      $region30: #{mobilenetv3_forward.11} parent=27 // pred_check_branch
        %155 = sbr.rel (%p153) target = $region32
      $region31: #{mobilenetv3_forward.11} parent=27 // pred_region
        %p156 = scmp.lt.s32.totalorder %s10, 1
        %s157 = scalar_select %p156, %s10, 1
        %s158 = smul.addr %s157, 20
        %s159 = smul.addr %s158, 8
        %s160 = scalar_lea.vmem %s0, %s159
      $region32: #{mobilenetv3_forward.11} parent=27 // pred_fallthru
        _
    $region28: #{mobilenetv3_forward.11} parent=5 // pred_fallthru
      _
    %p161 = scmp.le.s32.totalorder 1, %s10
    %p162 = scmp.lt.s32.totalorder %s10, 3
    %p163 = pnand %p161, %p162
    %p164 = pneg %p163
    // Predicated region
    $region33: #{mobilenetv3_forward.11} parent=5 // pred_check
      _
    $region34: #{mobilenetv3_forward.11} parent=5 // pred_check_branch
      %166 = sbr.rel (%p163) target = $region36
    $region35: #{mobilenetv3_forward.11} parent=5 // pred_region
      %s167 = ssub.s32 %s10, 1
      %p168 = scmp.lt.s32.totalorder %s15, 1
      %s169 = scalar_select %p168, %s15, 1
      %s170 = smul.addr %s169, 20
      %s171 = smul.addr %s170, 8
      %s172 = scalar_lea.vmem %s0, %s171
      %p173 = pneg %p36
      %p174 = pneg %p33
      %p175 = pneg %p57
      %p176 = pneg %p54
      %p177 = pneg %p78
      %p178 = pneg %p75
      %p179 = pneg %p99
      %p180 = pneg %p96
      %p181 = pneg %p125
      %p182 = pneg %p122
      %p183 = scmp.lt.s32.totalorder %s15, 1
      %s184 = scalar_select %p183, %s15, 1
      %s185 = smul.addr %s184, 8
      %s186 = smul.addr %s185, 8
      %s187 = scalar_lea.vmem %s4, %s186
      %p188 = scmp.lt.s32.totalorder %s15, 1
      %s189 = scalar_select %p188, %s15, 1
      %s190 = smul.addr %s189, 20
      %s191 = smul.addr %s190, 8
      %s192 = scalar_lea.vmem %s0, %s191
      %p193 = scmp.lt.s32.totalorder %s15, 1
      %s194 = scalar_select %p193, %s15, 1
      %s195 = smul.addr %s194, 8
      %s196 = smul.addr %s195, 8
      %s197 = scalar_lea.vmem %s4, %s196
      %v198 = vld [vmem:[%s1] sm:$0xff]
      %v199 = vld [vmem:[%s1 + $0x8] sm:$0x1]
      %v200 = vld [vmem:[%s192] sm:$0xff]
      %v201 = vld [vmem:[%s192 + $0x10] sm:$0xff]
      %v202 = vld [vmem:[%s192 + $0x20] sm:$0xff]
      %v203 = vld [vmem:[%s192 + $0x30] sm:$0xff]
      %v204 = vld [vmem:[%s192 + $0x40] sm:$0xff]
      %v205 = vld [vmem:[%s192 + $0x50] sm:$0xff]
      %v206 = vld [vmem:[%s192 + $0x60] sm:$0xff]
      %v207 = vld [vmem:[%s192 + $0x70] sm:$0xff]
      %v208 = vperm.slane %v198, 0
      %v209 = vmul.f32 %v200, %v208
      %v210 = vmul.f32 %v201, %v208
      %v211 = vmul.f32 %v202, %v208
      %v212 = vmul.f32 %v203, %v208
      %v213 = vmul.f32 %v204, %v208
      %v214 = vmul.f32 %v205, %v208
      %v215 = vmul.f32 %v206, %v208
      %v216 = vmul.f32 %v207, %v208
      %v217 = vadd.f32 %v209, 0.0
      %v218 = vadd.f32 %v210, 0.0
      %v219 = vadd.f32 %v211, 0.0
      %v220 = vadd.f32 %v212, 0.0
      %v221 = vadd.f32 %v213, 0.0
      %v222 = vadd.f32 %v214, 0.0
      %v223 = vadd.f32 %v215, 0.0
      %v224 = vadd.f32 %v216, 0.0
      %v225 = vld [vmem:[%s192 + $0x1] sm:$0xff]
      %v226 = vld [vmem:[%s192 + $0x11] sm:$0xff]
      %v227 = vld [vmem:[%s192 + $0x21] sm:$0xff]
      %v228 = vld [vmem:[%s192 + $0x31] sm:$0xff]
      %v229 = vld [vmem:[%s192 + $0x41] sm:$0xff]
      %v230 = vld [vmem:[%s192 + $0x51] sm:$0xff]
      %v231 = vld [vmem:[%s192 + $0x61] sm:$0xff]
      %v232 = vld [vmem:[%s192 + $0x71] sm:$0xff]
      %v233 = vperm.slane %v198, 1
      %v234 = vmul.f32 %v225, %v233
      %v235 = vmul.f32 %v226, %v233
      %v236 = vmul.f32 %v227, %v233
      %v237 = vmul.f32 %v228, %v233
      %v238 = vmul.f32 %v229, %v233
      %v239 = vmul.f32 %v230, %v233
      %v240 = vmul.f32 %v231, %v233
      %v241 = vmul.f32 %v232, %v233
      %v242 = vadd.f32 %v217, %v234
      %v243 = vadd.f32 %v218, %v235
      %v244 = vadd.f32 %v219, %v236
      %v245 = vadd.f32 %v220, %v237
      %v246 = vadd.f32 %v221, %v238
      %v247 = vadd.f32 %v222, %v239
      %v248 = vadd.f32 %v223, %v240
      %v249 = vadd.f32 %v224, %v241
      %v250 = vld [vmem:[%s192 + $0x2] sm:$0xff]
      %v251 = vld [vmem:[%s192 + $0x12] sm:$0xff]
      %v252 = vld [vmem:[%s192 + $0x22] sm:$0xff]
      %v253 = vld [vmem:[%s192 + $0x32] sm:$0xff]
      %v254 = vld [vmem:[%s192 + $0x42] sm:$0xff]
      %v255 = vld [vmem:[%s192 + $0x52] sm:$0xff]
      %v256 = vld [vmem:[%s192 + $0x62] sm:$0xff]
      %v257 = vld [vmem:[%s192 + $0x72] sm:$0xff]
      %v258 = vperm.slane %v198, 2
      %v259 = vmul.f32 %v250, %v258
      %v260 = vmul.f32 %v251, %v258
      %v261 = vmul.f32 %v252, %v258
      %v262 = vmul.f32 %v253, %v258
      %v263 = vmul.f32 %v254, %v258
      %v264 = vmul.f32 %v255, %v258
      %v265 = vmul.f32 %v256, %v258
      %v266 = vmul.f32 %v257, %v258
      %v267 = vadd.f32 %v242, %v259
      %v268 = vadd.f32 %v243, %v260
      %v269 = vadd.f32 %v244, %v261
      %v270 = vadd.f32 %v245, %v262
      %v271 = vadd.f32 %v246, %v263
      %v272 = vadd.f32 %v247, %v264
      %v273 = vadd.f32 %v248, %v265
      %v274 = vadd.f32 %v249, %v266
      %s275 = scalar_lea.vmem %s192, 16
      %v276 = vld [vmem:[%s275] sm:$0xff]
      %v277 = vld [vmem:[%s275 + $0x10] sm:$0xff]
      %v278 = vld [vmem:[%s275 + $0x20] sm:$0xff]
      %v279 = vld [vmem:[%s275 + $0x30] sm:$0xff]
      %v280 = vld [vmem:[%s275 + $0x40] sm:$0xff]
      %v281 = vld [vmem:[%s275 + $0x50] sm:$0xff]
      %v282 = vld [vmem:[%s275 + $0x60] sm:$0xff]
      %v283 = vld [vmem:[%s275 + $0x70] sm:$0xff]
      %v284 = vperm.slane %v198, 3
      %v285 = vmul.f32 %v276, %v284
      %v286 = vmul.f32 %v277, %v284
      %v287 = vmul.f32 %v278, %v284
      %v288 = vmul.f32 %v279, %v284
      %v289 = vmul.f32 %v280, %v284
      %v290 = vmul.f32 %v281, %v284
      %v291 = vmul.f32 %v282, %v284
      %v292 = vmul.f32 %v283, %v284
      %v293 = vadd.f32 %v267, %v285
      %v294 = vadd.f32 %v268, %v286
      %v295 = vadd.f32 %v269, %v287
      %v296 = vadd.f32 %v270, %v288
      %v297 = vadd.f32 %v271, %v289
      %v298 = vadd.f32 %v272, %v290
      %v299 = vadd.f32 %v273, %v291
      %v300 = vadd.f32 %v274, %v292
      %v301 = vld [vmem:[%s275 + $0x1] sm:$0xff]
      %v302 = vld [vmem:[%s275 + $0x11] sm:$0xff]
      %v303 = vld [vmem:[%s275 + $0x21] sm:$0xff]
      %v304 = vld [vmem:[%s275 + $0x31] sm:$0xff]
      %v305 = vld [vmem:[%s275 + $0x41] sm:$0xff]
      %v306 = vld [vmem:[%s275 + $0x51] sm:$0xff]
      %v307 = vld [vmem:[%s275 + $0x61] sm:$0xff]
      %v308 = vld [vmem:[%s275 + $0x71] sm:$0xff]
      %v309 = vperm.slane %v198, 4
      %v310 = vmul.f32 %v301, %v309
      %v311 = vmul.f32 %v302, %v309
      %v312 = vmul.f32 %v303, %v309
      %v313 = vmul.f32 %v304, %v309
      %v314 = vmul.f32 %v305, %v309
      %v315 = vmul.f32 %v306, %v309
      %v316 = vmul.f32 %v307, %v309
      %v317 = vmul.f32 %v308, %v309
      %v318 = vadd.f32 %v293, %v310
      %v319 = vadd.f32 %v294, %v311
      %v320 = vadd.f32 %v295, %v312
      %v321 = vadd.f32 %v296, %v313
      %v322 = vadd.f32 %v297, %v314
      %v323 = vadd.f32 %v298, %v315
      %v324 = vadd.f32 %v299, %v316
      %v325 = vadd.f32 %v300, %v317
      %v326 = vld [vmem:[%s275 + $0x2] sm:$0xff]
      %v327 = vld [vmem:[%s275 + $0x12] sm:$0xff]
      %v328 = vld [vmem:[%s275 + $0x22] sm:$0xff]
      %v329 = vld [vmem:[%s275 + $0x32] sm:$0xff]
      %v330 = vld [vmem:[%s275 + $0x42] sm:$0xff]
      %v331 = vld [vmem:[%s275 + $0x52] sm:$0xff]
      %v332 = vld [vmem:[%s275 + $0x62] sm:$0xff]
      %v333 = vld [vmem:[%s275 + $0x72] sm:$0xff]
      %v334 = vperm.slane %v198, 5
      %v335 = vmul.f32 %v326, %v334
      %v336 = vmul.f32 %v327, %v334
      %v337 = vmul.f32 %v328, %v334
      %v338 = vmul.f32 %v329, %v334
      %v339 = vmul.f32 %v330, %v334
      %v340 = vmul.f32 %v331, %v334
      %v341 = vmul.f32 %v332, %v334
      %v342 = vmul.f32 %v333, %v334
      %v343 = vadd.f32 %v318, %v335
      %v344 = vadd.f32 %v319, %v336
      %v345 = vadd.f32 %v320, %v337
      %v346 = vadd.f32 %v321, %v338
      %v347 = vadd.f32 %v322, %v339
      %v348 = vadd.f32 %v323, %v340
      %v349 = vadd.f32 %v324, %v341
      %v350 = vadd.f32 %v325, %v342
      %s351 = scalar_lea.vmem %s192, 32
      %v352 = vld [vmem:[%s351] sm:$0xff]
      %v353 = vld [vmem:[%s351 + $0x10] sm:$0xff]
      %v354 = vld [vmem:[%s351 + $0x20] sm:$0xff]
      %v355 = vld [vmem:[%s351 + $0x30] sm:$0xff]
      %v356 = vld [vmem:[%s351 + $0x40] sm:$0xff]
      %v357 = vld [vmem:[%s351 + $0x50] sm:$0xff]
      %v358 = vld [vmem:[%s351 + $0x60] sm:$0xff]
      %v359 = vld [vmem:[%s351 + $0x70] sm:$0xff]
      %v360 = vperm.slane %v198, 6
      %v361 = vmul.f32 %v352, %v360
      %v362 = vmul.f32 %v353, %v360
      %v363 = vmul.f32 %v354, %v360
      %v364 = vmul.f32 %v355, %v360
      %v365 = vmul.f32 %v356, %v360
      %v366 = vmul.f32 %v357, %v360
      %v367 = vmul.f32 %v358, %v360
      %v368 = vmul.f32 %v359, %v360
      %v369 = vadd.f32 %v343, %v361
      %v370 = vadd.f32 %v344, %v362
      %v371 = vadd.f32 %v345, %v363
      %v372 = vadd.f32 %v346, %v364
      %v373 = vadd.f32 %v347, %v365
      %v374 = vadd.f32 %v348, %v366
      %v375 = vadd.f32 %v349, %v367
      %v376 = vadd.f32 %v350, %v368
      %v377 = vld [vmem:[%s351 + $0x1] sm:$0xff]
      %v378 = vld [vmem:[%s351 + $0x11] sm:$0xff]
      %v379 = vld [vmem:[%s351 + $0x21] sm:$0xff]
      %v380 = vld [vmem:[%s351 + $0x31] sm:$0xff]
      %v381 = vld [vmem:[%s351 + $0x41] sm:$0xff]
      %v382 = vld [vmem:[%s351 + $0x51] sm:$0xff]
      %v383 = vld [vmem:[%s351 + $0x61] sm:$0xff]
      %v384 = vld [vmem:[%s351 + $0x71] sm:$0xff]
      %v385 = vperm.slane %v198, 7
      %v386 = vmul.f32 %v377, %v385
      %v387 = vmul.f32 %v378, %v385
      %v388 = vmul.f32 %v379, %v385
      %v389 = vmul.f32 %v380, %v385
      %v390 = vmul.f32 %v381, %v385
      %v391 = vmul.f32 %v382, %v385
      %v392 = vmul.f32 %v383, %v385
      %v393 = vmul.f32 %v384, %v385
      %v394 = vadd.f32 %v369, %v386
      %v395 = vadd.f32 %v370, %v387
      %v396 = vadd.f32 %v371, %v388
      %v397 = vadd.f32 %v372, %v389
      %v398 = vadd.f32 %v373, %v390
      %v399 = vadd.f32 %v374, %v391
      %v400 = vadd.f32 %v375, %v392
      %v401 = vadd.f32 %v376, %v393
      %v402 = vld [vmem:[%s351 + $0x2] sm:$0xff]
      %v403 = vld [vmem:[%s351 + $0x12] sm:$0xff]
      %v404 = vld [vmem:[%s351 + $0x22] sm:$0xff]
      %v405 = vld [vmem:[%s351 + $0x32] sm:$0xff]
      %v406 = vld [vmem:[%s351 + $0x42] sm:$0xff]
      %v407 = vld [vmem:[%s351 + $0x52] sm:$0xff]
      %v408 = vld [vmem:[%s351 + $0x62] sm:$0xff]
      %v409 = vld [vmem:[%s351 + $0x72] sm:$0xff]
      %v410 = vperm.slane %v199, 0
      %v411 = vmul.f32 %v402, %v410
      %v412 = vmul.f32 %v403, %v410
      %v413 = vmul.f32 %v404, %v410
      %v414 = vmul.f32 %v405, %v410
      %v415 = vmul.f32 %v406, %v410
      %v416 = vmul.f32 %v407, %v410
      %v417 = vmul.f32 %v408, %v410
      %v418 = vmul.f32 %v409, %v410
      %v419 = vadd.f32 %v394, %v411
      %v420 = vadd.f32 %v395, %v412
      %v421 = vadd.f32 %v396, %v413
      %v422 = vadd.f32 %v397, %v414
      %v423 = vadd.f32 %v398, %v415
      %v424 = vadd.f32 %v399, %v416
      %v425 = vadd.f32 %v400, %v417
      %v426 = vadd.f32 %v401, %v418
      %v427 = vld [vmem:[%s2] sm:$0x1]
      %v429 = vperm.slane %v427, 0
      %v431 = vmul.f32 %v419, %v429
      %v432 = vmul.f32 %v420, %v429
      %v433 = vmul.f32 %v421, %v429
      %v434 = vmul.f32 %v422, %v429
      %v435 = vmul.f32 %v423, %v429
      %v436 = vmul.f32 %v424, %v429
      %v437 = vmul.f32 %v425, %v429
      %v438 = vmul.f32 %v426, %v429
      %v439 = vld [vmem:[%s3] sm:$0x1]
      %v441 = vperm.slane %v439, 0
      %v443 = vadd.f32 %v431, %v441
      %v444 = vadd.f32 %v432, %v441
      %v445 = vadd.f32 %v433, %v441
      %v446 = vadd.f32 %v434, %v441
      %v447 = vadd.f32 %v435, %v441
      %v448 = vadd.f32 %v436, %v441
      %v449 = vadd.f32 %v437, %v441
      %v450 = vadd.f32 %v438, %v441
      %v451 = vmax.f32 %v443, 0.0
      %v452 = vmax.f32 %v444, 0.0
      %v453 = vmax.f32 %v445, 0.0
      %v454 = vmax.f32 %v446, 0.0
      %v455 = vmax.f32 %v447, 0.0
      %v456 = vmax.f32 %v448, 0.0
      %v457 = vmax.f32 %v449, 0.0
      %v458 = vmax.f32 %v450, 0.0
      %459 = vst [vmem:[%s197] sm:$0xff] %v451
      %460 = vst [vmem:[%s197 + $0x8] sm:$0xff] %v452
      %461 = vst [vmem:[%s197 + $0x10] sm:$0xff] %v453
      %462 = vst [vmem:[%s197 + $0x18] sm:$0xff] %v454
      %463 = vst [vmem:[%s197 + $0x20] sm:$0xff] %v455
      %464 = vst [vmem:[%s197 + $0x28] sm:$0xff] %v456
      %465 = vst [vmem:[%s197 + $0x30] sm:$0xff] %v457
      %466 = vst [vmem:[%s197 + $0x38] sm:$0xff] %v458
      %p467 = scmp.lt.s32.totalorder %s15, 1
      %s468 = scalar_select %p467, %s15, 1
      %s469 = smul.addr %s468, 8
      %s470 = smul.addr %s469, 8
      %s471 = scalar_lea.vmem %s4, %s470
      // Predicated region
      $region37: #{mobilenetv3_forward.11} parent=35 // pred_check
        %p472 = pneg %p122
      $region38: #{mobilenetv3_forward.11} parent=35 // pred_check_branch
        %474 = sbr.rel (%p472) target = $region40
      $region39: #{mobilenetv3_forward.11} parent=35 // pred_region
        _
      $region40: #{mobilenetv3_forward.11} parent=35 // pred_fallthru
        _
    $region36: #{mobilenetv3_forward.11} parent=5 // pred_fallthru
      _
    %p475 = scmp.le.s32.totalorder 2, %s10
    // Predicated region
    $region41: #{mobilenetv3_forward.11} parent=5 // pred_check
      %p476 = pneg %p475
    $region42: #{mobilenetv3_forward.11} parent=5 // pred_check_branch
      %478 = sbr.rel (%p476) target = $region44
    $region43: #{mobilenetv3_forward.11} parent=5 // pred_region
      %s479 = ssub.s32 %s10, 2
      // Predicated region
      $region45: #{mobilenetv3_forward.11} parent=43 // pred_check
        %p480 = pneg %p128
      $region46: #{mobilenetv3_forward.11} parent=43 // pred_check_branch
        %482 = sbr.rel (%p480) target = $region48
      $region47: #{mobilenetv3_forward.11} parent=43 // pred_region
        %p483 = scmp.lt.s32.totalorder %s16, 1
        %s484 = scalar_select %p483, %s16, 1
        %s485 = smul.addr %s484, 8
        %s486 = smul.addr %s485, 8
        %s487 = scalar_lea.vmem %s4, %s486
      $region48: #{mobilenetv3_forward.11} parent=43 // pred_fallthru
        _
    $region44: #{mobilenetv3_forward.11} parent=5 // pred_fallthru
      _
  $region6: #{mobilenetv3_forward.11} parent=0 // loop_footer
    %s14 = sadd.s32 1, %s10
  $region7: #{mobilenetv3_forward.11} parent=0 // loop_footer_branch
    %9 = sbr.rel target = $region3
  $region8: #{mobilenetv3_forward.11} parent=0 // loop_exit
    _

// kernel: mobilenetv3_forward.12
$region0: #{mobilenetv3_forward.12}
  #allocation0 [shape = 'u32[]', space=smem, size = 0x4, offset = 0x4, fixed_abs, tag = 'smem constant byte address 0x4 - core index']
  #allocation1 [shape = 'u32[72,128]{1,0:T(1,128)}', space=vmem, size = 0x9000, scoped, tag = 'internal scratch']
  %s0 = inlined_call_operand.vmem [shape: f32[128,128], index: 0, kind: input, shape index: {}]
  %s1 = inlined_call_operand.vmem [shape: bf16[128,128], index: 1, kind: input, shape index: {}]
  %s2 = inlined_call_operand.vmem [shape: f32[1,128], index: 2, kind: input, shape index: {}]
  %s3 = inlined_call_operand.vmem [shape: f32[1,128], index: 3, kind: input, shape index: {}]
  %s4 = inlined_call_operand.vmem [shape: f32[128,128], index: 4, kind: input, shape index: {}]
  %s5 = inlined_call_operand.vmem [shape: f32[128,128], index: 5, kind: output, shape index: {}]
  %s6 = sld [smem:[#allocation0]]
  $region30: #{mobilenetv3_forward.12} parent=0
    _
  %s8 = ssub.s32 1, %s6
  %s9 = scalar_select 0, %s8, %s6
  // Predicated region
  $region2: #{mobilenetv3_forward.12} parent=0 // pred_check
    _
  $region3: #{mobilenetv3_forward.12} parent=0 // pred_check_branch
    %11 = sbr.rel (0) target = $region5
  $region4: #{mobilenetv3_forward.12} parent=0 // pred_region
    _
  $region5: #{mobilenetv3_forward.12} parent=0 // pred_fallthru
    _
  // Predicated region
  $region6: #{mobilenetv3_forward.12} parent=0 // pred_check
    _
  $region7: #{mobilenetv3_forward.12} parent=0 // pred_check_branch
    %13 = sbr.rel (0) target = $region9
  $region8: #{mobilenetv3_forward.12} parent=0 // pred_region
    _
  $region9: #{mobilenetv3_forward.12} parent=0 // pred_fallthru
    _
  // Predicated region
  $region10: #{mobilenetv3_forward.12} parent=0 // pred_check
    _
  $region11: #{mobilenetv3_forward.12} parent=0 // pred_check_branch
    %15 = sbr.rel (0) target = $region13
  $region12: #{mobilenetv3_forward.12} parent=0 // pred_region
    _
  $region13: #{mobilenetv3_forward.12} parent=0 // pred_fallthru
    _
  // Predicated region
  $region14: #{mobilenetv3_forward.12} parent=0 // pred_check
    _
  $region15: #{mobilenetv3_forward.12} parent=0 // pred_check_branch
    %17 = sbr.rel (0) target = $region17
  $region16: #{mobilenetv3_forward.12} parent=0 // pred_region
    _
  $region17: #{mobilenetv3_forward.12} parent=0 // pred_fallthru
    _
  // Predicated region
  $region18: #{mobilenetv3_forward.12} parent=0 // pred_check
    _
  $region19: #{mobilenetv3_forward.12} parent=0 // pred_check_branch
    %19 = sbr.rel (0) target = $region21
  $region20: #{mobilenetv3_forward.12} parent=0 // pred_region
    _
  $region21: #{mobilenetv3_forward.12} parent=0 // pred_fallthru
    _
  %v20 = vld [vmem:[%s0] sm:$0xff]
  %v21 = vld [vmem:[%s0 + $0x8] sm:$0xff]
  %v22 = vld [vmem:[%s0 + $0x10] sm:$0xff]
  %v23 = vld [vmem:[%s0 + $0x18] sm:$0xff]
  %v24 = vld [vmem:[%s0 + $0x20] sm:$0xff]
  %v25 = vld [vmem:[%s0 + $0x28] sm:$0xff]
  %v26 = vld [vmem:[%s0 + $0x30] sm:$0xff]
  %v27 = vld [vmem:[%s0 + $0x38] sm:$0xff]
  %v28 = vld [vmem:[%s0 + $0x40] sm:$0xff]
  %v29 = vld [vmem:[%s0 + $0x48] sm:$0xff]
  %v30 = vld [vmem:[%s0 + $0x50] sm:$0xff]
  %v31 = vld [vmem:[%s0 + $0x58] sm:$0xff]
  %v32 = vld [vmem:[%s0 + $0x60] sm:$0xff]
  %v33 = vld [vmem:[%s0 + $0x68] sm:$0xff]
  %v34 = vld [vmem:[%s0 + $0x70] sm:$0xff]
  %v35 = vld [vmem:[%s0 + $0x78] sm:$0xff]
  %v36 = vpack.c.bf16 %v21, %v20
  %v37 = vpack.c.bf16 %v23, %v22
  %v38 = vpack.c.bf16 %v25, %v24
  %v39 = vpack.c.bf16 %v27, %v26
  %v40 = vpack.c.bf16 %v29, %v28
  %v41 = vpack.c.bf16 %v31, %v30
  %v42 = vpack.c.bf16 %v33, %v32
  %v43 = vpack.c.bf16 %v35, %v34
  %v44 = vld [vmem:[%s1] sm:$0xf]
  %v45 = vld [vmem:[%s1 + $0x4] sm:$0xf]
  %v46 = vld [vmem:[%s1 + $0x8] sm:$0xf]
  %v47 = vld [vmem:[%s1 + $0xc] sm:$0xf]
  %v48 = vld [vmem:[%s1 + $0x10] sm:$0xf]
  %v49 = vld [vmem:[%s1 + $0x14] sm:$0xf]
  %v50 = vld [vmem:[%s1 + $0x18] sm:$0xf]
  %v51 = vld [vmem:[%s1 + $0x1c] sm:$0xf]
  %v52 = vld [vmem:[%s1 + $0x20] sm:$0xf]
  %v53 = vld [vmem:[%s1 + $0x24] sm:$0xf]
  %v54 = vld [vmem:[%s1 + $0x28] sm:$0xf]
  %v55 = vld [vmem:[%s1 + $0x2c] sm:$0xf]
  %v56 = vld [vmem:[%s1 + $0x30] sm:$0xf]
  %v57 = vld [vmem:[%s1 + $0x34] sm:$0xf]
  %v58 = vld [vmem:[%s1 + $0x38] sm:$0xf]
  %v59 = vld [vmem:[%s1 + $0x3c] sm:$0xf]
  %v76 = vunpack.c.l.b16 %v44
  %v77 = vunpack.c.l.b16 %v45
  %v78 = vunpack.c.l.b16 %v46
  %v79 = vunpack.c.l.b16 %v47
  %v80 = vunpack.c.l.b16 %v48
  %v81 = vunpack.c.l.b16 %v49
  %v82 = vunpack.c.l.b16 %v50
  %v83 = vunpack.c.l.b16 %v51
  %v84 = vunpack.c.l.b16 %v52
  %v85 = vunpack.c.l.b16 %v53
  %v86 = vunpack.c.l.b16 %v54
  %v87 = vunpack.c.l.b16 %v55
  %v88 = vunpack.c.l.b16 %v56
  %v89 = vunpack.c.l.b16 %v57
  %v90 = vunpack.c.l.b16 %v58
  %v91 = vunpack.c.l.b16 %v59
  %v92 = vpack.c.b16 %v77, %v76
  %v93 = vpack.c.b16 %v79, %v78
  %v94 = vpack.c.b16 %v81, %v80
  %v95 = vpack.c.b16 %v83, %v82
  %v96 = vpack.c.b16 %v85, %v84
  %v97 = vpack.c.b16 %v87, %v86
  %v98 = vpack.c.b16 %v89, %v88
  %v99 = vpack.c.b16 %v91, %v90
  %108 = vmatpush.bf16.msra.mxu0 %v99
  %109 = vmatpush.bf16.msra.mxu0 %v98
  %110 = vmatpush.bf16.msra.mxu0 %v97
  %111 = vmatpush.bf16.msra.mxu0 %v96
  %112 = vmatpush.bf16.msra.mxu0 %v95
  %113 = vmatpush.bf16.msra.mxu0 %v94
  %114 = vmatpush.bf16.msra.mxu0 %v93
  %115 = vmatpush.bf16.msra.mxu0 %v92
  %116 = vmatmul.bf16.gmra.mxu0 %v36
  %v117 = vpop.f32.mrf.mxu0
  %v118 = vadd.f32 0.0, %v117
  %v119 = vpop.f32.mrf.mxu0
  %v120 = vadd.f32 0.0, %v119
  %121 = vmatmul.bf16.gmra.mxu0 %v37
  %v122 = vpop.f32.mrf.mxu0
  %v123 = vadd.f32 0.0, %v122
  %v124 = vpop.f32.mrf.mxu0
  %v125 = vadd.f32 0.0, %v124
  %126 = vmatmul.bf16.gmra.mxu0 %v38
  %v127 = vpop.f32.mrf.mxu0
  %v128 = vadd.f32 0.0, %v127
  %v129 = vpop.f32.mrf.mxu0
  %v130 = vadd.f32 0.0, %v129
  %131 = vmatmul.bf16.gmra.mxu0 %v39
  %v132 = vpop.f32.mrf.mxu0
  %v133 = vadd.f32 0.0, %v132
  %v134 = vpop.f32.mrf.mxu0
  %v135 = vadd.f32 0.0, %v134
  %136 = vmatmul.bf16.gmra.mxu0 %v40
  %v137 = vpop.f32.mrf.mxu0
  %v138 = vadd.f32 0.0, %v137
  %v139 = vpop.f32.mrf.mxu0
  %v140 = vadd.f32 0.0, %v139
  %141 = vmatmul.bf16.gmra.mxu0 %v41
  %v142 = vpop.f32.mrf.mxu0
  %v143 = vadd.f32 0.0, %v142
  %v144 = vpop.f32.mrf.mxu0
  %v145 = vadd.f32 0.0, %v144
  %146 = vmatmul.bf16.gmra.mxu0 %v42
  %v147 = vpop.f32.mrf.mxu0
  %v148 = vadd.f32 0.0, %v147
  %v149 = vpop.f32.mrf.mxu0
  %v150 = vadd.f32 0.0, %v149
  %151 = vmatmul.bf16.gmra.mxu0 %v43
  %v152 = vpop.f32.mrf.mxu0
  %v153 = vadd.f32 0.0, %v152
  %v154 = vpop.f32.mrf.mxu0
  %v155 = vadd.f32 0.0, %v154
  %156 = vdwg.mxu0
  %v157 = vld [vmem:[%s2] sm:$0x1]
  %v159 = vperm.slane %v157, 0
  %v161 = vmul.f32 %v118, %v159
  %v162 = vmul.f32 %v120, %v159
  %v163 = vmul.f32 %v123, %v159
  %v164 = vmul.f32 %v125, %v159
  %v165 = vmul.f32 %v128, %v159
  %v166 = vmul.f32 %v130, %v159
  %v167 = vmul.f32 %v133, %v159
  %v168 = vmul.f32 %v135, %v159
  %v169 = vmul.f32 %v138, %v159
  %v170 = vmul.f32 %v140, %v159
  %v171 = vmul.f32 %v143, %v159
  %v172 = vmul.f32 %v145, %v159
  %v173 = vmul.f32 %v148, %v159
  %v174 = vmul.f32 %v150, %v159
  %v175 = vmul.f32 %v153, %v159
  %v176 = vmul.f32 %v155, %v159
  %v177 = vld [vmem:[%s3] sm:$0x1]
  %v179 = vperm.slane %v177, 0
  %v181 = vadd.f32 %v161, %v179
  %v182 = vadd.f32 %v162, %v179
  %v183 = vadd.f32 %v163, %v179
  %v184 = vadd.f32 %v164, %v179
  %v185 = vadd.f32 %v165, %v179
  %v186 = vadd.f32 %v166, %v179
  %v187 = vadd.f32 %v167, %v179
  %v188 = vadd.f32 %v168, %v179
  %v189 = vadd.f32 %v169, %v179
  %v190 = vadd.f32 %v170, %v179
  %v191 = vadd.f32 %v171, %v179
  %v192 = vadd.f32 %v172, %v179
  %v193 = vadd.f32 %v173, %v179
  %v194 = vadd.f32 %v174, %v179
  %v195 = vadd.f32 %v175, %v179
  %v196 = vadd.f32 %v176, %v179
  %v197 = vld [vmem:[%s4] sm:$0xff]
  %v198 = vld [vmem:[%s4 + $0x8] sm:$0xff]
  %v199 = vld [vmem:[%s4 + $0x10] sm:$0xff]
  %v200 = vld [vmem:[%s4 + $0x18] sm:$0xff]
  %v201 = vld [vmem:[%s4 + $0x20] sm:$0xff]
  %v202 = vld [vmem:[%s4 + $0x28] sm:$0xff]
  %v203 = vld [vmem:[%s4 + $0x30] sm:$0xff]
  %v204 = vld [vmem:[%s4 + $0x38] sm:$0xff]
  %v205 = vld [vmem:[%s4 + $0x40] sm:$0xff]
  %v206 = vld [vmem:[%s4 + $0x48] sm:$0xff]
  %v207 = vld [vmem:[%s4 + $0x50] sm:$0xff]
  %v208 = vld [vmem:[%s4 + $0x58] sm:$0xff]
  %v209 = vld [vmem:[%s4 + $0x60] sm:$0xff]
  %v210 = vld [vmem:[%s4 + $0x68] sm:$0xff]
  %v211 = vld [vmem:[%s4 + $0x70] sm:$0xff]
  %v212 = vld [vmem:[%s4 + $0x78] sm:$0xff]
  %v213 = vadd.f32 %v181, %v197
  %v214 = vadd.f32 %v182, %v198
  %v215 = vadd.f32 %v183, %v199
  %v216 = vadd.f32 %v184, %v200
  %v217 = vadd.f32 %v185, %v201
  %v218 = vadd.f32 %v186, %v202
  %v219 = vadd.f32 %v187, %v203
  %v220 = vadd.f32 %v188, %v204
  %v221 = vadd.f32 %v189, %v205
  %v222 = vadd.f32 %v190, %v206
  %v223 = vadd.f32 %v191, %v207
  %v224 = vadd.f32 %v192, %v208
  %v225 = vadd.f32 %v193, %v209
  %v226 = vadd.f32 %v194, %v210
  %v227 = vadd.f32 %v195, %v211
  %v228 = vadd.f32 %v196, %v212
  %229 = vst [vmem:[%s5] sm:$0xff] %v213
  %230 = vst [vmem:[%s5 + $0x8] sm:$0xff] %v214
  %231 = vst [vmem:[%s5 + $0x10] sm:$0xff] %v215
  %232 = vst [vmem:[%s5 + $0x18] sm:$0xff] %v216
  %233 = vst [vmem:[%s5 + $0x20] sm:$0xff] %v217
  %234 = vst [vmem:[%s5 + $0x28] sm:$0xff] %v218
  %235 = vst [vmem:[%s5 + $0x30] sm:$0xff] %v219
  %236 = vst [vmem:[%s5 + $0x38] sm:$0xff] %v220
  %237 = vst [vmem:[%s5 + $0x40] sm:$0xff] %v221
  %238 = vst [vmem:[%s5 + $0x48] sm:$0xff] %v222
  %239 = vst [vmem:[%s5 + $0x50] sm:$0xff] %v223
  %240 = vst [vmem:[%s5 + $0x58] sm:$0xff] %v224
  %241 = vst [vmem:[%s5 + $0x60] sm:$0xff] %v225
  %242 = vst [vmem:[%s5 + $0x68] sm:$0xff] %v226
  %243 = vst [vmem:[%s5 + $0x70] sm:$0xff] %v227
  %244 = vst [vmem:[%s5 + $0x78] sm:$0xff] %v228
  // Predicated region
  $region22: #{mobilenetv3_forward.12} parent=0 // pred_check
    _
  $region23: #{mobilenetv3_forward.12} parent=0 // pred_check_branch
    %246 = sbr.rel (0) target = $region25
  $region24: #{mobilenetv3_forward.12} parent=0 // pred_region
    _
  $region25: #{mobilenetv3_forward.12} parent=0 // pred_fallthru
    _
  // Predicated region
  $region26: #{mobilenetv3_forward.12} parent=0 // pred_check
    _
  $region27: #{mobilenetv3_forward.12} parent=0 // pred_check_branch
    %248 = sbr.rel (0) target = $region29
  $region28: #{mobilenetv3_forward.12} parent=0 // pred_region
    _
  $region29: #{mobilenetv3_forward.12} parent=0 // pred_fallthru
    _

// kernel: mobilenetv3_forward.16
$region0: #{mobilenetv3_forward.16}
  #allocation0 [shape = 'u32[]', space=smem, size = 0x4, offset = 0x4, fixed_abs, tag = 'smem constant byte address 0x4 - core index']
  #allocation1 [shape = 'u32[72,128]{1,0:T(1,128)}', space=vmem, size = 0x9000, scoped, tag = 'internal scratch']
  %s0 = inlined_call_operand.vmem [shape: f32[32,128], index: 0, kind: input, shape index: {}]
  %s1 = inlined_call_operand.vmem [shape: bf16[128,256], index: 1, kind: input, shape index: {}]
  %s2 = inlined_call_operand.vmem [shape: f32[1,256], index: 2, kind: input, shape index: {}]
  %s3 = inlined_call_operand.vmem [shape: f32[1,256], index: 3, kind: input, shape index: {}]
  %s4 = inlined_call_operand.vmem [shape: f32[32,256], index: 4, kind: output, shape index: {}]
  %s5 = sld [smem:[#allocation0]]
  $region26: #{mobilenetv3_forward.16} parent=0
    _
  %s7 = ssub.s32 1, %s5
  %s8 = scalar_select 0, %s7, %s5
  // Predicated region
  $region2: #{mobilenetv3_forward.16} parent=0 // pred_check
    _
  $region3: #{mobilenetv3_forward.16} parent=0 // pred_check_branch
    %10 = sbr.rel (0) target = $region5
  $region4: #{mobilenetv3_forward.16} parent=0 // pred_region
    _
  $region5: #{mobilenetv3_forward.16} parent=0 // pred_fallthru
    _
  // Predicated region
  $region6: #{mobilenetv3_forward.16} parent=0 // pred_check
    _
  $region7: #{mobilenetv3_forward.16} parent=0 // pred_check_branch
    %12 = sbr.rel (0) target = $region9
  $region8: #{mobilenetv3_forward.16} parent=0 // pred_region
    _
  $region9: #{mobilenetv3_forward.16} parent=0 // pred_fallthru
    _
  // Predicated region
  $region10: #{mobilenetv3_forward.16} parent=0 // pred_check
    _
  $region11: #{mobilenetv3_forward.16} parent=0 // pred_check_branch
    %14 = sbr.rel (0) target = $region13
  $region12: #{mobilenetv3_forward.16} parent=0 // pred_region
    _
  $region13: #{mobilenetv3_forward.16} parent=0 // pred_fallthru
    _
  // Predicated region
  $region14: #{mobilenetv3_forward.16} parent=0 // pred_check
    _
  $region15: #{mobilenetv3_forward.16} parent=0 // pred_check_branch
    %16 = sbr.rel (0) target = $region17
  $region16: #{mobilenetv3_forward.16} parent=0 // pred_region
    _
  $region17: #{mobilenetv3_forward.16} parent=0 // pred_fallthru
    _
  %v17 = vld [vmem:[%s0] sm:$0xff]
  %v18 = vld [vmem:[%s0 + $0x8] sm:$0xff]
  %v19 = vld [vmem:[%s0 + $0x10] sm:$0xff]
  %v20 = vld [vmem:[%s0 + $0x18] sm:$0xff]
  %v21 = vpack.c.bf16 %v18, %v17
  %v22 = vpack.c.bf16 %v20, %v19
  %v23 = vld [vmem:[%s1] sm:$0xff]
  %v24 = vld [vmem:[%s1 + $0x8] sm:$0xff]
  %v25 = vld [vmem:[%s1 + $0x10] sm:$0xff]
  %v26 = vld [vmem:[%s1 + $0x18] sm:$0xff]
  %v27 = vld [vmem:[%s1 + $0x20] sm:$0xff]
  %v28 = vld [vmem:[%s1 + $0x28] sm:$0xff]
  %v29 = vld [vmem:[%s1 + $0x30] sm:$0xff]
  %v30 = vld [vmem:[%s1 + $0x38] sm:$0xff]
  %v31 = vld [vmem:[%s1 + $0x40] sm:$0xff]
  %v32 = vld [vmem:[%s1 + $0x48] sm:$0xff]
  %v33 = vld [vmem:[%s1 + $0x50] sm:$0xff]
  %v34 = vld [vmem:[%s1 + $0x58] sm:$0xff]
  %v35 = vld [vmem:[%s1 + $0x60] sm:$0xff]
  %v36 = vld [vmem:[%s1 + $0x68] sm:$0xff]
  %v37 = vld [vmem:[%s1 + $0x70] sm:$0xff]
  %v38 = vld [vmem:[%s1 + $0x78] sm:$0xff]
  %v55 = vunpack.c.l.b16 %v23
  %v56 = vunpack.c.h.b16 %v23
  %v57 = vunpack.c.l.b16 %v24
  %v58 = vunpack.c.h.b16 %v24
  %v59 = vunpack.c.l.b16 %v25
  %v60 = vunpack.c.h.b16 %v25
  %v61 = vunpack.c.l.b16 %v26
  %v62 = vunpack.c.h.b16 %v26
  %v63 = vunpack.c.l.b16 %v27
  %v64 = vunpack.c.h.b16 %v27
  %v65 = vunpack.c.l.b16 %v28
  %v66 = vunpack.c.h.b16 %v28
  %v67 = vunpack.c.l.b16 %v29
  %v68 = vunpack.c.h.b16 %v29
  %v69 = vunpack.c.l.b16 %v30
  %v70 = vunpack.c.h.b16 %v30
  %v71 = vunpack.c.l.b16 %v31
  %v72 = vunpack.c.h.b16 %v31
  %v73 = vunpack.c.l.b16 %v32
  %v74 = vunpack.c.h.b16 %v32
  %v75 = vunpack.c.l.b16 %v33
  %v76 = vunpack.c.h.b16 %v33
  %v77 = vunpack.c.l.b16 %v34
  %v78 = vunpack.c.h.b16 %v34
  %v79 = vunpack.c.l.b16 %v35
  %v80 = vunpack.c.h.b16 %v35
  %v81 = vunpack.c.l.b16 %v36
  %v82 = vunpack.c.h.b16 %v36
  %v83 = vunpack.c.l.b16 %v37
  %v84 = vunpack.c.h.b16 %v37
  %v85 = vunpack.c.l.b16 %v38
  %v86 = vunpack.c.h.b16 %v38
  %v87 = vpack.c.b16 %v57, %v55
  %v88 = vpack.c.b16 %v58, %v56
  %v89 = vpack.c.b16 %v61, %v59
  %v90 = vpack.c.b16 %v62, %v60
  %v91 = vpack.c.b16 %v65, %v63
  %v92 = vpack.c.b16 %v66, %v64
  %v93 = vpack.c.b16 %v69, %v67
  %v94 = vpack.c.b16 %v70, %v68
  %v95 = vpack.c.b16 %v73, %v71
  %v96 = vpack.c.b16 %v74, %v72
  %v97 = vpack.c.b16 %v77, %v75
  %v98 = vpack.c.b16 %v78, %v76
  %v99 = vpack.c.b16 %v81, %v79
  %v100 = vpack.c.b16 %v82, %v80
  %v101 = vpack.c.b16 %v85, %v83
  %v102 = vpack.c.b16 %v86, %v84
  %119 = vmatpush.bf16.msra.mxu0 %v101
  %120 = vmatpush.bf16.msra.mxu0 %v99
  %121 = vmatpush.bf16.msra.mxu0 %v97
  %122 = vmatpush.bf16.msra.mxu0 %v95
  %123 = vmatpush.bf16.msra.mxu0 %v93
  %124 = vmatpush.bf16.msra.mxu0 %v91
  %125 = vmatpush.bf16.msra.mxu0 %v89
  %126 = vmatpush.bf16.msra.mxu0 %v87
  %127 = vmatmul.bf16.gmra.mxu0 %v21
  %v128 = vpop.f32.mrf.mxu0
  %v129 = vadd.f32 0.0, %v128
  %v130 = vpop.f32.mrf.mxu0
  %v131 = vadd.f32 0.0, %v130
  %132 = vmatmul.bf16.gmra.mxu0 %v22
  %v133 = vpop.f32.mrf.mxu0
  %v134 = vadd.f32 0.0, %v133
  %v135 = vpop.f32.mrf.mxu0
  %v136 = vadd.f32 0.0, %v135
  %137 = vdwg.mxu0
  %138 = vmatpush.bf16.msra.mxu0 %v102
  %139 = vmatpush.bf16.msra.mxu0 %v100
  %140 = vmatpush.bf16.msra.mxu0 %v98
  %141 = vmatpush.bf16.msra.mxu0 %v96
  %142 = vmatpush.bf16.msra.mxu0 %v94
  %143 = vmatpush.bf16.msra.mxu0 %v92
  %144 = vmatpush.bf16.msra.mxu0 %v90
  %145 = vmatpush.bf16.msra.mxu0 %v88
  %146 = vmatmul.bf16.gmra.mxu0 %v21
  %v147 = vpop.f32.mrf.mxu0
  %v148 = vadd.f32 0.0, %v147
  %v149 = vpop.f32.mrf.mxu0
  %v150 = vadd.f32 0.0, %v149
  %151 = vmatmul.bf16.gmra.mxu0 %v22
  %v152 = vpop.f32.mrf.mxu0
  %v153 = vadd.f32 0.0, %v152
  %v154 = vpop.f32.mrf.mxu0
  %v155 = vadd.f32 0.0, %v154
  %156 = vdwg.mxu0
  %v157 = vld [vmem:[%s2] sm:$0x3]
  %v159 = vperm.slane %v157, 0
  %v160 = vperm.slane %v157, 1
  %v163 = vmul.f32 %v129, %v159
  %v164 = vmul.f32 %v148, %v160
  %v165 = vmul.f32 %v131, %v159
  %v166 = vmul.f32 %v150, %v160
  %v167 = vmul.f32 %v134, %v159
  %v168 = vmul.f32 %v153, %v160
  %v169 = vmul.f32 %v136, %v159
  %v170 = vmul.f32 %v155, %v160
  %v171 = vld [vmem:[%s3] sm:$0x3]
  %v173 = vperm.slane %v171, 0
  %v174 = vperm.slane %v171, 1
  %v177 = vadd.f32 %v163, %v173
  %v178 = vadd.f32 %v164, %v174
  %v179 = vadd.f32 %v165, %v173
  %v180 = vadd.f32 %v166, %v174
  %v181 = vadd.f32 %v167, %v173
  %v182 = vadd.f32 %v168, %v174
  %v183 = vadd.f32 %v169, %v173
  %v184 = vadd.f32 %v170, %v174
  %v185 = vadd.f32 %v177, 3.0
  %v186 = vadd.f32 %v178, 3.0
  %v187 = vadd.f32 %v179, 3.0
  %v188 = vadd.f32 %v180, 3.0
  %v189 = vadd.f32 %v181, 3.0
  %v190 = vadd.f32 %v182, 3.0
  %v191 = vadd.f32 %v183, 3.0
  %v192 = vadd.f32 %v184, 3.0
  %v193 = vmax.f32 %v185, 0.0
  %v194 = vmax.f32 %v186, 0.0
  %v195 = vmax.f32 %v187, 0.0
  %v196 = vmax.f32 %v188, 0.0
  %v197 = vmax.f32 %v189, 0.0
  %v198 = vmax.f32 %v190, 0.0
  %v199 = vmax.f32 %v191, 0.0
  %v200 = vmax.f32 %v192, 0.0
  %v201 = vmin.f32 %v193, 6.0
  %v202 = vmin.f32 %v194, 6.0
  %v203 = vmin.f32 %v195, 6.0
  %v204 = vmin.f32 %v196, 6.0
  %v205 = vmin.f32 %v197, 6.0
  %v206 = vmin.f32 %v198, 6.0
  %v207 = vmin.f32 %v199, 6.0
  %v208 = vmin.f32 %v200, 6.0
  %v209 = vmul.f32 %v177, %v201
  %v210 = vmul.f32 %v178, %v202
  %v211 = vmul.f32 %v179, %v203
  %v212 = vmul.f32 %v180, %v204
  %v213 = vmul.f32 %v181, %v205
  %v214 = vmul.f32 %v182, %v206
  %v215 = vmul.f32 %v183, %v207
  %v216 = vmul.f32 %v184, %v208
  %v217 = vmul.f32 %v209, 0.16666667
  %v218 = vmul.f32 %v210, 0.16666667
  %v219 = vmul.f32 %v211, 0.16666667
  %v220 = vmul.f32 %v212, 0.16666667
  %v221 = vmul.f32 %v213, 0.16666667
  %v222 = vmul.f32 %v214, 0.16666667
  %v223 = vmul.f32 %v215, 0.16666667
  %v224 = vmul.f32 %v216, 0.16666667
  %225 = vst [vmem:[%s4] sm:$0xff] %v217
  %226 = vst [vmem:[%s4 + $0x8] sm:$0xff] %v218
  %227 = vst [vmem:[%s4 + $0x10] sm:$0xff] %v219
  %228 = vst [vmem:[%s4 + $0x18] sm:$0xff] %v220
  %229 = vst [vmem:[%s4 + $0x20] sm:$0xff] %v221
  %230 = vst [vmem:[%s4 + $0x28] sm:$0xff] %v222
  %231 = vst [vmem:[%s4 + $0x30] sm:$0xff] %v223
  %232 = vst [vmem:[%s4 + $0x38] sm:$0xff] %v224
  // Predicated region
  $region18: #{mobilenetv3_forward.16} parent=0 // pred_check
    _
  $region19: #{mobilenetv3_forward.16} parent=0 // pred_check_branch
    %234 = sbr.rel (0) target = $region21
  $region20: #{mobilenetv3_forward.16} parent=0 // pred_region
    _
  $region21: #{mobilenetv3_forward.16} parent=0 // pred_fallthru
    _
  // Predicated region
  $region22: #{mobilenetv3_forward.16} parent=0 // pred_check
    _
  $region23: #{mobilenetv3_forward.16} parent=0 // pred_check_branch
    %236 = sbr.rel (0) target = $region25
  $region24: #{mobilenetv3_forward.16} parent=0 // pred_region
    _
  $region25: #{mobilenetv3_forward.16} parent=0 // pred_fallthru
    _

// kernel: mobilenetv3_forward.15
$region0: #{mobilenetv3_forward.15}
  #allocation0 [shape = 'u32[]', space=smem, size = 0x4, offset = 0x4, fixed_abs, tag = 'smem constant byte address 0x4 - core index']
  #allocation1 [shape = 'u32[72,128]{1,0:T(1,128)}', space=vmem, size = 0x9000, scoped, tag = 'internal scratch']
  %s0 = inlined_call_operand.vmem [shape: f32[32,128], index: 0, kind: input, shape index: {}]
  %s1 = inlined_call_operand.vmem [shape: bf16[128,128], index: 1, kind: input, shape index: {}]
  %s2 = inlined_call_operand.vmem [shape: f32[1,128], index: 2, kind: input, shape index: {}]
  %s3 = inlined_call_operand.vmem [shape: f32[1,128], index: 3, kind: input, shape index: {}]
  %s4 = inlined_call_operand.vmem [shape: f32[32,128], index: 4, kind: output, shape index: {}]
  %s5 = sld [smem:[#allocation0]]
  $region26: #{mobilenetv3_forward.15} parent=0
    _
  %s7 = ssub.s32 1, %s5
  %s8 = scalar_select 0, %s7, %s5
  // Predicated region
  $region2: #{mobilenetv3_forward.15} parent=0 // pred_check
    _
  $region3: #{mobilenetv3_forward.15} parent=0 // pred_check_branch
    %10 = sbr.rel (0) target = $region5
  $region4: #{mobilenetv3_forward.15} parent=0 // pred_region
    _
  $region5: #{mobilenetv3_forward.15} parent=0 // pred_fallthru
    _
  // Predicated region
  $region6: #{mobilenetv3_forward.15} parent=0 // pred_check
    _
  $region7: #{mobilenetv3_forward.15} parent=0 // pred_check_branch
    %12 = sbr.rel (0) target = $region9
  $region8: #{mobilenetv3_forward.15} parent=0 // pred_region
    _
  $region9: #{mobilenetv3_forward.15} parent=0 // pred_fallthru
    _
  // Predicated region
  $region10: #{mobilenetv3_forward.15} parent=0 // pred_check
    _
  $region11: #{mobilenetv3_forward.15} parent=0 // pred_check_branch
    %14 = sbr.rel (0) target = $region13
  $region12: #{mobilenetv3_forward.15} parent=0 // pred_region
    _
  $region13: #{mobilenetv3_forward.15} parent=0 // pred_fallthru
    _
  // Predicated region
  $region14: #{mobilenetv3_forward.15} parent=0 // pred_check
    _
  $region15: #{mobilenetv3_forward.15} parent=0 // pred_check_branch
    %16 = sbr.rel (0) target = $region17
  $region16: #{mobilenetv3_forward.15} parent=0 // pred_region
    _
  $region17: #{mobilenetv3_forward.15} parent=0 // pred_fallthru
    _
  %v17 = vld [vmem:[%s0] sm:$0xff]
  %v18 = vld [vmem:[%s0 + $0x8] sm:$0xff]
  %v19 = vld [vmem:[%s0 + $0x10] sm:$0xff]
  %v20 = vld [vmem:[%s0 + $0x18] sm:$0xff]
  %v21 = vpack.c.bf16 %v18, %v17
  %v22 = vpack.c.bf16 %v20, %v19
  %v23 = vld [vmem:[%s1] sm:$0xf]
  %v24 = vld [vmem:[%s1 + $0x4] sm:$0xf]
  %v25 = vld [vmem:[%s1 + $0x8] sm:$0xf]
  %v26 = vld [vmem:[%s1 + $0xc] sm:$0xf]
  %v27 = vld [vmem:[%s1 + $0x10] sm:$0xf]
  %v28 = vld [vmem:[%s1 + $0x14] sm:$0xf]
  %v29 = vld [vmem:[%s1 + $0x18] sm:$0xf]
  %v30 = vld [vmem:[%s1 + $0x1c] sm:$0xf]
  %v31 = vld [vmem:[%s1 + $0x20] sm:$0xf]
  %v32 = vld [vmem:[%s1 + $0x24] sm:$0xf]
  %v33 = vld [vmem:[%s1 + $0x28] sm:$0xf]
  %v34 = vld [vmem:[%s1 + $0x2c] sm:$0xf]
  %v35 = vld [vmem:[%s1 + $0x30] sm:$0xf]
  %v36 = vld [vmem:[%s1 + $0x34] sm:$0xf]
  %v37 = vld [vmem:[%s1 + $0x38] sm:$0xf]
  %v38 = vld [vmem:[%s1 + $0x3c] sm:$0xf]
  %v55 = vunpack.c.l.b16 %v23
  %v56 = vunpack.c.l.b16 %v24
  %v57 = vunpack.c.l.b16 %v25
  %v58 = vunpack.c.l.b16 %v26
  %v59 = vunpack.c.l.b16 %v27
  %v60 = vunpack.c.l.b16 %v28
  %v61 = vunpack.c.l.b16 %v29
  %v62 = vunpack.c.l.b16 %v30
  %v63 = vunpack.c.l.b16 %v31
  %v64 = vunpack.c.l.b16 %v32
  %v65 = vunpack.c.l.b16 %v33
  %v66 = vunpack.c.l.b16 %v34
  %v67 = vunpack.c.l.b16 %v35
  %v68 = vunpack.c.l.b16 %v36
  %v69 = vunpack.c.l.b16 %v37
  %v70 = vunpack.c.l.b16 %v38
  %v71 = vpack.c.b16 %v56, %v55
  %v72 = vpack.c.b16 %v58, %v57
  %v73 = vpack.c.b16 %v60, %v59
  %v74 = vpack.c.b16 %v62, %v61
  %v75 = vpack.c.b16 %v64, %v63
  %v76 = vpack.c.b16 %v66, %v65
  %v77 = vpack.c.b16 %v68, %v67
  %v78 = vpack.c.b16 %v70, %v69
  %87 = vmatpush.bf16.msra.mxu0 %v78
  %88 = vmatpush.bf16.msra.mxu0 %v77
  %89 = vmatpush.bf16.msra.mxu0 %v76
  %90 = vmatpush.bf16.msra.mxu0 %v75
  %91 = vmatpush.bf16.msra.mxu0 %v74
  %92 = vmatpush.bf16.msra.mxu0 %v73
  %93 = vmatpush.bf16.msra.mxu0 %v72
  %94 = vmatpush.bf16.msra.mxu0 %v71
  %95 = vmatmul.bf16.gmra.mxu0 %v21
  %v96 = vpop.f32.mrf.mxu0
  %v97 = vadd.f32 0.0, %v96
  %v98 = vpop.f32.mrf.mxu0
  %v99 = vadd.f32 0.0, %v98
  %100 = vmatmul.bf16.gmra.mxu0 %v22
  %v101 = vpop.f32.mrf.mxu0
  %v102 = vadd.f32 0.0, %v101
  %v103 = vpop.f32.mrf.mxu0
  %v104 = vadd.f32 0.0, %v103
  %105 = vdwg.mxu0
  %v106 = vld [vmem:[%s2] sm:$0x1]
  %v108 = vperm.slane %v106, 0
  %v110 = vmul.f32 %v97, %v108
  %v111 = vmul.f32 %v99, %v108
  %v112 = vmul.f32 %v102, %v108
  %v113 = vmul.f32 %v104, %v108
  %v114 = vld [vmem:[%s3] sm:$0x1]
  %v116 = vperm.slane %v114, 0
  %v118 = vadd.f32 %v110, %v116
  %v119 = vadd.f32 %v111, %v116
  %v120 = vadd.f32 %v112, %v116
  %v121 = vadd.f32 %v113, %v116
  %122 = vst [vmem:[%s4] sm:$0xff] %v118
  %123 = vst [vmem:[%s4 + $0x8] sm:$0xff] %v119
  %124 = vst [vmem:[%s4 + $0x10] sm:$0xff] %v120
  %125 = vst [vmem:[%s4 + $0x18] sm:$0xff] %v121
  // Predicated region
  $region18: #{mobilenetv3_forward.15} parent=0 // pred_check
    _
  $region19: #{mobilenetv3_forward.15} parent=0 // pred_check_branch
    %127 = sbr.rel (0) target = $region21
  $region20: #{mobilenetv3_forward.15} parent=0 // pred_region
    _
  $region21: #{mobilenetv3_forward.15} parent=0 // pred_fallthru
    _
  // Predicated region
  $region22: #{mobilenetv3_forward.15} parent=0 // pred_check
    _
  $region23: #{mobilenetv3_forward.15} parent=0 // pred_check_branch
    %129 = sbr.rel (0) target = $region25
  $region24: #{mobilenetv3_forward.15} parent=0 // pred_region
    _
  $region25: #{mobilenetv3_forward.15} parent=0 // pred_fallthru
    _

// kernel: mobilenetv3_forward.17
$region0: #{mobilenetv3_forward.17}
  #allocation0 [shape = 'u32[]', space=smem, size = 0x4, offset = 0x4, fixed_abs, tag = 'smem constant byte address 0x4 - core index']
  #allocation1 [shape = 'u32[72,128]{1,0:T(1,128)}', space=vmem, size = 0x9000, scoped, tag = 'internal scratch']
  %s0 = inlined_call_operand.vmem [shape: f32[2,16,256], index: 0, kind: input, shape index: {}]
  %s1 = inlined_call_operand.vmem [shape: bf16[256,128], index: 1, kind: input, shape index: {}]
  %s2 = inlined_call_operand.vmem [shape: f32[1,128], index: 2, kind: input, shape index: {}]
  %s3 = inlined_call_operand.hbm [shape: f32[2,128], index: 3, kind: output, shape index: {}]
  %s4 = sld [smem:[#allocation0]]
  $region22: #{mobilenetv3_forward.17} parent=0
    _
  %s6 = ssub.s32 1, %s4
  %s7 = scalar_select 0, %s6, %s4
  $region1: #{mobilenetv3_forward.17} parent=0
    #allocation2 [shape = 'u8[1024]{0}', space=vmem, size = 0x400, scoped, tag = 'output window, operand 0, single buffered']
    #allocation3 [shape = 's32[1]{0}', space=sflag, size = 0x4, scoped, tag = 'scoped memory for mobilenetv3_forward.17']
    %8 = vsyncpa [#allocation3], 0
    // Predicated region
    $region2: #{mobilenetv3_forward.17} parent=1 // pred_check
      _
    $region3: #{mobilenetv3_forward.17} parent=1 // pred_check_branch
      %10 = sbr.rel (0) target = $region5
    $region4: #{mobilenetv3_forward.17} parent=1 // pred_region
      _
    $region5: #{mobilenetv3_forward.17} parent=1 // pred_fallthru
      _
    // Predicated region
    $region6: #{mobilenetv3_forward.17} parent=1 // pred_check
      _
    $region7: #{mobilenetv3_forward.17} parent=1 // pred_check_branch
      %12 = sbr.rel (0) target = $region9
    $region8: #{mobilenetv3_forward.17} parent=1 // pred_region
      _
    $region9: #{mobilenetv3_forward.17} parent=1 // pred_fallthru
      _
    // Predicated region
    $region10: #{mobilenetv3_forward.17} parent=1 // pred_check
      _
    $region11: #{mobilenetv3_forward.17} parent=1 // pred_check_branch
      %14 = sbr.rel (0) target = $region13
    $region12: #{mobilenetv3_forward.17} parent=1 // pred_region
      _
    $region13: #{mobilenetv3_forward.17} parent=1 // pred_fallthru
      _
    %v15 = vld [vmem:[%s0] sm:$0xff]
    %v16 = vld [vmem:[%s0 + $0x8] sm:$0xff]
    %v17 = vld [vmem:[%s0 + $0x10] sm:$0xff]
    %v18 = vld [vmem:[%s0 + $0x18] sm:$0xff]
    %v19 = vld [vmem:[%s0 + $0x20] sm:$0xff]
    %v20 = vld [vmem:[%s0 + $0x28] sm:$0xff]
    %v21 = vld [vmem:[%s0 + $0x30] sm:$0xff]
    %v22 = vld [vmem:[%s0 + $0x38] sm:$0xff]
    %v23 = vadd.f32 %v15, %v17
    %v24 = vrot.slane %v23, 4
    %v25 = vadd.f32 %v23, %v24
    %v26 = vrot.slane %v25, 2
    %v27 = vadd.f32 %v25, %v26
    %v28 = vrot.slane %v27, 1
    %v29 = vadd.f32 %v27, %v28
    %v30 = vadd.f32 %v16, %v18
    %v31 = vrot.slane %v30, 4
    %v32 = vadd.f32 %v30, %v31
    %v33 = vrot.slane %v32, 2
    %v34 = vadd.f32 %v32, %v33
    %v35 = vrot.slane %v34, 1
    %v36 = vadd.f32 %v34, %v35
    %v37 = vadd.f32 %v19, %v21
    %v38 = vrot.slane %v37, 4
    %v39 = vadd.f32 %v37, %v38
    %v40 = vrot.slane %v39, 2
    %v41 = vadd.f32 %v39, %v40
    %v42 = vrot.slane %v41, 1
    %v43 = vadd.f32 %v41, %v42
    %v44 = vadd.f32 %v20, %v22
    %v45 = vrot.slane %v44, 4
    %v46 = vadd.f32 %v44, %v45
    %v47 = vrot.slane %v46, 2
    %v48 = vadd.f32 %v46, %v47
    %v49 = vrot.slane %v48, 1
    %v50 = vadd.f32 %v48, %v49
    %v51 = vrcp.pop 16.0
    %v52 = vmul.f32 16.0, %v51
    %v53 = vsub.f32 1.0, %v52
    %v54 = vmul.f32 %v51, %v53
    %v55 = vadd.f32 %v51, %v54
    %vm56 = vweird.f32 %v51
    %v57 = vsel %vm56, %v51, %v55
    %v58 = vmul.f32 %v29, %v57
    %v59 = vmul.f32 %v36, %v57
    %v60 = vmul.f32 %v43, %v57
    %v61 = vmul.f32 %v50, %v57
    %v62 = vpack.c.bf16 %v58, %v58
    %v63 = vpack.c.bf16 %v59, %v59
    %v64 = vpack.c.bf16 %v60, %v60
    %v65 = vpack.c.bf16 %v61, %v61
    %v66 = vld [vmem:[%s1] sm:$0xf]
    %v67 = vld [vmem:[%s1 + $0x4] sm:$0xf]
    %v68 = vld [vmem:[%s1 + $0x8] sm:$0xf]
    %v69 = vld [vmem:[%s1 + $0xc] sm:$0xf]
    %v70 = vld [vmem:[%s1 + $0x10] sm:$0xf]
    %v71 = vld [vmem:[%s1 + $0x14] sm:$0xf]
    %v72 = vld [vmem:[%s1 + $0x18] sm:$0xf]
    %v73 = vld [vmem:[%s1 + $0x1c] sm:$0xf]
    %v74 = vld [vmem:[%s1 + $0x20] sm:$0xf]
    %v75 = vld [vmem:[%s1 + $0x24] sm:$0xf]
    %v76 = vld [vmem:[%s1 + $0x28] sm:$0xf]
    %v77 = vld [vmem:[%s1 + $0x2c] sm:$0xf]
    %v78 = vld [vmem:[%s1 + $0x30] sm:$0xf]
    %v79 = vld [vmem:[%s1 + $0x34] sm:$0xf]
    %v80 = vld [vmem:[%s1 + $0x38] sm:$0xf]
    %v81 = vld [vmem:[%s1 + $0x3c] sm:$0xf]
    %v82 = vld [vmem:[%s1 + $0x40] sm:$0xf]
    %v83 = vld [vmem:[%s1 + $0x44] sm:$0xf]
    %v84 = vld [vmem:[%s1 + $0x48] sm:$0xf]
    %v85 = vld [vmem:[%s1 + $0x4c] sm:$0xf]
    %v86 = vld [vmem:[%s1 + $0x50] sm:$0xf]
    %v87 = vld [vmem:[%s1 + $0x54] sm:$0xf]
    %v88 = vld [vmem:[%s1 + $0x58] sm:$0xf]
    %v89 = vld [vmem:[%s1 + $0x5c] sm:$0xf]
    %v90 = vld [vmem:[%s1 + $0x60] sm:$0xf]
    %v91 = vld [vmem:[%s1 + $0x64] sm:$0xf]
    %v92 = vld [vmem:[%s1 + $0x68] sm:$0xf]
    %v93 = vld [vmem:[%s1 + $0x6c] sm:$0xf]
    %v94 = vld [vmem:[%s1 + $0x70] sm:$0xf]
    %v95 = vld [vmem:[%s1 + $0x74] sm:$0xf]
    %v96 = vld [vmem:[%s1 + $0x78] sm:$0xf]
    %v97 = vld [vmem:[%s1 + $0x7c] sm:$0xf]
    %v98 = vld [vmem:[%s2] sm:$0x1]
    %v100 = vperm.slane %v98, 0
    %v106 = vunpack.c.l.b16 %v62
    %v107 = vunpack.c.l.b16 %v63
    %v108 = vunpack.c.l.b16 %v64
    %v109 = vunpack.c.l.b16 %v65
    %vm110 = vcmask 1041409
    %v111 = vsel %vm110, %v108, %v106
    %v112 = vsel %vm110, %v109, %v107
    %v113 = vpack.c.b16 %v111, %v111
    %v114 = vpack.c.b16 %v112, %v112
    %v149 = vunpack.c.l.b16 %v66
    %v150 = vunpack.c.l.b16 %v67
    %v151 = vunpack.c.l.b16 %v68
    %v152 = vunpack.c.l.b16 %v69
    %v153 = vunpack.c.l.b16 %v70
    %v154 = vunpack.c.l.b16 %v71
    %v155 = vunpack.c.l.b16 %v72
    %v156 = vunpack.c.l.b16 %v73
    %v157 = vunpack.c.l.b16 %v74
    %v158 = vunpack.c.l.b16 %v75
    %v159 = vunpack.c.l.b16 %v76
    %v160 = vunpack.c.l.b16 %v77
    %v161 = vunpack.c.l.b16 %v78
    %v162 = vunpack.c.l.b16 %v79
    %v163 = vunpack.c.l.b16 %v80
    %v164 = vunpack.c.l.b16 %v81
    %v165 = vunpack.c.l.b16 %v82
    %v166 = vunpack.c.l.b16 %v83
    %v167 = vunpack.c.l.b16 %v84
    %v168 = vunpack.c.l.b16 %v85
    %v169 = vunpack.c.l.b16 %v86
    %v170 = vunpack.c.l.b16 %v87
    %v171 = vunpack.c.l.b16 %v88
    %v172 = vunpack.c.l.b16 %v89
    %v173 = vunpack.c.l.b16 %v90
    %v174 = vunpack.c.l.b16 %v91
    %v175 = vunpack.c.l.b16 %v92
    %v176 = vunpack.c.l.b16 %v93
    %v177 = vunpack.c.l.b16 %v94
    %v178 = vunpack.c.l.b16 %v95
    %v179 = vunpack.c.l.b16 %v96
    %v180 = vunpack.c.l.b16 %v97
    %v181 = vpack.c.b16 %v150, %v149
    %v182 = vpack.c.b16 %v152, %v151
    %v183 = vpack.c.b16 %v154, %v153
    %v184 = vpack.c.b16 %v156, %v155
    %v185 = vpack.c.b16 %v158, %v157
    %v186 = vpack.c.b16 %v160, %v159
    %v187 = vpack.c.b16 %v162, %v161
    %v188 = vpack.c.b16 %v164, %v163
    %v189 = vpack.c.b16 %v166, %v165
    %v190 = vpack.c.b16 %v168, %v167
    %v191 = vpack.c.b16 %v170, %v169
    %v192 = vpack.c.b16 %v172, %v171
    %v193 = vpack.c.b16 %v174, %v173
    %v194 = vpack.c.b16 %v176, %v175
    %v195 = vpack.c.b16 %v178, %v177
    %v196 = vpack.c.b16 %v180, %v179
    %213 = vmatpush.bf16.msra.mxu0 %v188
    %214 = vmatpush.bf16.msra.mxu0 %v187
    %215 = vmatpush.bf16.msra.mxu0 %v186
    %216 = vmatpush.bf16.msra.mxu0 %v185
    %217 = vmatpush.bf16.msra.mxu0 %v184
    %218 = vmatpush.bf16.msra.mxu0 %v183
    %219 = vmatpush.bf16.msra.mxu0 %v182
    %220 = vmatpush.bf16.msra.mxu0 %v181
    %221 = vmatmul.bf16.gmra.mxu0 %v113
    %v222 = vpop.f32.mrf.mxu0
    %v223 = vadd.f32 %v100, %v222
    %v224 = vpop.f32.mrf.mxu0
    %225 = vdwg.mxu0
    %226 = vmatpush.bf16.msra.mxu0 %v196
    %227 = vmatpush.bf16.msra.mxu0 %v195
    %228 = vmatpush.bf16.msra.mxu0 %v194
    %229 = vmatpush.bf16.msra.mxu0 %v193
    %230 = vmatpush.bf16.msra.mxu0 %v192
    %231 = vmatpush.bf16.msra.mxu0 %v191
    %232 = vmatpush.bf16.msra.mxu0 %v190
    %233 = vmatpush.bf16.msra.mxu0 %v189
    %234 = vmatmul.bf16.gmra.mxu0 %v114
    %v235 = vpop.f32.mrf.mxu0
    %v236 = vadd.f32 %v223, %v235
    %v237 = vpop.f32.mrf.mxu0
    %238 = vdwg.mxu0
    %239 = vst [vmem:[#allocation2] sm:$0x3] %v236
    // Predicated region
    $region14: #{mobilenetv3_forward.17} parent=1 // pred_check
      _
    $region15: #{mobilenetv3_forward.17} parent=1 // pred_check_branch
      %241 = sbr.rel (0) target = $region17
    $region16: #{mobilenetv3_forward.17} parent=1 // pred_region
      %243 = vsyncadd [#allocation3], 0
      %s245 = sshll.u32 [#allocation2], 4
      %s246 = int_to_ptr.vmem [resolvable:$true] %s245
      %s247 = sshll.u32 %s3, 4
      %s248 = int_to_ptr.hbm [resolvable:$true] %s247
      %250 = dma.vmem_to_hbm [thread:$0]  %s246, 32, %s248, [#allocation3]
    $region17: #{mobilenetv3_forward.17} parent=1 // pred_fallthru
      _
    // Predicated region
    $region18: #{mobilenetv3_forward.17} parent=1 // pred_check
      _
    $region19: #{mobilenetv3_forward.17} parent=1 // pred_check_branch
      %252 = sbr.rel (0) target = $region21
    $region20: #{mobilenetv3_forward.17} parent=1 // pred_region
      %254 = dma.done [#allocation3], 32
    $region21: #{mobilenetv3_forward.17} parent=1 // pred_fallthru
      _
    %255 = vsyncpa [#allocation3], 1

// kernel: mobilenetv3_forward.14
$region0: #{mobilenetv3_forward.14}
  #allocation0 [shape = 'u32[]', space=smem, size = 0x4, offset = 0x4, fixed_abs, tag = 'smem constant byte address 0x4 - core index']
  #allocation1 [shape = 'u32[72,128]{1,0:T(1,128)}', space=vmem, size = 0x9000, scoped, tag = 'internal scratch']
  %s0 = inlined_call_operand.vmem [shape: f32[2,5,5,128], index: 0, kind: input, shape index: {}]
  %s1 = inlined_call_operand.vmem [shape: f32[2,5,5,128], index: 1, kind: input, shape index: {}]
  %s2 = inlined_call_operand.vmem [shape: f32[2,5,5,128], index: 2, kind: input, shape index: {}]
  %s3 = inlined_call_operand.vmem [shape: f32[2,5,5,128], index: 3, kind: input, shape index: {}]
  %s4 = inlined_call_operand.vmem [shape: f32[9,128], index: 4, kind: input, shape index: {}]
  %s5 = inlined_call_operand.vmem [shape: f32[1,128], index: 5, kind: input, shape index: {}]
  %s6 = inlined_call_operand.vmem [shape: f32[1,128], index: 6, kind: input, shape index: {}]
  %s7 = inlined_call_operand.vmem [shape: bf16[128,128], index: 7, kind: input, shape index: {}]
  %s8 = inlined_call_operand.vmem [shape: bf16[128,128], index: 8, kind: input, shape index: {}]
  %s9 = inlined_call_operand.vmem [shape: f32[2,4,4,128], index: 9, kind: output, shape index: {}]
  %s10 = sld [smem:[#allocation0]]
  $region69: #{mobilenetv3_forward.14} parent=0
    _
  %s12 = ssub.s32 1, %s10
  %s13 = scalar_select 0, %s12, %s10
  loop: start=0, step=1, limit=4
  $region2: #{mobilenetv3_forward.14} parent=0 // loop_pre_header
    _
  $region3: #{mobilenetv3_forward.14} parent=0 // loop_header
    %s15 = sphi 0, %s19
    %p16 = scmp.ge.s32.totalorder %s15, 4
    %s25 = sphi 0, %s27
    %s28 = sphi 0, %s25
    %s29 = sphi 0, %s28
    %s45 = sphi 0, %s29
    %s51 = sphi 0, %s53
    %s54 = sphi 0, %s51
    %s55 = sphi 0, %s54
    %s71 = sphi 0, %s55
    %s77 = sphi 0, %s79
    %s80 = sphi 0, %s77
    %s81 = sphi 0, %s80
    %s97 = sphi 0, %s81
    %s103 = sphi 0, %s105
    %s106 = sphi 0, %s103
    %s107 = sphi 0, %s106
    %s123 = sphi 0, %s107
    %s127 = sphi 0, %s127
    %s129 = sphi 0, %s127
    %s130 = sphi 0, %s129
    %s144 = sphi 0, %s130
    %s148 = sphi 0, %s148
    %s150 = sphi 0, %s148
    %s151 = sphi 0, %s150
    %s165 = sphi 0, %s151
    %s169 = sphi 0, %s169
    %s171 = sphi 0, %s169
    %s172 = sphi 0, %s171
    %s186 = sphi 0, %s172
    %s190 = sphi 0, %s190
    %s192 = sphi 0, %s190
    %s193 = sphi 0, %s192
    %s207 = sphi 0, %s193
    %s211 = sphi 0, %s211
    %s213 = sphi 0, %s211
    %s214 = sphi 0, %s213
    %s228 = sphi 0, %s214
    %s234 = sphi 0, %s236
    %s237 = sphi 0, %s234
    %s238 = sphi 0, %s237
    %s254 = sphi 0, %s238
  $region4: #{mobilenetv3_forward.14} parent=0 // loop_header_branch
    %18 = sbr.rel (%p16) target = $region8
  $region5: #{mobilenetv3_forward.14} parent=0 // loop_body
    %s20 = ssub.s32 %s15, 1
    %s21 = ssub.s32 %s15, 2
    %s22 = sadd.s32 %s15, 1
    %s23 = ssub.s32 %s15, %s22
    %p24 = scmp.eq.s32.totalorder %s23, 0
    %s26 = sadd.s32 %s25, 1
    %s27 = scalar_select %p24, %s25, %s26
    %p30 = pneg %p24
    %p31 = scmp.eq.s32.totalorder %s15, 1
    %p32 = por %p30, %p31
    %p33 = scmp.ne.s32.totalorder %s25, %s28
    %p34 = scmp.eq.s32.totalorder %s15, 0
    %p35 = por %p33, %p34
    %p36 = scmp.ne.s32.totalorder %s25, %s28
    %p37 = scmp.eq.s32.totalorder %s20, 1
    %p38 = por %p36, %p37
    %p39 = scmp.ne.s32.totalorder %s28, %s29
    %p40 = scmp.eq.s32.totalorder %s20, 0
    %p41 = por %p39, %p40
    %p42 = scmp.ne.s32.totalorder %s28, %s29
    %p43 = scmp.eq.s32.totalorder %s21, 1
    %p44 = por %p42, %p43
    %p46 = scmp.ne.s32.totalorder %s29, %s45
    %p47 = scmp.eq.s32.totalorder %s21, 0
    %p48 = por %p46, %p47
    %s49 = ssub.s32 %s15, %s22
    %p50 = scmp.eq.s32.totalorder %s49, 0
    %s52 = sadd.s32 %s51, 1
    %s53 = scalar_select %p50, %s51, %s52
    %p56 = pneg %p50
    %p57 = scmp.eq.s32.totalorder %s15, 1
    %p58 = por %p56, %p57
    %p59 = scmp.ne.s32.totalorder %s51, %s54
    %p60 = scmp.eq.s32.totalorder %s15, 0
    %p61 = por %p59, %p60
    %p62 = scmp.ne.s32.totalorder %s51, %s54
    %p63 = scmp.eq.s32.totalorder %s20, 1
    %p64 = por %p62, %p63
    %p65 = scmp.ne.s32.totalorder %s54, %s55
    %p66 = scmp.eq.s32.totalorder %s20, 0
    %p67 = por %p65, %p66
    %p68 = scmp.ne.s32.totalorder %s54, %s55
    %p69 = scmp.eq.s32.totalorder %s21, 1
    %p70 = por %p68, %p69
    %p72 = scmp.ne.s32.totalorder %s55, %s71
    %p73 = scmp.eq.s32.totalorder %s21, 0
    %p74 = por %p72, %p73
    %s75 = ssub.s32 %s15, %s22
    %p76 = scmp.eq.s32.totalorder %s75, 0
    %s78 = sadd.s32 %s77, 1
    %s79 = scalar_select %p76, %s77, %s78
    %p82 = pneg %p76
    %p83 = scmp.eq.s32.totalorder %s15, 1
    %p84 = por %p82, %p83
    %p85 = scmp.ne.s32.totalorder %s77, %s80
    %p86 = scmp.eq.s32.totalorder %s15, 0
    %p87 = por %p85, %p86
    %p88 = scmp.ne.s32.totalorder %s77, %s80
    %p89 = scmp.eq.s32.totalorder %s20, 1
    %p90 = por %p88, %p89
    %p91 = scmp.ne.s32.totalorder %s80, %s81
    %p92 = scmp.eq.s32.totalorder %s20, 0
    %p93 = por %p91, %p92
    %p94 = scmp.ne.s32.totalorder %s80, %s81
    %p95 = scmp.eq.s32.totalorder %s21, 1
    %p96 = por %p94, %p95
    %p98 = scmp.ne.s32.totalorder %s81, %s97
    %p99 = scmp.eq.s32.totalorder %s21, 0
    %p100 = por %p98, %p99
    %s101 = ssub.s32 %s15, %s22
    %p102 = scmp.eq.s32.totalorder %s101, 0
    %s104 = sadd.s32 %s103, 1
    %s105 = scalar_select %p102, %s103, %s104
    %p108 = pneg %p102
    %p109 = scmp.eq.s32.totalorder %s15, 1
    %p110 = por %p108, %p109
    %p111 = scmp.ne.s32.totalorder %s103, %s106
    %p112 = scmp.eq.s32.totalorder %s15, 0
    %p113 = por %p111, %p112
    %p114 = scmp.ne.s32.totalorder %s103, %s106
    %p115 = scmp.eq.s32.totalorder %s20, 1
    %p116 = por %p114, %p115
    %p117 = scmp.ne.s32.totalorder %s106, %s107
    %p118 = scmp.eq.s32.totalorder %s20, 0
    %p119 = por %p117, %p118
    %p120 = scmp.ne.s32.totalorder %s106, %s107
    %p121 = scmp.eq.s32.totalorder %s21, 1
    %p122 = por %p120, %p121
    %p124 = scmp.ne.s32.totalorder %s107, %s123
    %p125 = scmp.eq.s32.totalorder %s21, 0
    %p126 = por %p124, %p125
    %s128 = sadd.s32 %s127, 1
    %p131 = scmp.eq.s32.totalorder %s15, 1
    %p132 = scmp.ne.s32.totalorder %s127, %s129
    %p133 = scmp.eq.s32.totalorder %s15, 0
    %p134 = por %p132, %p133
    %p135 = scmp.ne.s32.totalorder %s127, %s129
    %p136 = scmp.eq.s32.totalorder %s20, 1
    %p137 = por %p135, %p136
    %p138 = scmp.ne.s32.totalorder %s129, %s130
    %p139 = scmp.eq.s32.totalorder %s20, 0
    %p140 = por %p138, %p139
    %p141 = scmp.ne.s32.totalorder %s129, %s130
    %p142 = scmp.eq.s32.totalorder %s21, 1
    %p143 = por %p141, %p142
    %p145 = scmp.ne.s32.totalorder %s130, %s144
    %p146 = scmp.eq.s32.totalorder %s21, 0
    %p147 = por %p145, %p146
    %s149 = sadd.s32 %s148, 1
    %p152 = scmp.eq.s32.totalorder %s15, 1
    %p153 = scmp.ne.s32.totalorder %s148, %s150
    %p154 = scmp.eq.s32.totalorder %s15, 0
    %p155 = por %p153, %p154
    %p156 = scmp.ne.s32.totalorder %s148, %s150
    %p157 = scmp.eq.s32.totalorder %s20, 1
    %p158 = por %p156, %p157
    %p159 = scmp.ne.s32.totalorder %s150, %s151
    %p160 = scmp.eq.s32.totalorder %s20, 0
    %p161 = por %p159, %p160
    %p162 = scmp.ne.s32.totalorder %s150, %s151
    %p163 = scmp.eq.s32.totalorder %s21, 1
    %p164 = por %p162, %p163
    %p166 = scmp.ne.s32.totalorder %s151, %s165
    %p167 = scmp.eq.s32.totalorder %s21, 0
    %p168 = por %p166, %p167
    %s170 = sadd.s32 %s169, 1
    %p173 = scmp.eq.s32.totalorder %s15, 1
    %p174 = scmp.ne.s32.totalorder %s169, %s171
    %p175 = scmp.eq.s32.totalorder %s15, 0
    %p176 = por %p174, %p175
    %p177 = scmp.ne.s32.totalorder %s169, %s171
    %p178 = scmp.eq.s32.totalorder %s20, 1
    %p179 = por %p177, %p178
    %p180 = scmp.ne.s32.totalorder %s171, %s172
    %p181 = scmp.eq.s32.totalorder %s20, 0
    %p182 = por %p180, %p181
    %p183 = scmp.ne.s32.totalorder %s171, %s172
    %p184 = scmp.eq.s32.totalorder %s21, 1
    %p185 = por %p183, %p184
    %p187 = scmp.ne.s32.totalorder %s172, %s186
    %p188 = scmp.eq.s32.totalorder %s21, 0
    %p189 = por %p187, %p188
    %s191 = sadd.s32 %s190, 1
    %p194 = scmp.eq.s32.totalorder %s15, 1
    %p195 = scmp.ne.s32.totalorder %s190, %s192
    %p196 = scmp.eq.s32.totalorder %s15, 0
    %p197 = por %p195, %p196
    %p198 = scmp.ne.s32.totalorder %s190, %s192
    %p199 = scmp.eq.s32.totalorder %s20, 1
    %p200 = por %p198, %p199
    %p201 = scmp.ne.s32.totalorder %s192, %s193
    %p202 = scmp.eq.s32.totalorder %s20, 0
    %p203 = por %p201, %p202
    %p204 = scmp.ne.s32.totalorder %s192, %s193
    %p205 = scmp.eq.s32.totalorder %s21, 1
    %p206 = por %p204, %p205
    %p208 = scmp.ne.s32.totalorder %s193, %s207
    %p209 = scmp.eq.s32.totalorder %s21, 0
    %p210 = por %p208, %p209
    %s212 = sadd.s32 %s211, 1
    %p215 = scmp.eq.s32.totalorder %s15, 1
    %p216 = scmp.ne.s32.totalorder %s211, %s213
    %p217 = scmp.eq.s32.totalorder %s15, 0
    %p218 = por %p216, %p217
    %p219 = scmp.ne.s32.totalorder %s211, %s213
    %p220 = scmp.eq.s32.totalorder %s20, 1
    %p221 = por %p219, %p220
    %p222 = scmp.ne.s32.totalorder %s213, %s214
    %p223 = scmp.eq.s32.totalorder %s20, 0
    %p224 = por %p222, %p223
    %p225 = scmp.ne.s32.totalorder %s213, %s214
    %p226 = scmp.eq.s32.totalorder %s21, 1
    %p227 = por %p225, %p226
    %p229 = scmp.ne.s32.totalorder %s214, %s228
    %p230 = scmp.eq.s32.totalorder %s21, 0
    %p231 = por %p229, %p230
    %s232 = ssub.s32 %s15, %s22
    %p233 = scmp.eq.s32.totalorder %s232, 0
    %s235 = sadd.s32 %s234, 1
    %s236 = scalar_select %p233, %s234, %s235
    %p239 = pneg %p233
    %p240 = scmp.eq.s32.totalorder %s15, 1
    %p241 = por %p239, %p240
    %p242 = scmp.ne.s32.totalorder %s234, %s237
    %p243 = scmp.eq.s32.totalorder %s15, 0
    %p244 = por %p242, %p243
    %p245 = scmp.ne.s32.totalorder %s234, %s237
    %p246 = scmp.eq.s32.totalorder %s20, 1
    %p247 = por %p245, %p246
    %p248 = scmp.ne.s32.totalorder %s237, %s238
    %p249 = scmp.eq.s32.totalorder %s20, 0
    %p250 = por %p248, %p249
    %p251 = scmp.ne.s32.totalorder %s237, %s238
    %p252 = scmp.eq.s32.totalorder %s21, 1
    %p253 = por %p251, %p252
    %p255 = scmp.ne.s32.totalorder %s238, %s254
    %p256 = scmp.eq.s32.totalorder %s21, 0
    %p257 = por %p255, %p256
    %p258 = scmp.le.s32.totalorder 1, %s15
    %p259 = scmp.lt.s32.totalorder %s15, 3
    %p260 = pnand %p258, %p259
    %p261 = pneg %p260
    // Predicated region
    $region9: #{mobilenetv3_forward.14} parent=5 // pred_check
      _
    $region10: #{mobilenetv3_forward.14} parent=5 // pred_check_branch
      %263 = sbr.rel (%p260) target = $region12
    $region11: #{mobilenetv3_forward.14} parent=5 // pred_region
      %s264 = ssub.s32 %s15, 1
      // Predicated region
      $region13: #{mobilenetv3_forward.14} parent=11 // pred_check
        %p265 = pneg %p140
      $region14: #{mobilenetv3_forward.14} parent=11 // pred_check_branch
        %267 = sbr.rel (%p265) target = $region16
      $region15: #{mobilenetv3_forward.14} parent=11 // pred_region
        _
      $region16: #{mobilenetv3_forward.14} parent=11 // pred_fallthru
        _
      // Predicated region
      $region17: #{mobilenetv3_forward.14} parent=11 // pred_check
        %p268 = pneg %p161
      $region18: #{mobilenetv3_forward.14} parent=11 // pred_check_branch
        %270 = sbr.rel (%p268) target = $region20
      $region19: #{mobilenetv3_forward.14} parent=11 // pred_region
        _
      $region20: #{mobilenetv3_forward.14} parent=11 // pred_fallthru
        _
      // Predicated region
      $region21: #{mobilenetv3_forward.14} parent=11 // pred_check
        %p271 = pneg %p182
      $region22: #{mobilenetv3_forward.14} parent=11 // pred_check_branch
        %273 = sbr.rel (%p271) target = $region24
      $region23: #{mobilenetv3_forward.14} parent=11 // pred_region
        _
      $region24: #{mobilenetv3_forward.14} parent=11 // pred_fallthru
        _
      // Predicated region
      $region25: #{mobilenetv3_forward.14} parent=11 // pred_check
        %p274 = pneg %p203
      $region26: #{mobilenetv3_forward.14} parent=11 // pred_check_branch
        %276 = sbr.rel (%p274) target = $region28
      $region27: #{mobilenetv3_forward.14} parent=11 // pred_region
        _
      $region28: #{mobilenetv3_forward.14} parent=11 // pred_fallthru
        _
      // Predicated region
      $region29: #{mobilenetv3_forward.14} parent=11 // pred_check
        %p277 = pneg %p224
      $region30: #{mobilenetv3_forward.14} parent=11 // pred_check_branch
        %279 = sbr.rel (%p277) target = $region32
      $region31: #{mobilenetv3_forward.14} parent=11 // pred_region
        _
      $region32: #{mobilenetv3_forward.14} parent=11 // pred_fallthru
        _
    $region12: #{mobilenetv3_forward.14} parent=5 // pred_fallthru
      _
    %p280 = scmp.lt.s32.totalorder %s15, 2
    // Predicated region
    $region33: #{mobilenetv3_forward.14} parent=5 // pred_check
      %p281 = pneg %p280
    $region34: #{mobilenetv3_forward.14} parent=5 // pred_check_branch
      %283 = sbr.rel (%p281) target = $region36
    $region35: #{mobilenetv3_forward.14} parent=5 // pred_region
      // Predicated region
      $region37: #{mobilenetv3_forward.14} parent=35 // pred_check
        %p284 = pneg %p35
      $region38: #{mobilenetv3_forward.14} parent=35 // pred_check_branch
        %286 = sbr.rel (%p284) target = $region40
      $region39: #{mobilenetv3_forward.14} parent=35 // pred_region
        %p287 = scmp.lt.s32.totalorder %s15, 1
        %s288 = scalar_select %p287, %s15, 1
        %s289 = smul.addr %s288, 5
        %s290 = smul.addr %s289, 8
        %s291 = scalar_lea.vmem %s0, %s290
      $region40: #{mobilenetv3_forward.14} parent=35 // pred_fallthru
        _
      // Predicated region
      $region41: #{mobilenetv3_forward.14} parent=35 // pred_check
        %p292 = pneg %p61
      $region42: #{mobilenetv3_forward.14} parent=35 // pred_check_branch
        %294 = sbr.rel (%p292) target = $region44
      $region43: #{mobilenetv3_forward.14} parent=35 // pred_region
        %p295 = scmp.lt.s32.totalorder %s15, 1
        %s296 = scalar_select %p295, %s15, 1
        %s297 = smul.addr %s296, 5
        %s298 = smul.addr %s297, 8
        %s299 = scalar_lea.vmem %s1, %s298
      $region44: #{mobilenetv3_forward.14} parent=35 // pred_fallthru
        _
      // Predicated region
      $region45: #{mobilenetv3_forward.14} parent=35 // pred_check
        %p300 = pneg %p87
      $region46: #{mobilenetv3_forward.14} parent=35 // pred_check_branch
        %302 = sbr.rel (%p300) target = $region48
      $region47: #{mobilenetv3_forward.14} parent=35 // pred_region
        %p303 = scmp.lt.s32.totalorder %s15, 1
        %s304 = scalar_select %p303, %s15, 1
        %s305 = smul.addr %s304, 5
        %s306 = smul.addr %s305, 8
        %s307 = scalar_lea.vmem %s2, %s306
      $region48: #{mobilenetv3_forward.14} parent=35 // pred_fallthru
        _
      // Predicated region
      $region49: #{mobilenetv3_forward.14} parent=35 // pred_check
        %p308 = pneg %p113
      $region50: #{mobilenetv3_forward.14} parent=35 // pred_check_branch
        %310 = sbr.rel (%p308) target = $region52
      $region51: #{mobilenetv3_forward.14} parent=35 // pred_region
        %p311 = scmp.lt.s32.totalorder %s15, 1
        %s312 = scalar_select %p311, %s15, 1
        %s313 = smul.addr %s312, 5
        %s314 = smul.addr %s313, 8
        %s315 = scalar_lea.vmem %s3, %s314
      $region52: #{mobilenetv3_forward.14} parent=35 // pred_fallthru
        _
    $region36: #{mobilenetv3_forward.14} parent=5 // pred_fallthru
      _
    %p316 = scmp.le.s32.totalorder 1, %s15
    %p317 = scmp.lt.s32.totalorder %s15, 3
    %p318 = pnand %p316, %p317
    %p319 = pneg %p318
    // Predicated region
    $region53: #{mobilenetv3_forward.14} parent=5 // pred_check
      _
    $region54: #{mobilenetv3_forward.14} parent=5 // pred_check_branch
      %321 = sbr.rel (%p318) target = $region56
    $region55: #{mobilenetv3_forward.14} parent=5 // pred_region
      %s322 = ssub.s32 %s15, 1
      %p323 = scmp.lt.s32.totalorder %s20, 1
      %s324 = scalar_select %p323, %s20, 1
      %s325 = smul.addr %s324, 5
      %s326 = smul.addr %s325, 8
      %s327 = scalar_lea.vmem %s0, %s326
      %p328 = pneg %p41
      %p329 = pneg %p38
      %p330 = scmp.lt.s32.totalorder %s20, 1
      %s331 = scalar_select %p330, %s20, 1
      %s332 = smul.addr %s331, 5
      %s333 = smul.addr %s332, 8
      %s334 = scalar_lea.vmem %s1, %s333
      %p335 = pneg %p67
      %p336 = pneg %p64
      %p337 = scmp.lt.s32.totalorder %s20, 1
      %s338 = scalar_select %p337, %s20, 1
      %s339 = smul.addr %s338, 5
      %s340 = smul.addr %s339, 8
      %s341 = scalar_lea.vmem %s2, %s340
      %p342 = pneg %p93
      %p343 = pneg %p90
      %p344 = scmp.lt.s32.totalorder %s20, 1
      %s345 = scalar_select %p344, %s20, 1
      %s346 = smul.addr %s345, 5
      %s347 = smul.addr %s346, 8
      %s348 = scalar_lea.vmem %s3, %s347
      %p349 = pneg %p119
      %p350 = pneg %p116
      %p351 = pneg %p140
      %p352 = pneg %p137
      %p353 = pneg %p161
      %p354 = pneg %p158
      %p355 = pneg %p182
      %p356 = pneg %p179
      %p357 = pneg %p203
      %p358 = pneg %p200
      %p359 = pneg %p224
      %p360 = pneg %p221
      %p361 = pneg %p250
      %p362 = pneg %p247
      %p363 = scmp.lt.s32.totalorder %s20, 1
      %s364 = scalar_select %p363, %s20, 1
      %s365 = smul.addr %s364, 4
      %s366 = smul.addr %s365, 4
      %s367 = scalar_lea.vmem %s9, %s366
      %p368 = scmp.lt.s32.totalorder %s20, 1
      %s369 = scalar_select %p368, %s20, 1
      %s370 = smul.addr %s369, 5
      %s371 = smul.addr %s370, 8
      %s372 = scalar_lea.vmem %s0, %s371
      %p373 = scmp.lt.s32.totalorder %s20, 1
      %s374 = scalar_select %p373, %s20, 1
      %s375 = smul.addr %s374, 5
      %s376 = smul.addr %s375, 8
      %s377 = scalar_lea.vmem %s1, %s376
      %p378 = scmp.lt.s32.totalorder %s20, 1
      %s379 = scalar_select %p378, %s20, 1
      %s380 = smul.addr %s379, 5
      %s381 = smul.addr %s380, 8
      %s382 = scalar_lea.vmem %s2, %s381
      %p383 = scmp.lt.s32.totalorder %s20, 1
      %s384 = scalar_select %p383, %s20, 1
      %s385 = smul.addr %s384, 5
      %s386 = smul.addr %s385, 8
      %s387 = scalar_lea.vmem %s3, %s386
      %p388 = scmp.lt.s32.totalorder %s20, 1
      %s389 = scalar_select %p388, %s20, 1
      %s390 = smul.addr %s389, 4
      %s391 = smul.addr %s390, 4
      %s392 = scalar_lea.vmem %s9, %s391
      %v393 = vld [vmem:[%s4] sm:$0xff]
      %v394 = vld [vmem:[%s4 + $0x8] sm:$0x1]
      %v395 = vld [vmem:[%s372] sm:$0xf]
      %v396 = vld [vmem:[%s372 + $0x8] sm:$0xf]
      %v397 = vld [vmem:[%s372 + $0x10] sm:$0xf]
      %v398 = vld [vmem:[%s372 + $0x18] sm:$0xf]
      %v399 = vperm.slane %v393, 0
      %v400 = vmul.f32 %v395, %v399
      %v401 = vmul.f32 %v396, %v399
      %v402 = vmul.f32 %v397, %v399
      %v403 = vmul.f32 %v398, %v399
      %v404 = vadd.f32 %v400, 0.0
      %v405 = vadd.f32 %v401, 0.0
      %v406 = vadd.f32 %v402, 0.0
      %v407 = vadd.f32 %v403, 0.0
      %v408 = vld [vmem:[%s377] sm:$0xf]
      %v409 = vld [vmem:[%s377 + $0x8] sm:$0xf]
      %v410 = vld [vmem:[%s377 + $0x10] sm:$0xf]
      %v411 = vld [vmem:[%s377 + $0x18] sm:$0xf]
      %v412 = vperm.slane %v393, 1
      %v413 = vmul.f32 %v408, %v412
      %v414 = vmul.f32 %v409, %v412
      %v415 = vmul.f32 %v410, %v412
      %v416 = vmul.f32 %v411, %v412
      %v417 = vadd.f32 %v404, %v413
      %v418 = vadd.f32 %v405, %v414
      %v419 = vadd.f32 %v406, %v415
      %v420 = vadd.f32 %v407, %v416
      %v421 = vld [vmem:[%s372 + $0x1] sm:$0xf]
      %v422 = vld [vmem:[%s372 + $0x9] sm:$0xf]
      %v423 = vld [vmem:[%s372 + $0x11] sm:$0xf]
      %v424 = vld [vmem:[%s372 + $0x19] sm:$0xf]
      %v425 = vperm.slane %v393, 2
      %v426 = vmul.f32 %v421, %v425
      %v427 = vmul.f32 %v422, %v425
      %v428 = vmul.f32 %v423, %v425
      %v429 = vmul.f32 %v424, %v425
      %v430 = vadd.f32 %v417, %v426
      %v431 = vadd.f32 %v418, %v427
      %v432 = vadd.f32 %v419, %v428
      %v433 = vadd.f32 %v420, %v429
      %v434 = vld [vmem:[%s382] sm:$0xf]
      %v435 = vld [vmem:[%s382 + $0x8] sm:$0xf]
      %v436 = vld [vmem:[%s382 + $0x10] sm:$0xf]
      %v437 = vld [vmem:[%s382 + $0x18] sm:$0xf]
      %v438 = vperm.slane %v393, 3
      %v439 = vmul.f32 %v434, %v438
      %v440 = vmul.f32 %v435, %v438
      %v441 = vmul.f32 %v436, %v438
      %v442 = vmul.f32 %v437, %v438
      %v443 = vadd.f32 %v430, %v439
      %v444 = vadd.f32 %v431, %v440
      %v445 = vadd.f32 %v432, %v441
      %v446 = vadd.f32 %v433, %v442
      %v447 = vld [vmem:[%s387] sm:$0xf]
      %v448 = vld [vmem:[%s387 + $0x8] sm:$0xf]
      %v449 = vld [vmem:[%s387 + $0x10] sm:$0xf]
      %v450 = vld [vmem:[%s387 + $0x18] sm:$0xf]
      %v451 = vperm.slane %v393, 4
      %v452 = vmul.f32 %v447, %v451
      %v453 = vmul.f32 %v448, %v451
      %v454 = vmul.f32 %v449, %v451
      %v455 = vmul.f32 %v450, %v451
      %v456 = vadd.f32 %v443, %v452
      %v457 = vadd.f32 %v444, %v453
      %v458 = vadd.f32 %v445, %v454
      %v459 = vadd.f32 %v446, %v455
      %v460 = vld [vmem:[%s382 + $0x1] sm:$0xf]
      %v461 = vld [vmem:[%s382 + $0x9] sm:$0xf]
      %v462 = vld [vmem:[%s382 + $0x11] sm:$0xf]
      %v463 = vld [vmem:[%s382 + $0x19] sm:$0xf]
      %v464 = vperm.slane %v393, 5
      %v465 = vmul.f32 %v460, %v464
      %v466 = vmul.f32 %v461, %v464
      %v467 = vmul.f32 %v462, %v464
      %v468 = vmul.f32 %v463, %v464
      %v469 = vadd.f32 %v456, %v465
      %v470 = vadd.f32 %v457, %v466
      %v471 = vadd.f32 %v458, %v467
      %v472 = vadd.f32 %v459, %v468
      %s473 = scalar_lea.vmem %s372, 8
      %v474 = vld [vmem:[%s473] sm:$0xf]
      %v475 = vld [vmem:[%s473 + $0x8] sm:$0xf]
      %v476 = vld [vmem:[%s473 + $0x10] sm:$0xf]
      %v477 = vld [vmem:[%s473 + $0x18] sm:$0xf]
      %v478 = vperm.slane %v393, 6
      %v479 = vmul.f32 %v474, %v478
      %v480 = vmul.f32 %v475, %v478
      %v481 = vmul.f32 %v476, %v478
      %v482 = vmul.f32 %v477, %v478
      %v483 = vadd.f32 %v469, %v479
      %v484 = vadd.f32 %v470, %v480
      %v485 = vadd.f32 %v471, %v481
      %v486 = vadd.f32 %v472, %v482
      %s487 = scalar_lea.vmem %s377, 8
      %v488 = vld [vmem:[%s487] sm:$0xf]
      %v489 = vld [vmem:[%s487 + $0x8] sm:$0xf]
      %v490 = vld [vmem:[%s487 + $0x10] sm:$0xf]
      %v491 = vld [vmem:[%s487 + $0x18] sm:$0xf]
      %v492 = vperm.slane %v393, 7
      %v493 = vmul.f32 %v488, %v492
      %v494 = vmul.f32 %v489, %v492
      %v495 = vmul.f32 %v490, %v492
      %v496 = vmul.f32 %v491, %v492
      %v497 = vadd.f32 %v483, %v493
      %v498 = vadd.f32 %v484, %v494
      %v499 = vadd.f32 %v485, %v495
      %v500 = vadd.f32 %v486, %v496
      %v501 = vld [vmem:[%s473 + $0x1] sm:$0xf]
      %v502 = vld [vmem:[%s473 + $0x9] sm:$0xf]
      %v503 = vld [vmem:[%s473 + $0x11] sm:$0xf]
      %v504 = vld [vmem:[%s473 + $0x19] sm:$0xf]
      %v505 = vperm.slane %v394, 0
      %v506 = vmul.f32 %v501, %v505
      %v507 = vmul.f32 %v502, %v505
      %v508 = vmul.f32 %v503, %v505
      %v509 = vmul.f32 %v504, %v505
      %v510 = vadd.f32 %v497, %v506
      %v511 = vadd.f32 %v498, %v507
      %v512 = vadd.f32 %v499, %v508
      %v513 = vadd.f32 %v500, %v509
      %v514 = vld [vmem:[%s5] sm:$0x1]
      %v516 = vperm.slane %v514, 0
      %v518 = vmul.f32 %v510, %v516
      %v519 = vmul.f32 %v511, %v516
      %v520 = vmul.f32 %v512, %v516
      %v521 = vmul.f32 %v513, %v516
      %v522 = vld [vmem:[%s6] sm:$0x1]
      %v524 = vperm.slane %v522, 0
      %v526 = vadd.f32 %v518, %v524
      %v527 = vadd.f32 %v519, %v524
      %v528 = vadd.f32 %v520, %v524
      %v529 = vadd.f32 %v521, %v524
      %534 = vst [vmem:[#allocation1] ss:$2 sm:$0xff] %v526
      %s535 = scalar_lea.vmem [#allocation1], 1
      %536 = vst [vmem:[%s535] ss:$2 sm:$0xff] %v527
      %s537 = scalar_lea.vmem [#allocation1], 16
      %538 = vst [vmem:[%s537] ss:$2 sm:$0xff] %v528
      %s539 = scalar_lea.vmem [#allocation1], 17
      %540 = vst [vmem:[%s539] ss:$2 sm:$0xff] %v529
      %v541 = vld.sshfl [vmem:[#allocation1] sm:$0xff pattern:$0x75316420]
      %v542 = vld.sshfl [vmem:[#allocation1 + $0x10] sm:$0xff pattern:$0x75316420]
      %v545 = vadd.f32 %v541, %v542
      %v546 = vrot.slane %v545, 4
      %v547 = vadd.f32 %v545, %v546
      %v548 = vrot.slane %v547, 2
      %v549 = vadd.f32 %v547, %v548
      %v550 = vrot.slane %v549, 1
      %v551 = vadd.f32 %v549, %v550
      %v552 = vrcp.pop 16.0
      %v553 = vmul.f32 16.0, %v552
      %v554 = vsub.f32 1.0, %v553
      %v555 = vmul.f32 %v552, %v554
      %v556 = vadd.f32 %v552, %v555
      %vm557 = vweird.f32 %v552
      %v558 = vsel %vm557, %v552, %v556
      %v559 = vmul.f32 %v551, %v558
      %v560 = vpack.c.bf16 %v559, %v559
      %v561 = vld [vmem:[%s7] sm:$0xf]
      %v562 = vld [vmem:[%s7 + $0x4] sm:$0xf]
      %v563 = vld [vmem:[%s7 + $0x8] sm:$0xf]
      %v564 = vld [vmem:[%s7 + $0xc] sm:$0xf]
      %v565 = vld [vmem:[%s7 + $0x10] sm:$0xf]
      %v566 = vld [vmem:[%s7 + $0x14] sm:$0xf]
      %v567 = vld [vmem:[%s7 + $0x18] sm:$0xf]
      %v568 = vld [vmem:[%s7 + $0x1c] sm:$0xf]
      %v569 = vld [vmem:[%s7 + $0x20] sm:$0xf]
      %v570 = vld [vmem:[%s7 + $0x24] sm:$0xf]
      %v571 = vld [vmem:[%s7 + $0x28] sm:$0xf]
      %v572 = vld [vmem:[%s7 + $0x2c] sm:$0xf]
      %v573 = vld [vmem:[%s7 + $0x30] sm:$0xf]
      %v574 = vld [vmem:[%s7 + $0x34] sm:$0xf]
      %v575 = vld [vmem:[%s7 + $0x38] sm:$0xf]
      %v576 = vld [vmem:[%s7 + $0x3c] sm:$0xf]
      %v593 = vunpack.c.l.b16 %v561
      %v594 = vunpack.c.l.b16 %v562
      %v595 = vunpack.c.l.b16 %v563
      %v596 = vunpack.c.l.b16 %v564
      %v597 = vunpack.c.l.b16 %v565
      %v598 = vunpack.c.l.b16 %v566
      %v599 = vunpack.c.l.b16 %v567
      %v600 = vunpack.c.l.b16 %v568
      %v601 = vunpack.c.l.b16 %v569
      %v602 = vunpack.c.l.b16 %v570
      %v603 = vunpack.c.l.b16 %v571
      %v604 = vunpack.c.l.b16 %v572
      %v605 = vunpack.c.l.b16 %v573
      %v606 = vunpack.c.l.b16 %v574
      %v607 = vunpack.c.l.b16 %v575
      %v608 = vunpack.c.l.b16 %v576
      %v609 = vpack.c.b16 %v594, %v593
      %v610 = vpack.c.b16 %v596, %v595
      %v611 = vpack.c.b16 %v598, %v597
      %v612 = vpack.c.b16 %v600, %v599
      %v613 = vpack.c.b16 %v602, %v601
      %v614 = vpack.c.b16 %v604, %v603
      %v615 = vpack.c.b16 %v606, %v605
      %v616 = vpack.c.b16 %v608, %v607
      %625 = vmatpush.bf16.msra.mxu0 %v616
      %626 = vmatpush.bf16.msra.mxu0 %v615
      %627 = vmatpush.bf16.msra.mxu0 %v614
      %628 = vmatpush.bf16.msra.mxu0 %v613
      %629 = vmatpush.bf16.msra.mxu0 %v612
      %630 = vmatpush.bf16.msra.mxu0 %v611
      %631 = vmatpush.bf16.msra.mxu0 %v610
      %632 = vmatpush.bf16.msra.mxu0 %v609
      %633 = vmatmul.bf16.gmra.mxu0 %v560
      %v634 = vpop.f32.mrf.mxu0
      %v635 = vadd.f32 0.0, %v634
      %v636 = vpop.f32.mrf.mxu0
      %637 = vdwg.mxu0
      %v638 = vmax.f32 %v635, 0.0
      %v639 = vpack.c.bf16 %v638, %v638
      %v640 = vld [vmem:[%s8] sm:$0xf]
      %v641 = vld [vmem:[%s8 + $0x4] sm:$0xf]
      %v642 = vld [vmem:[%s8 + $0x8] sm:$0xf]
      %v643 = vld [vmem:[%s8 + $0xc] sm:$0xf]
      %v644 = vld [vmem:[%s8 + $0x10] sm:$0xf]
      %v645 = vld [vmem:[%s8 + $0x14] sm:$0xf]
      %v646 = vld [vmem:[%s8 + $0x18] sm:$0xf]
      %v647 = vld [vmem:[%s8 + $0x1c] sm:$0xf]
      %v648 = vld [vmem:[%s8 + $0x20] sm:$0xf]
      %v649 = vld [vmem:[%s8 + $0x24] sm:$0xf]
      %v650 = vld [vmem:[%s8 + $0x28] sm:$0xf]
      %v651 = vld [vmem:[%s8 + $0x2c] sm:$0xf]
      %v652 = vld [vmem:[%s8 + $0x30] sm:$0xf]
      %v653 = vld [vmem:[%s8 + $0x34] sm:$0xf]
      %v654 = vld [vmem:[%s8 + $0x38] sm:$0xf]
      %v655 = vld [vmem:[%s8 + $0x3c] sm:$0xf]
      %v672 = vunpack.c.l.b16 %v640
      %v673 = vunpack.c.l.b16 %v641
      %v674 = vunpack.c.l.b16 %v642
      %v675 = vunpack.c.l.b16 %v643
      %v676 = vunpack.c.l.b16 %v644
      %v677 = vunpack.c.l.b16 %v645
      %v678 = vunpack.c.l.b16 %v646
      %v679 = vunpack.c.l.b16 %v647
      %v680 = vunpack.c.l.b16 %v648
      %v681 = vunpack.c.l.b16 %v649
      %v682 = vunpack.c.l.b16 %v650
      %v683 = vunpack.c.l.b16 %v651
      %v684 = vunpack.c.l.b16 %v652
      %v685 = vunpack.c.l.b16 %v653
      %v686 = vunpack.c.l.b16 %v654
      %v687 = vunpack.c.l.b16 %v655
      %v688 = vpack.c.b16 %v673, %v672
      %v689 = vpack.c.b16 %v675, %v674
      %v690 = vpack.c.b16 %v677, %v676
      %v691 = vpack.c.b16 %v679, %v678
      %v692 = vpack.c.b16 %v681, %v680
      %v693 = vpack.c.b16 %v683, %v682
      %v694 = vpack.c.b16 %v685, %v684
      %v695 = vpack.c.b16 %v687, %v686
      %704 = vmatpush.bf16.msra.mxu0 %v695
      %705 = vmatpush.bf16.msra.mxu0 %v694
      %706 = vmatpush.bf16.msra.mxu0 %v693
      %707 = vmatpush.bf16.msra.mxu0 %v692
      %708 = vmatpush.bf16.msra.mxu0 %v691
      %709 = vmatpush.bf16.msra.mxu0 %v690
      %710 = vmatpush.bf16.msra.mxu0 %v689
      %711 = vmatpush.bf16.msra.mxu0 %v688
      %712 = vmatmul.bf16.gmra.mxu0 %v639
      %v713 = vpop.f32.mrf.mxu0
      %v714 = vadd.f32 3.0, %v713
      %v715 = vpop.f32.mrf.mxu0
      %716 = vdwg.mxu0
      %v717 = vmax.f32 %v714, 0.0
      %v718 = vmin.f32 %v717, 6.0
      %v719 = vmul.f32 %v718, 0.16666667
      %v720 = vperm.slane %v719, 0
      %v721 = vmul.f32 %v526, %v720
      %v722 = vmul.f32 %v527, %v720
      %v723 = vmul.f32 %v528, %v720
      %v724 = vmul.f32 %v529, %v720
      %v725 = vadd.f32 %v721, 3.0
      %v726 = vadd.f32 %v722, 3.0
      %v727 = vadd.f32 %v723, 3.0
      %v728 = vadd.f32 %v724, 3.0
      %v729 = vmax.f32 %v725, 0.0
      %v730 = vmax.f32 %v726, 0.0
      %v731 = vmax.f32 %v727, 0.0
      %v732 = vmax.f32 %v728, 0.0
      %v733 = vmin.f32 %v729, 6.0
      %v734 = vmin.f32 %v730, 6.0
      %v735 = vmin.f32 %v731, 6.0
      %v736 = vmin.f32 %v732, 6.0
      %v737 = vmul.f32 %v721, %v733
      %v738 = vmul.f32 %v722, %v734
      %v739 = vmul.f32 %v723, %v735
      %v740 = vmul.f32 %v724, %v736
      %v741 = vmul.f32 %v737, 0.16666667
      %v742 = vmul.f32 %v738, 0.16666667
      %v743 = vmul.f32 %v739, 0.16666667
      %v744 = vmul.f32 %v740, 0.16666667
      %745 = vst [vmem:[%s392] sm:$0xf] %v741
      %746 = vst [vmem:[%s392 + $0x4] sm:$0xf] %v742
      %747 = vst [vmem:[%s392 + $0x8] sm:$0xf] %v743
      %748 = vst [vmem:[%s392 + $0xc] sm:$0xf] %v744
      %p749 = scmp.lt.s32.totalorder %s20, 1
      %s750 = scalar_select %p749, %s20, 1
      %s751 = smul.addr %s750, 4
      %s752 = smul.addr %s751, 4
      %s753 = scalar_lea.vmem %s9, %s752
      // Predicated region
      $region57: #{mobilenetv3_forward.14} parent=55 // pred_check
        %p754 = pneg %p247
      $region58: #{mobilenetv3_forward.14} parent=55 // pred_check_branch
        %756 = sbr.rel (%p754) target = $region60
      $region59: #{mobilenetv3_forward.14} parent=55 // pred_region
        _
      $region60: #{mobilenetv3_forward.14} parent=55 // pred_fallthru
        _
    $region56: #{mobilenetv3_forward.14} parent=5 // pred_fallthru
      _
    %p757 = scmp.le.s32.totalorder 2, %s15
    // Predicated region
    $region61: #{mobilenetv3_forward.14} parent=5 // pred_check
      %p758 = pneg %p757
    $region62: #{mobilenetv3_forward.14} parent=5 // pred_check_branch
      %760 = sbr.rel (%p758) target = $region64
    $region63: #{mobilenetv3_forward.14} parent=5 // pred_region
      %s761 = ssub.s32 %s15, 2
      // Predicated region
      $region65: #{mobilenetv3_forward.14} parent=63 // pred_check
        %p762 = pneg %p253
      $region66: #{mobilenetv3_forward.14} parent=63 // pred_check_branch
        %764 = sbr.rel (%p762) target = $region68
      $region67: #{mobilenetv3_forward.14} parent=63 // pred_region
        %p765 = scmp.lt.s32.totalorder %s21, 1
        %s766 = scalar_select %p765, %s21, 1
        %s767 = smul.addr %s766, 4
        %s768 = smul.addr %s767, 4
        %s769 = scalar_lea.vmem %s9, %s768
      $region68: #{mobilenetv3_forward.14} parent=63 // pred_fallthru
        _
    $region64: #{mobilenetv3_forward.14} parent=5 // pred_fallthru
      _
  $region6: #{mobilenetv3_forward.14} parent=0 // loop_footer
    %s19 = sadd.s32 1, %s15
  $region7: #{mobilenetv3_forward.14} parent=0 // loop_footer_branch
    %14 = sbr.rel target = $region3
  $region8: #{mobilenetv3_forward.14} parent=0 // loop_exit
    _

</llo_original>
